<compile_context>
chip_gen: v7x
topology: tpu7x:2x2x1
jax: 0.10.0
libtpu: 0.0.40
codegen_flags: <defaults>
</compile_context>

<pallas_src>
import functools
import math

import jax
import jax.numpy as jnp
from jax.experimental import pallas as pl
from jax.experimental import pallas  # noqa: F401  (kept for clarity)
from jax.experimental.pallas import tpu as pltpu  # noqa: F401  (no TPU-specific knobs needed: single invocation, default VMEM placement)

# ---- stand-ins for elfragmentador.constants (synthetic, deterministic) ----
AAS_NUM = 26          # constants.AAS_NUM
NUM_MODS = 8          # len(constants.MODIFICATION)
MAX_SEQUENCE = 30     # constants.MAX_SEQUENCE -> pos-enc max_len = 2 * MAX_SEQUENCE

# ---- small model hyper-parameters (ninp, nhead, nhid, layers of the module) ----
NINP = 32
NHEAD = 4
NHID = 64
NLAYERS = 2

LN_EPS = 1e-5
NEG_INF = -1e30   # additive mask value (PyTorch uses -inf; -1e30 is numerically safe)

V_AA = AAS_NUM + 1        # 27 amino-acid embedding rows (incl. padding idx 0)
V_MOD = NUM_MODS + 1      # 9 modification embedding rows
MOD_OFF = V_AA            # mod ids are offset into the fused table
N_BIAS_ROWS = 10          # per-layer bias/LayerNorm rows in the packed slab


def _round8(n):
    return ((n + 7) // 8) * 8


def _slab_layout(seq_len):
    """Static row/col layout of the packed parameter slab (all Python ints)."""
    D, H = NINP, NHID
    pos_off = _round8(V_AA + V_MOD)           # PE rows start here; position s -> class pos_off+s
    table_rows = pos_off + seq_len            # one-hot width / fused-table rows
    layer_base = _round8(table_rows)
    layer_stride = 5 * D + H                  # wq|wk|wv|wo|w1 (D rows each) + w2 (H rows)
    bias_base = layer_base + NLAYERS * layer_stride
    total_rows = _round8(bias_base + NLAYERS * N_BIAS_ROWS)
    return dict(pos_off=pos_off, table_rows=table_rows, layer_base=layer_base,
                layer_stride=layer_stride, bias_base=bias_base,
                total_rows=total_rows, width=max(D, H))


def _layernorm(x, gamma, beta):
    mu = jnp.mean(x, axis=-1, keepdims=True)
    xc = x - mu
    var = jnp.mean(xc * xc, axis=-1, keepdims=True)
    return xc * jax.lax.rsqrt(var + LN_EPS) * gamma + beta


# --------------------------------------------------------------------------------------
# Fused kernel: single invocation, whole batch, all layers.
# --------------------------------------------------------------------------------------
def _fused_encoder_kernel(ids_ref, mask_ref, slab_ref, o_ref, *, layout, nhead, nlayers):
    """ids_ref  : (M, 3) int32  — [aa_id, MOD_OFF+mod_id, pos_off+position] per token row
       mask_ref : (M, M) f32    — additive mask (cross-sequence pairs & padded keys = -1e30)
       slab_ref : (R, 64) f32   — packed table/weights/biases (see _slab_layout/_pack_param_slab)
       o_ref    : (M, D) f32    — encoder output rows (seq-major)
    """
    M = ids_ref.shape[0]
    D = NINP
    H = NHID
    hd = D // nhead
    V = layout['table_rows']

    # ---- fused embedding gather + sqrt(d_model) scale + positional encoding -------------
    # The three id classes live in disjoint column ranges, so a single 3-hot row times the
    # fused table yields aa_emb*sqrt(D) + mod_emb*sqrt(D) + pe[pos] in one MXU pass.
    ids = ids_ref[...]
    cls = jax.lax.broadcasted_iota(jnp.int32, (M, V), 1)
    onehot3 = ((cls == ids[:, 0:1]) | (cls == ids[:, 1:2]) | (cls == ids[:, 2:3])
               ).astype(jnp.float32)                                    # (M, V)
    x = jnp.dot(onehot3, slab_ref[0:V, 0:D], preferred_element_type=jnp.float32)  # (M, D)

    # combined additive mask, hoisted once for all layers / heads
    mask_add = mask_ref[...]                                            # (M, M)

    # ---- transformer encoder layers (post-norm), statically unrolled --------------------
    for l in range(nlayers):
        wb = layout['layer_base'] + l * layout['layer_stride']
        rb = layout['bias_base'] + l * N_BIAS_ROWS
        Wq = slab_ref[wb + 0 * D: wb + 1 * D, 0:D]      # 1/sqrt(hd) pre-folded
        Wk = slab_ref[wb + 1 * D: wb + 2 * D, 0:D]
        Wv = slab_ref[wb + 2 * D: wb + 3 * D, 0:D]
        Wo = slab_ref[wb + 3 * D: wb + 4 * D, 0:D]
        W1 = slab_ref[wb + 4 * D: wb + 5 * D, 0:H]
        W2 = slab_ref[wb + 5 * D: wb + 5 * D + H, 0:D]
        bq = slab_ref[rb + 0: rb + 1, 0:D]              # 1/sqrt(hd) pre-folded
        bk = slab_ref[rb + 1: rb + 2, 0:D]
        bv = slab_ref[rb + 2: rb + 3, 0:D]
        bo = slab_ref[rb + 3: rb + 4, 0:D]
        ln1g = slab_ref[rb + 4: rb + 5, 0:D]
        ln1b = slab_ref[rb + 5: rb + 6, 0:D]
        b1 = slab_ref[rb + 6: rb + 7, 0:H]
        b2 = slab_ref[rb + 7: rb + 8, 0:D]
        ln2g = slab_ref[rb + 8: rb + 9, 0:D]
        ln2b = slab_ref[rb + 9: rb + 10, 0:D]

        # separate Q/K/V projections (no lane-offset slicing of a fused QKV result)
        q = jnp.dot(x, Wq, preferred_element_type=jnp.float32) + bq     # (M, D)
        k = jnp.dot(x, Wk, preferred_element_type=jnp.float32) + bk
        v = jnp.dot(x, Wv, preferred_element_type=jnp.float32) + bv
        kT = k.T                                                        # one transpose / layer

        # per-head attention over the shared (M, M) masked score matrix; cross-sequence
        # pairs are masked to -1e30 so each row's softmax only sees its own sequence.
        attn = None
        for h in range(nhead):
            lo, hi = h * hd, (h + 1) * hd
            s = jnp.dot(q[:, lo:hi], kT[lo:hi, :],
                        preferred_element_type=jnp.float32)             # (M, M)
            s = s + mask_add
            m = jnp.max(s, axis=-1, keepdims=True)
            e = jnp.exp(s - m)
            p = e * pl.reciprocal(jnp.sum(e, axis=-1, keepdims=True), approx=True)
            ctx = jnp.dot(p, v[:, lo:hi], preferred_element_type=jnp.float32)      # (M, hd)
            part = jnp.dot(ctx, Wo[lo:hi, :], preferred_element_type=jnp.float32)  # (M, D)
            attn = part if attn is None else attn + part
        attn = attn + bo

        x = _layernorm(x + attn, ln1g, ln1b)                            # residual + norm1
        h1 = jnp.maximum(jnp.dot(x, W1, preferred_element_type=jnp.float32) + b1, 0.0)
        ff = jnp.dot(h1, W2, preferred_element_type=jnp.float32) + b2
        x = _layernorm(x + ff, ln2g, ln2b)                              # residual + norm2

    o_ref[...] = x.astype(o_ref.dtype)


# --------------------------------------------------------------------------------------
# Wrapper
# --------------------------------------------------------------------------------------
def _pack_param_slab(params, seq_len):
    """Pack the fused (pre-scaled) embedding/PE table plus all layer weights and biases into
    ONE (rows, 64) f32 slab -> a single pallas_call operand.  Static per model; in a real
    deployment this would be computed once, not per call."""
    lay = _slab_layout(seq_len)
    D, H = NINP, NHID
    scale = math.sqrt(D)
    inv_sqrt_hd = 1.0 / math.sqrt(D // NHEAD)

    slab = jnp.zeros((lay['total_rows'], lay['width']), jnp.float32)
    slab = slab.at[0:V_AA, 0:D].set(params['aa_table'] * scale)
    slab = slab.at[V_AA:V_AA + V_MOD, 0:D].set(params['mod_table'] * scale)
    slab = slab.at[lay['pos_off']:lay['pos_off'] + seq_len, 0:D].set(params['pe'][:seq_len])
    for l, lp in enumerate(params['layers']):
        wb = lay['layer_base'] + l * lay['layer_stride']
        slab = slab.at[wb + 0 * D: wb + 1 * D, 0:D].set(lp['wq'] * inv_sqrt_hd)
        slab = slab.at[wb + 1 * D: wb + 2 * D, 0:D].set(lp['wk'])
        slab = slab.at[wb + 2 * D: wb + 3 * D, 0:D].set(lp['wv'])
        slab = slab.at[wb + 3 * D: wb + 4 * D, 0:D].set(lp['wo'])
        slab = slab.at[wb + 4 * D: wb + 5 * D, 0:H].set(lp['w1'])
        slab = slab.at[wb + 5 * D: wb + 5 * D + H, 0:D].set(lp['w2'])
        rb = lay['bias_base'] + l * N_BIAS_ROWS
        slab = slab.at[rb + 0, 0:D].set(lp['bq'] * inv_sqrt_hd)
        slab = slab.at[rb + 1, 0:D].set(lp['bk'])
        slab = slab.at[rb + 2, 0:D].set(lp['bv'])
        slab = slab.at[rb + 3, 0:D].set(lp['bo'])
        slab = slab.at[rb + 4, 0:D].set(lp['ln1g'])
        slab = slab.at[rb + 5, 0:D].set(lp['ln1b'])
        slab = slab.at[rb + 6, 0:H].set(lp['b1'])
        slab = slab.at[rb + 7, 0:D].set(lp['b2'])
        slab = slab.at[rb + 8, 0:D].set(lp['ln2g'])
        slab = slab.at[rb + 9, 0:D].set(lp['ln2b'])
    return slab, lay


def peptide_transformer_encoder(src, mods, params):
    """Pallas-backed forward; src/mods: (B, S) int token ids.  Returns (S, B, D)."""
    B, S = src.shape
    D = NINP
    M = B * S

    slab, lay = _pack_param_slab(params, S)

    # Rows are laid out SEQ-MAJOR (row r <-> position r // B of sequence r % B) so the kernel
    # output reshapes straight to (S, B, D) -- no post-kernel transpose.
    src_sb = jnp.transpose(src).reshape(M).astype(jnp.int32)
    mods_sb = jnp.transpose(mods).reshape(M).astype(jnp.int32)
    pos_sb = jnp.arange(M, dtype=jnp.int32) // B
    ids = jnp.stack([src_sb, MOD_OFF + mods_sb, lay['pos_off'] + pos_sb], axis=1)   # (M, 3)

    # Combined additive mask: forbids cross-sequence attention (so all sequences share one
    # (M, M) score matrix) and masks padded keys (src == 0).
    bidx = jnp.arange(M, dtype=jnp.int32) % B
    allowed = (bidx[:, None] == bidx[None, :]) & (src_sb != 0)[None, :]
    mask_comb = jnp.where(allowed, 0.0, NEG_INF).astype(jnp.float32)                # (M, M)

    # advisory cost estimate so XLA schedules the custom call sensibly
    hd = D // NHEAD
    flops = (2 * M * lay['table_rows'] * D
             + NLAYERS * (3 * 2 * M * D * D
                          + NHEAD * (2 * M * M * hd * 2 + 2 * M * hd * D)
                          + 2 * 2 * M * D * NHID))
    transcendentals = NLAYERS * (NHEAD * (M * M + M) + 2 * M)
    bytes_accessed = 4 * (int(slab.size) + int(ids.size) + int(mask_comb.size) + M * D)

    out = pl.pallas_call(
        functools.partial(_fused_encoder_kernel, layout=lay, nhead=NHEAD, nlayers=NLAYERS),
        out_shape=jax.ShapeDtypeStruct((M, D), jnp.float32),
        cost_estimate=pl.CostEstimate(flops=flops, transcendentals=transcendentals,
                                      bytes_accessed=bytes_accessed),
    )(ids, mask_comb, slab)

    return out.reshape(S, B, D)   # free reshape: rows already seq-major


# --------------------------------------------------------------------------------------
# Parameters (deterministic, synthetic) and pure-JAX reference for checking
# --------------------------------------------------------------------------------------
def make_pe(max_len, d):
    pos = jnp.arange(max_len, dtype=jnp.float32)[:, None]
    div = jnp.exp(jnp.arange(0, d, 2, dtype=jnp.float32) * (-math.log(10000.0) / d))
    pe = jnp.zeros((max_len, d), jnp.float32)
    pe = pe.at[:, 0::2].set(jnp.sin(pos * div))
    pe = pe.at[:, 1::2].set(jnp.cos(pos * div))
    return pe


def init_params(key):
    keys = jax.random.split(key, 2 + NLAYERS)
    # init_weights(): uniform(-0.1, 0.1) for aa embeddings, 100x smaller for mods.
    aa_table = jax.random.uniform(keys[0], (AAS_NUM + 1, NINP), jnp.float32, -0.1, 0.1)
    mod_table = jax.random.uniform(keys[1], (NUM_MODS + 1, NINP), jnp.float32, -0.001, 0.001)

    def u(k, shape, scale):
        return jax.random.uniform(k, shape, jnp.float32, -scale, scale)

    layers = []
    for i in range(NLAYERS):
        lk = jax.random.split(keys[2 + i], 8)
        s_d = 1.0 / math.sqrt(NINP)
        s_h = 1.0 / math.sqrt(NHID)
        layers.append(dict(
            wq=u(lk[0], (NINP, NINP), s_d), bq=jnp.zeros((NINP,), jnp.float32),
            wk=u(lk[1], (NINP, NINP), s_d), bk=jnp.zeros((NINP,), jnp.float32),
            wv=u(lk[2], (NINP, NINP), s_d), bv=jnp.zeros((NINP,), jnp.float32),
            wo=u(lk[3], (NINP, NINP), s_d), bo=jnp.zeros((NINP,), jnp.float32),
            ln1g=jnp.ones((NINP,), jnp.float32), ln1b=jnp.zeros((NINP,), jnp.float32),
            w1=u(lk[4], (NINP, NHID), s_d), b1=u(lk[5], (NHID,), s_d),
            w2=u(lk[6], (NHID, NINP), s_h), b2=u(lk[7], (NINP,), s_h),
            ln2g=jnp.ones((NINP,), jnp.float32), ln2b=jnp.zeros((NINP,), jnp.float32),
        ))
    return dict(aa_table=aa_table, mod_table=mod_table,
                pe=make_pe(MAX_SEQUENCE * 2, NINP), layers=layers)


def reference_forward(src, mods, params):
    """Pure-JAX reference with identical math (for correctness check)."""
    aa_emb = jnp.take(params['aa_table'], src, axis=0)
    mod_emb = jnp.take(params['mod_table'], mods, axis=0)
    x = (aa_emb + mod_emb) * math.sqrt(NINP) + params['pe'][:src.shape[1]][None, :, :]
    mask_add = jnp.where(src == 0, NEG_INF, 0.0).astype(jnp.float32)
    hd = NINP // NHEAD
    for lp in params['layers']:
        q = x @ lp['wq'] + lp['bq']
        k = x @ lp['wk'] + lp['bk']
        v = x @ lp['wv'] + lp['bv']
        ctx = []
        for h in range(NHEAD):
            sl = slice(h * hd, (h + 1) * hd)
            s = jnp.einsum('bqd,bkd->bqk', q[:, :, sl], k[:, :, sl]) / math.sqrt(hd)
            s = s + mask_add[:, None, :]
            p = jax.nn.softmax(s, axis=-1)
            ctx.append(jnp.einsum('bqk,bkd->bqd', p, v[:, :, sl]))
        attn = jnp.concatenate(ctx, axis=-1) @ lp['wo'] + lp['bo']
        x = _layernorm(x + attn, lp['ln1g'], lp['ln1b'])
        ff = jnp.maximum(x @ lp['w1'] + lp['b1'], 0.0) @ lp['w2'] + lp['b2']
        x = _layernorm(x + ff, lp['ln2g'], lp['ln2b'])
    return jnp.transpose(x, (1, 0, 2))


# --------------------------------------------------------------------------------------
if __name__ == "__main__":
    B, S = 2, 8
    key = jax.random.PRNGKey(0)
    k_p, k_src, k_mod = jax.random.split(key, 3)

    params = init_params(k_p)

    src = jax.random.randint(k_src, (B, S), 1, AAS_NUM + 1, dtype=jnp.int32)
    src = src.at[1, 5:].set(0)                              # padded tail -> exercises the mask
    mods = jax.random.randint(k_mod, (B, S), 0, NUM_MODS + 1, dtype=jnp.int32)
    mods = jnp.where(src == 0, 0, mods)

    out = jax.block_until_ready(peptide_transformer_encoder(src, mods, params))
    ref = jax.block_until_ready(reference_forward(src, mods, params))

    assert out.shape == (S, B, NINP), out.shape
    assert bool(jnp.all(jnp.isfinite(out)))
    # tolerance allows for the approx-reciprocal softmax normalization (EUP fast path)
    assert bool(jnp.allclose(out, ref, atol=5e-3, rtol=5e-3)), "mismatch vs pure-JAX reference"

    print("KERNEL_OK")
</pallas_src>

<mosaic_0001>
module attributes {stable_mosaic.version = 11 : i64} {
  func.func @_fused_encoder_kernel(%arg0: memref<16x3xi32, #tpu.memory_space<vmem>>, %arg1: memref<16x16xf32, #tpu.memory_space<vmem>>, %arg2: memref<520x64xf32, #tpu.memory_space<vmem>>, %arg3: memref<16x32xf32, #tpu.memory_space<vmem>>) attributes {dimension_semantics = [], scalar_prefetch = 0 : i64, scratch_operands = 0 : i64, tpu.core_type = #tpu.core_type<tc>} {
    %c0 = arith.constant 0 : index
    %c0_0 = arith.constant 0 : index
    %0 = vector.load %arg0[%c0, %c0_0] : memref<16x3xi32, #tpu.memory_space<vmem>>, vector<16x3xi32>
    %1 = tpu.iota {dimensions = array<i32: 1>} : vector<16x48xi32>
    %2 = vector.extract_strided_slice %0 {offsets = [0, 0], sizes = [16, 1], strides = [1, 1]} : vector<16x3xi32> to vector<16x1xi32>
    %3 = vector.broadcast %2 : vector<16x1xi32> to vector<16x48xi32>
    %4 = arith.cmpi eq, %1, %3 : vector<16x48xi32>
    %5 = vector.extract_strided_slice %0 {offsets = [0, 1], sizes = [16, 1], strides = [1, 1]} : vector<16x3xi32> to vector<16x1xi32>
    %6 = vector.broadcast %5 : vector<16x1xi32> to vector<16x48xi32>
    %7 = arith.cmpi eq, %1, %6 : vector<16x48xi32>
    %8 = arith.ori %4, %7 : vector<16x48xi1>
    %9 = vector.extract_strided_slice %0 {offsets = [0, 2], sizes = [16, 1], strides = [1, 1]} : vector<16x3xi32> to vector<16x1xi32>
    %10 = vector.broadcast %9 : vector<16x1xi32> to vector<16x48xi32>
    %11 = arith.cmpi eq, %1, %10 : vector<16x48xi32>
    %12 = arith.ori %8, %11 : vector<16x48xi1>
    %13 = arith.extui %12 : vector<16x48xi1> to vector<16x48xi32>
    %14 = arith.sitofp %13 : vector<16x48xi32> to vector<16x48xf32>
    %c0_1 = arith.constant 0 : index
    %c0_2 = arith.constant 0 : index
    %15 = vector.load %arg2[%c0_1, %c0_2] : memref<520x64xf32, #tpu.memory_space<vmem>>, vector<48x32xf32>
    %cst = arith.constant dense<0.000000e+00> : vector<16x32xf32>
    %16 = tpu.matmul %14, %15, %cst {dimension_numbers = #tpu.dot_dimension_numbers<[1], [0], [0], [1], [0, 0, 1, 1], [], []>} : vector<16x48xf32>, vector<48x32xf32>, vector<16x32xf32> -> vector<16x32xf32>
    %c0_3 = arith.constant 0 : index
    %c0_4 = arith.constant 0 : index
    %17 = vector.load %arg1[%c0_3, %c0_4] : memref<16x16xf32, #tpu.memory_space<vmem>>, vector<16x16xf32>
    %c48 = arith.constant 48 : index
    %c0_5 = arith.constant 0 : index
    %18 = vector.load %arg2[%c48, %c0_5] : memref<520x64xf32, #tpu.memory_space<vmem>>, vector<32x32xf32>
    %c80 = arith.constant 80 : index
    %c0_6 = arith.constant 0 : index
    %19 = vector.load %arg2[%c80, %c0_6] : memref<520x64xf32, #tpu.memory_space<vmem>>, vector<32x32xf32>
    %c112 = arith.constant 112 : index
    %c0_7 = arith.constant 0 : index
    %20 = vector.load %arg2[%c112, %c0_7] : memref<520x64xf32, #tpu.memory_space<vmem>>, vector<32x32xf32>
    %c144 = arith.constant 144 : index
    %c0_8 = arith.constant 0 : index
    %21 = vector.load %arg2[%c144, %c0_8] : memref<520x64xf32, #tpu.memory_space<vmem>>, vector<32x32xf32>
    %c176 = arith.constant 176 : index
    %c0_9 = arith.constant 0 : index
    %22 = vector.load %arg2[%c176, %c0_9] : memref<520x64xf32, #tpu.memory_space<vmem>>, vector<32x64xf32>
    %c208 = arith.constant 208 : index
    %c0_10 = arith.constant 0 : index
    %23 = vector.load %arg2[%c208, %c0_10] : memref<520x64xf32, #tpu.memory_space<vmem>>, vector<64x32xf32>
    %c496 = arith.constant 496 : index
    %c0_11 = arith.constant 0 : index
    %24 = vector.load %arg2[%c496, %c0_11] : memref<520x64xf32, #tpu.memory_space<vmem>>, vector<1x32xf32>
    %c497 = arith.constant 497 : index
    %c0_12 = arith.constant 0 : index
    %25 = vector.load %arg2[%c497, %c0_12] : memref<520x64xf32, #tpu.memory_space<vmem>>, vector<1x32xf32>
    %c498 = arith.constant 498 : index
    %c0_13 = arith.constant 0 : index
    %26 = vector.load %arg2[%c498, %c0_13] : memref<520x64xf32, #tpu.memory_space<vmem>>, vector<1x32xf32>
    %c499 = arith.constant 499 : index
    %c0_14 = arith.constant 0 : index
    %27 = vector.load %arg2[%c499, %c0_14] : memref<520x64xf32, #tpu.memory_space<vmem>>, vector<1x32xf32>
    %c500 = arith.constant 500 : index
    %c0_15 = arith.constant 0 : index
    %28 = vector.load %arg2[%c500, %c0_15] : memref<520x64xf32, #tpu.memory_space<vmem>>, vector<1x32xf32>
    %c501 = arith.constant 501 : index
    %c0_16 = arith.constant 0 : index
    %29 = vector.load %arg2[%c501, %c0_16] : memref<520x64xf32, #tpu.memory_space<vmem>>, vector<1x32xf32>
    %c502 = arith.constant 502 : index
    %c0_17 = arith.constant 0 : index
    %30 = vector.load %arg2[%c502, %c0_17] : memref<520x64xf32, #tpu.memory_space<vmem>>, vector<1x64xf32>
    %c503 = arith.constant 503 : index
    %c0_18 = arith.constant 0 : index
    %31 = vector.load %arg2[%c503, %c0_18] : memref<520x64xf32, #tpu.memory_space<vmem>>, vector<1x32xf32>
    %c504 = arith.constant 504 : index
    %c0_19 = arith.constant 0 : index
    %32 = vector.load %arg2[%c504, %c0_19] : memref<520x64xf32, #tpu.memory_space<vmem>>, vector<1x32xf32>
    %c505 = arith.constant 505 : index
    %c0_20 = arith.constant 0 : index
    %33 = vector.load %arg2[%c505, %c0_20] : memref<520x64xf32, #tpu.memory_space<vmem>>, vector<1x32xf32>
    %cst_21 = arith.constant dense<0.000000e+00> : vector<16x32xf32>
    %34 = tpu.matmul %16, %18, %cst_21 {dimension_numbers = #tpu.dot_dimension_numbers<[1], [0], [0], [1], [0, 0, 1, 1], [], []>} : vector<16x32xf32>, vector<32x32xf32>, vector<16x32xf32> -> vector<16x32xf32>
    %35 = vector.broadcast %24 : vector<1x32xf32> to vector<16x32xf32>
    %36 = arith.addf %34, %35 : vector<16x32xf32>
    %cst_22 = arith.constant dense<0.000000e+00> : vector<16x32xf32>
    %37 = tpu.matmul %16, %19, %cst_22 {dimension_numbers = #tpu.dot_dimension_numbers<[1], [0], [0], [1], [0, 0, 1, 1], [], []>} : vector<16x32xf32>, vector<32x32xf32>, vector<16x32xf32> -> vector<16x32xf32>
    %38 = vector.broadcast %25 : vector<1x32xf32> to vector<16x32xf32>
    %39 = arith.addf %37, %38 : vector<16x32xf32>
    %cst_23 = arith.constant dense<0.000000e+00> : vector<16x32xf32>
    %40 = tpu.matmul %16, %20, %cst_23 {dimension_numbers = #tpu.dot_dimension_numbers<[1], [0], [0], [1], [0, 0, 1, 1], [], []>} : vector<16x32xf32>, vector<32x32xf32>, vector<16x32xf32> -> vector<16x32xf32>
    %41 = vector.broadcast %26 : vector<1x32xf32> to vector<16x32xf32>
    %42 = arith.addf %40, %41 : vector<16x32xf32>
    %43 = tpu.transpose %39, [1, 0] : vector<16x32xf32> -> vector<32x16xf32>
    %44 = vector.extract_strided_slice %36 {offsets = [0, 0], sizes = [16, 8], strides = [1, 1]} : vector<16x32xf32> to vector<16x8xf32>
    %45 = vector.extract_strided_slice %43 {offsets = [0, 0], sizes = [8, 16], strides = [1, 1]} : vector<32x16xf32> to vector<8x16xf32>
    %cst_24 = arith.constant dense<0.000000e+00> : vector<16x16xf32>
    %46 = tpu.matmul %44, %45, %cst_24 {dimension_numbers = #tpu.dot_dimension_numbers<[1], [0], [0], [1], [0, 0, 1, 1], [], []>} : vector<16x8xf32>, vector<8x16xf32>, vector<16x16xf32> -> vector<16x16xf32>
    %47 = arith.addf %46, %17 : vector<16x16xf32>
    %cst_25 = arith.constant dense<0xFF800000> : vector<16xf32>
    %48 = vector.multi_reduction <maximumf>, %47, %cst_25 [1] : vector<16x16xf32> to vector<16xf32>
    %49 = vector.shape_cast %48 : vector<16xf32> to vector<16x1xf32>
    %50 = vector.broadcast %49 : vector<16x1xf32> to vector<16x16xf32>
    %51 = arith.subf %47, %50 : vector<16x16xf32>
    %52 = math.exp %51 : vector<16x16xf32>
    %cst_26 = arith.constant dense<0.000000e+00> : vector<16xf32>
    %53 = vector.multi_reduction <add>, %52, %cst_26 [1] : vector<16x16xf32> to vector<16xf32>
    %54 = vector.shape_cast %53 : vector<16xf32> to vector<16x1xf32>
    %55 = tpu.reciprocal %54 {approx = true} : vector<16x1xf32> -> vector<16x1xf32>
    %56 = vector.broadcast %55 : vector<16x1xf32> to vector<16x16xf32>
    %57 = arith.mulf %52, %56 : vector<16x16xf32>
    %58 = vector.extract_strided_slice %42 {offsets = [0, 0], sizes = [16, 8], strides = [1, 1]} : vector<16x32xf32> to vector<16x8xf32>
    %cst_27 = arith.constant dense<0.000000e+00> : vector<16x8xf32>
    %59 = tpu.matmul %57, %58, %cst_27 {dimension_numbers = #tpu.dot_dimension_numbers<[1], [0], [0], [1], [0, 0, 1, 1], [], []>} : vector<16x16xf32>, vector<16x8xf32>, vector<16x8xf32> -> vector<16x8xf32>
    %60 = vector.extract_strided_slice %21 {offsets = [0, 0], sizes = [8, 32], strides = [1, 1]} : vector<32x32xf32> to vector<8x32xf32>
    %cst_28 = arith.constant dense<0.000000e+00> : vector<16x32xf32>
    %61 = tpu.matmul %59, %60, %cst_28 {dimension_numbers = #tpu.dot_dimension_numbers<[1], [0], [0], [1], [0, 0, 1, 1], [], []>} : vector<16x8xf32>, vector<8x32xf32>, vector<16x32xf32> -> vector<16x32xf32>
    %62 = vector.extract_strided_slice %36 {offsets = [0, 8], sizes = [16, 8], strides = [1, 1]} : vector<16x32xf32> to vector<16x8xf32>
    %63 = vector.extract_strided_slice %43 {offsets = [8, 0], sizes = [8, 16], strides = [1, 1]} : vector<32x16xf32> to vector<8x16xf32>
    %cst_29 = arith.constant dense<0.000000e+00> : vector<16x16xf32>
    %64 = tpu.matmul %62, %63, %cst_29 {dimension_numbers = #tpu.dot_dimension_numbers<[1], [0], [0], [1], [0, 0, 1, 1], [], []>} : vector<16x8xf32>, vector<8x16xf32>, vector<16x16xf32> -> vector<16x16xf32>
    %65 = arith.addf %64, %17 : vector<16x16xf32>
    %cst_30 = arith.constant dense<0xFF800000> : vector<16xf32>
    %66 = vector.multi_reduction <maximumf>, %65, %cst_30 [1] : vector<16x16xf32> to vector<16xf32>
    %67 = vector.shape_cast %66 : vector<16xf32> to vector<16x1xf32>
    %68 = vector.broadcast %67 : vector<16x1xf32> to vector<16x16xf32>
    %69 = arith.subf %65, %68 : vector<16x16xf32>
    %70 = math.exp %69 : vector<16x16xf32>
    %cst_31 = arith.constant dense<0.000000e+00> : vector<16xf32>
    %71 = vector.multi_reduction <add>, %70, %cst_31 [1] : vector<16x16xf32> to vector<16xf32>
    %72 = vector.shape_cast %71 : vector<16xf32> to vector<16x1xf32>
    %73 = tpu.reciprocal %72 {approx = true} : vector<16x1xf32> -> vector<16x1xf32>
    %74 = vector.broadcast %73 : vector<16x1xf32> to vector<16x16xf32>
    %75 = arith.mulf %70, %74 : vector<16x16xf32>
    %76 = vector.extract_strided_slice %42 {offsets = [0, 8], sizes = [16, 8], strides = [1, 1]} : vector<16x32xf32> to vector<16x8xf32>
    %cst_32 = arith.constant dense<0.000000e+00> : vector<16x8xf32>
    %77 = tpu.matmul %75, %76, %cst_32 {dimension_numbers = #tpu.dot_dimension_numbers<[1], [0], [0], [1], [0, 0, 1, 1], [], []>} : vector<16x16xf32>, vector<16x8xf32>, vector<16x8xf32> -> vector<16x8xf32>
    %78 = vector.extract_strided_slice %21 {offsets = [8, 0], sizes = [8, 32], strides = [1, 1]} : vector<32x32xf32> to vector<8x32xf32>
    %cst_33 = arith.constant dense<0.000000e+00> : vector<16x32xf32>
    %79 = tpu.matmul %77, %78, %cst_33 {dimension_numbers = #tpu.dot_dimension_numbers<[1], [0], [0], [1], [0, 0, 1, 1], [], []>} : vector<16x8xf32>, vector<8x32xf32>, vector<16x32xf32> -> vector<16x32xf32>
    %80 = arith.addf %61, %79 : vector<16x32xf32>
    %81 = vector.extract_strided_slice %36 {offsets = [0, 16], sizes = [16, 8], strides = [1, 1]} : vector<16x32xf32> to vector<16x8xf32>
    %82 = vector.extract_strided_slice %43 {offsets = [16, 0], sizes = [8, 16], strides = [1, 1]} : vector<32x16xf32> to vector<8x16xf32>
    %cst_34 = arith.constant dense<0.000000e+00> : vector<16x16xf32>
    %83 = tpu.matmul %81, %82, %cst_34 {dimension_numbers = #tpu.dot_dimension_numbers<[1], [0], [0], [1], [0, 0, 1, 1], [], []>} : vector<16x8xf32>, vector<8x16xf32>, vector<16x16xf32> -> vector<16x16xf32>
    %84 = arith.addf %83, %17 : vector<16x16xf32>
    %cst_35 = arith.constant dense<0xFF800000> : vector<16xf32>
    %85 = vector.multi_reduction <maximumf>, %84, %cst_35 [1] : vector<16x16xf32> to vector<16xf32>
    %86 = vector.shape_cast %85 : vector<16xf32> to vector<16x1xf32>
    %87 = vector.broadcast %86 : vector<16x1xf32> to vector<16x16xf32>
    %88 = arith.subf %84, %87 : vector<16x16xf32>
    %89 = math.exp %88 : vector<16x16xf32>
    %cst_36 = arith.constant dense<0.000000e+00> : vector<16xf32>
    %90 = vector.multi_reduction <add>, %89, %cst_36 [1] : vector<16x16xf32> to vector<16xf32>
    %91 = vector.shape_cast %90 : vector<16xf32> to vector<16x1xf32>
    %92 = tpu.reciprocal %91 {approx = true} : vector<16x1xf32> -> vector<16x1xf32>
    %93 = vector.broadcast %92 : vector<16x1xf32> to vector<16x16xf32>
    %94 = arith.mulf %89, %93 : vector<16x16xf32>
    %95 = vector.extract_strided_slice %42 {offsets = [0, 16], sizes = [16, 8], strides = [1, 1]} : vector<16x32xf32> to vector<16x8xf32>
    %cst_37 = arith.constant dense<0.000000e+00> : vector<16x8xf32>
    %96 = tpu.matmul %94, %95, %cst_37 {dimension_numbers = #tpu.dot_dimension_numbers<[1], [0], [0], [1], [0, 0, 1, 1], [], []>} : vector<16x16xf32>, vector<16x8xf32>, vector<16x8xf32> -> vector<16x8xf32>
    %97 = vector.extract_strided_slice %21 {offsets = [16, 0], sizes = [8, 32], strides = [1, 1]} : vector<32x32xf32> to vector<8x32xf32>
    %cst_38 = arith.constant dense<0.000000e+00> : vector<16x32xf32>
    %98 = tpu.matmul %96, %97, %cst_38 {dimension_numbers = #tpu.dot_dimension_numbers<[1], [0], [0], [1], [0, 0, 1, 1], [], []>} : vector<16x8xf32>, vector<8x32xf32>, vector<16x32xf32> -> vector<16x32xf32>
    %99 = arith.addf %80, %98 : vector<16x32xf32>
    %100 = vector.extract_strided_slice %36 {offsets = [0, 24], sizes = [16, 8], strides = [1, 1]} : vector<16x32xf32> to vector<16x8xf32>
    %101 = vector.extract_strided_slice %43 {offsets = [24, 0], sizes = [8, 16], strides = [1, 1]} : vector<32x16xf32> to vector<8x16xf32>
    %cst_39 = arith.constant dense<0.000000e+00> : vector<16x16xf32>
    %102 = tpu.matmul %100, %101, %cst_39 {dimension_numbers = #tpu.dot_dimension_numbers<[1], [0], [0], [1], [0, 0, 1, 1], [], []>} : vector<16x8xf32>, vector<8x16xf32>, vector<16x16xf32> -> vector<16x16xf32>
    %103 = arith.addf %102, %17 : vector<16x16xf32>
    %cst_40 = arith.constant dense<0xFF800000> : vector<16xf32>
    %104 = vector.multi_reduction <maximumf>, %103, %cst_40 [1] : vector<16x16xf32> to vector<16xf32>
    %105 = vector.shape_cast %104 : vector<16xf32> to vector<16x1xf32>
    %106 = vector.broadcast %105 : vector<16x1xf32> to vector<16x16xf32>
    %107 = arith.subf %103, %106 : vector<16x16xf32>
    %108 = math.exp %107 : vector<16x16xf32>
    %cst_41 = arith.constant dense<0.000000e+00> : vector<16xf32>
    %109 = vector.multi_reduction <add>, %108, %cst_41 [1] : vector<16x16xf32> to vector<16xf32>
    %110 = vector.shape_cast %109 : vector<16xf32> to vector<16x1xf32>
    %111 = tpu.reciprocal %110 {approx = true} : vector<16x1xf32> -> vector<16x1xf32>
    %112 = vector.broadcast %111 : vector<16x1xf32> to vector<16x16xf32>
    %113 = arith.mulf %108, %112 : vector<16x16xf32>
    %114 = vector.extract_strided_slice %42 {offsets = [0, 24], sizes = [16, 8], strides = [1, 1]} : vector<16x32xf32> to vector<16x8xf32>
    %cst_42 = arith.constant dense<0.000000e+00> : vector<16x8xf32>
    %115 = tpu.matmul %113, %114, %cst_42 {dimension_numbers = #tpu.dot_dimension_numbers<[1], [0], [0], [1], [0, 0, 1, 1], [], []>} : vector<16x16xf32>, vector<16x8xf32>, vector<16x8xf32> -> vector<16x8xf32>
    %116 = vector.extract_strided_slice %21 {offsets = [24, 0], sizes = [8, 32], strides = [1, 1]} : vector<32x32xf32> to vector<8x32xf32>
    %cst_43 = arith.constant dense<0.000000e+00> : vector<16x32xf32>
    %117 = tpu.matmul %115, %116, %cst_43 {dimension_numbers = #tpu.dot_dimension_numbers<[1], [0], [0], [1], [0, 0, 1, 1], [], []>} : vector<16x8xf32>, vector<8x32xf32>, vector<16x32xf32> -> vector<16x32xf32>
    %118 = arith.addf %99, %117 : vector<16x32xf32>
    %119 = vector.broadcast %27 : vector<1x32xf32> to vector<16x32xf32>
    %120 = arith.addf %118, %119 : vector<16x32xf32>
    %121 = arith.addf %16, %120 : vector<16x32xf32>
    %cst_44 = arith.constant dense<0.000000e+00> : vector<16xf32>
    %122 = vector.multi_reduction <add>, %121, %cst_44 [1] : vector<16x32xf32> to vector<16xf32>
    %123 = vector.shape_cast %122 : vector<16xf32> to vector<16x1xf32>
    %cst_45 = arith.constant 3.200000e+01 : f32
    %124 = vector.broadcast %cst_45 : f32 to vector<16x1xf32>
    %125 = arith.divf %123, %124 : vector<16x1xf32>
    %126 = vector.broadcast %125 : vector<16x1xf32> to vector<16x32xf32>
    %127 = arith.subf %121, %126 : vector<16x32xf32>
    %128 = arith.mulf %127, %127 : vector<16x32xf32>
    %cst_46 = arith.constant dense<0.000000e+00> : vector<16xf32>
    %129 = vector.multi_reduction <add>, %128, %cst_46 [1] : vector<16x32xf32> to vector<16xf32>
    %130 = vector.shape_cast %129 : vector<16xf32> to vector<16x1xf32>
    %cst_47 = arith.constant 3.200000e+01 : f32
    %131 = vector.broadcast %cst_47 : f32 to vector<16x1xf32>
    %132 = arith.divf %130, %131 : vector<16x1xf32>
    %cst_48 = arith.constant 9.99999974E-6 : f32
    %133 = vector.broadcast %cst_48 : f32 to vector<16x1xf32>
    %134 = arith.addf %132, %133 : vector<16x1xf32>
    %135 = math.rsqrt %134 : vector<16x1xf32>
    %136 = vector.broadcast %135 : vector<16x1xf32> to vector<16x32xf32>
    %137 = arith.mulf %127, %136 : vector<16x32xf32>
    %138 = vector.broadcast %28 : vector<1x32xf32> to vector<16x32xf32>
    %139 = arith.mulf %137, %138 : vector<16x32xf32>
    %140 = vector.broadcast %29 : vector<1x32xf32> to vector<16x32xf32>
    %141 = arith.addf %139, %140 : vector<16x32xf32>
    %cst_49 = arith.constant dense<0.000000e+00> : vector<16x64xf32>
    %142 = tpu.matmul %141, %22, %cst_49 {dimension_numbers = #tpu.dot_dimension_numbers<[1], [0], [0], [1], [0, 0, 1, 1], [], []>} : vector<16x32xf32>, vector<32x64xf32>, vector<16x64xf32> -> vector<16x64xf32>
    %143 = vector.broadcast %30 : vector<1x64xf32> to vector<16x64xf32>
    %144 = arith.addf %142, %143 : vector<16x64xf32>
    %cst_50 = arith.constant 0.000000e+00 : f32
    %145 = vector.broadcast %cst_50 : f32 to vector<16x64xf32>
    %146 = arith.maximumf %144, %145 : vector<16x64xf32>
    %cst_51 = arith.constant dense<0.000000e+00> : vector<16x32xf32>
    %147 = tpu.matmul %146, %23, %cst_51 {dimension_numbers = #tpu.dot_dimension_numbers<[1], [0], [0], [1], [0, 0, 1, 1], [], []>} : vector<16x64xf32>, vector<64x32xf32>, vector<16x32xf32> -> vector<16x32xf32>
    %148 = vector.broadcast %31 : vector<1x32xf32> to vector<16x32xf32>
    %149 = arith.addf %147, %148 : vector<16x32xf32>
    %150 = arith.addf %141, %149 : vector<16x32xf32>
    %cst_52 = arith.constant dense<0.000000e+00> : vector<16xf32>
    %151 = vector.multi_reduction <add>, %150, %cst_52 [1] : vector<16x32xf32> to vector<16xf32>
    %152 = vector.shape_cast %151 : vector<16xf32> to vector<16x1xf32>
    %cst_53 = arith.constant 3.200000e+01 : f32
    %153 = vector.broadcast %cst_53 : f32 to vector<16x1xf32>
    %154 = arith.divf %152, %153 : vector<16x1xf32>
    %155 = vector.broadcast %154 : vector<16x1xf32> to vector<16x32xf32>
    %156 = arith.subf %150, %155 : vector<16x32xf32>
    %157 = arith.mulf %156, %156 : vector<16x32xf32>
    %cst_54 = arith.constant dense<0.000000e+00> : vector<16xf32>
    %158 = vector.multi_reduction <add>, %157, %cst_54 [1] : vector<16x32xf32> to vector<16xf32>
    %159 = vector.shape_cast %158 : vector<16xf32> to vector<16x1xf32>
    %cst_55 = arith.constant 3.200000e+01 : f32
    %160 = vector.broadcast %cst_55 : f32 to vector<16x1xf32>
    %161 = arith.divf %159, %160 : vector<16x1xf32>
    %cst_56 = arith.constant 9.99999974E-6 : f32
    %162 = vector.broadcast %cst_56 : f32 to vector<16x1xf32>
    %163 = arith.addf %161, %162 : vector<16x1xf32>
    %164 = math.rsqrt %163 : vector<16x1xf32>
    %165 = vector.broadcast %164 : vector<16x1xf32> to vector<16x32xf32>
    %166 = arith.mulf %156, %165 : vector<16x32xf32>
    %167 = vector.broadcast %32 : vector<1x32xf32> to vector<16x32xf32>
    %168 = arith.mulf %166, %167 : vector<16x32xf32>
    %169 = vector.broadcast %33 : vector<1x32xf32> to vector<16x32xf32>
    %170 = arith.addf %168, %169 : vector<16x32xf32>
    %c272 = arith.constant 272 : index
    %c0_57 = arith.constant 0 : index
    %171 = vector.load %arg2[%c272, %c0_57] : memref<520x64xf32, #tpu.memory_space<vmem>>, vector<32x32xf32>
    %c304 = arith.constant 304 : index
    %c0_58 = arith.constant 0 : index
    %172 = vector.load %arg2[%c304, %c0_58] : memref<520x64xf32, #tpu.memory_space<vmem>>, vector<32x32xf32>
    %c336 = arith.constant 336 : index
    %c0_59 = arith.constant 0 : index
    %173 = vector.load %arg2[%c336, %c0_59] : memref<520x64xf32, #tpu.memory_space<vmem>>, vector<32x32xf32>
    %c368 = arith.constant 368 : index
    %c0_60 = arith.constant 0 : index
    %174 = vector.load %arg2[%c368, %c0_60] : memref<520x64xf32, #tpu.memory_space<vmem>>, vector<32x32xf32>
    %c400 = arith.constant 400 : index
    %c0_61 = arith.constant 0 : index
    %175 = vector.load %arg2[%c400, %c0_61] : memref<520x64xf32, #tpu.memory_space<vmem>>, vector<32x64xf32>
    %c432 = arith.constant 432 : index
    %c0_62 = arith.constant 0 : index
    %176 = vector.load %arg2[%c432, %c0_62] : memref<520x64xf32, #tpu.memory_space<vmem>>, vector<64x32xf32>
    %c506 = arith.constant 506 : index
    %c0_63 = arith.constant 0 : index
    %177 = vector.load %arg2[%c506, %c0_63] : memref<520x64xf32, #tpu.memory_space<vmem>>, vector<1x32xf32>
    %c507 = arith.constant 507 : index
    %c0_64 = arith.constant 0 : index
    %178 = vector.load %arg2[%c507, %c0_64] : memref<520x64xf32, #tpu.memory_space<vmem>>, vector<1x32xf32>
    %c508 = arith.constant 508 : index
    %c0_65 = arith.constant 0 : index
    %179 = vector.load %arg2[%c508, %c0_65] : memref<520x64xf32, #tpu.memory_space<vmem>>, vector<1x32xf32>
    %c509 = arith.constant 509 : index
    %c0_66 = arith.constant 0 : index
    %180 = vector.load %arg2[%c509, %c0_66] : memref<520x64xf32, #tpu.memory_space<vmem>>, vector<1x32xf32>
    %c510 = arith.constant 510 : index
    %c0_67 = arith.constant 0 : index
    %181 = vector.load %arg2[%c510, %c0_67] : memref<520x64xf32, #tpu.memory_space<vmem>>, vector<1x32xf32>
    %c511 = arith.constant 511 : index
    %c0_68 = arith.constant 0 : index
    %182 = vector.load %arg2[%c511, %c0_68] : memref<520x64xf32, #tpu.memory_space<vmem>>, vector<1x32xf32>
    %c512 = arith.constant 512 : index
    %c0_69 = arith.constant 0 : index
    %183 = vector.load %arg2[%c512, %c0_69] : memref<520x64xf32, #tpu.memory_space<vmem>>, vector<1x64xf32>
    %c513 = arith.constant 513 : index
    %c0_70 = arith.constant 0 : index
    %184 = vector.load %arg2[%c513, %c0_70] : memref<520x64xf32, #tpu.memory_space<vmem>>, vector<1x32xf32>
    %c514 = arith.constant 514 : index
    %c0_71 = arith.constant 0 : index
    %185 = vector.load %arg2[%c514, %c0_71] : memref<520x64xf32, #tpu.memory_space<vmem>>, vector<1x32xf32>
    %c515 = arith.constant 515 : index
    %c0_72 = arith.constant 0 : index
    %186 = vector.load %arg2[%c515, %c0_72] : memref<520x64xf32, #tpu.memory_space<vmem>>, vector<1x32xf32>
    %cst_73 = arith.constant dense<0.000000e+00> : vector<16x32xf32>
    %187 = tpu.matmul %170, %171, %cst_73 {dimension_numbers = #tpu.dot_dimension_numbers<[1], [0], [0], [1], [0, 0, 1, 1], [], []>} : vector<16x32xf32>, vector<32x32xf32>, vector<16x32xf32> -> vector<16x32xf32>
    %188 = vector.broadcast %177 : vector<1x32xf32> to vector<16x32xf32>
    %189 = arith.addf %187, %188 : vector<16x32xf32>
    %cst_74 = arith.constant dense<0.000000e+00> : vector<16x32xf32>
    %190 = tpu.matmul %170, %172, %cst_74 {dimension_numbers = #tpu.dot_dimension_numbers<[1], [0], [0], [1], [0, 0, 1, 1], [], []>} : vector<16x32xf32>, vector<32x32xf32>, vector<16x32xf32> -> vector<16x32xf32>
    %191 = vector.broadcast %178 : vector<1x32xf32> to vector<16x32xf32>
    %192 = arith.addf %190, %191 : vector<16x32xf32>
    %cst_75 = arith.constant dense<0.000000e+00> : vector<16x32xf32>
    %193 = tpu.matmul %170, %173, %cst_75 {dimension_numbers = #tpu.dot_dimension_numbers<[1], [0], [0], [1], [0, 0, 1, 1], [], []>} : vector<16x32xf32>, vector<32x32xf32>, vector<16x32xf32> -> vector<16x32xf32>
    %194 = vector.broadcast %179 : vector<1x32xf32> to vector<16x32xf32>
    %195 = arith.addf %193, %194 : vector<16x32xf32>
    %196 = tpu.transpose %192, [1, 0] : vector<16x32xf32> -> vector<32x16xf32>
    %197 = vector.extract_strided_slice %189 {offsets = [0, 0], sizes = [16, 8], strides = [1, 1]} : vector<16x32xf32> to vector<16x8xf32>
    %198 = vector.extract_strided_slice %196 {offsets = [0, 0], sizes = [8, 16], strides = [1, 1]} : vector<32x16xf32> to vector<8x16xf32>
    %cst_76 = arith.constant dense<0.000000e+00> : vector<16x16xf32>
    %199 = tpu.matmul %197, %198, %cst_76 {dimension_numbers = #tpu.dot_dimension_numbers<[1], [0], [0], [1], [0, 0, 1, 1], [], []>} : vector<16x8xf32>, vector<8x16xf32>, vector<16x16xf32> -> vector<16x16xf32>
    %200 = arith.addf %199, %17 : vector<16x16xf32>
    %cst_77 = arith.constant dense<0xFF800000> : vector<16xf32>
    %201 = vector.multi_reduction <maximumf>, %200, %cst_77 [1] : vector<16x16xf32> to vector<16xf32>
    %202 = vector.shape_cast %201 : vector<16xf32> to vector<16x1xf32>
    %203 = vector.broadcast %202 : vector<16x1xf32> to vector<16x16xf32>
    %204 = arith.subf %200, %203 : vector<16x16xf32>
    %205 = math.exp %204 : vector<16x16xf32>
    %cst_78 = arith.constant dense<0.000000e+00> : vector<16xf32>
    %206 = vector.multi_reduction <add>, %205, %cst_78 [1] : vector<16x16xf32> to vector<16xf32>
    %207 = vector.shape_cast %206 : vector<16xf32> to vector<16x1xf32>
    %208 = tpu.reciprocal %207 {approx = true} : vector<16x1xf32> -> vector<16x1xf32>
    %209 = vector.broadcast %208 : vector<16x1xf32> to vector<16x16xf32>
    %210 = arith.mulf %205, %209 : vector<16x16xf32>
    %211 = vector.extract_strided_slice %195 {offsets = [0, 0], sizes = [16, 8], strides = [1, 1]} : vector<16x32xf32> to vector<16x8xf32>
    %cst_79 = arith.constant dense<0.000000e+00> : vector<16x8xf32>
    %212 = tpu.matmul %210, %211, %cst_79 {dimension_numbers = #tpu.dot_dimension_numbers<[1], [0], [0], [1], [0, 0, 1, 1], [], []>} : vector<16x16xf32>, vector<16x8xf32>, vector<16x8xf32> -> vector<16x8xf32>
    %213 = vector.extract_strided_slice %174 {offsets = [0, 0], sizes = [8, 32], strides = [1, 1]} : vector<32x32xf32> to vector<8x32xf32>
    %cst_80 = arith.constant dense<0.000000e+00> : vector<16x32xf32>
    %214 = tpu.matmul %212, %213, %cst_80 {dimension_numbers = #tpu.dot_dimension_numbers<[1], [0], [0], [1], [0, 0, 1, 1], [], []>} : vector<16x8xf32>, vector<8x32xf32>, vector<16x32xf32> -> vector<16x32xf32>
    %215 = vector.extract_strided_slice %189 {offsets = [0, 8], sizes = [16, 8], strides = [1, 1]} : vector<16x32xf32> to vector<16x8xf32>
    %216 = vector.extract_strided_slice %196 {offsets = [8, 0], sizes = [8, 16], strides = [1, 1]} : vector<32x16xf32> to vector<8x16xf32>
    %cst_81 = arith.constant dense<0.000000e+00> : vector<16x16xf32>
    %217 = tpu.matmul %215, %216, %cst_81 {dimension_numbers = #tpu.dot_dimension_numbers<[1], [0], [0], [1], [0, 0, 1, 1], [], []>} : vector<16x8xf32>, vector<8x16xf32>, vector<16x16xf32> -> vector<16x16xf32>
    %218 = arith.addf %217, %17 : vector<16x16xf32>
    %cst_82 = arith.constant dense<0xFF800000> : vector<16xf32>
    %219 = vector.multi_reduction <maximumf>, %218, %cst_82 [1] : vector<16x16xf32> to vector<16xf32>
    %220 = vector.shape_cast %219 : vector<16xf32> to vector<16x1xf32>
    %221 = vector.broadcast %220 : vector<16x1xf32> to vector<16x16xf32>
    %222 = arith.subf %218, %221 : vector<16x16xf32>
    %223 = math.exp %222 : vector<16x16xf32>
    %cst_83 = arith.constant dense<0.000000e+00> : vector<16xf32>
    %224 = vector.multi_reduction <add>, %223, %cst_83 [1] : vector<16x16xf32> to vector<16xf32>
    %225 = vector.shape_cast %224 : vector<16xf32> to vector<16x1xf32>
    %226 = tpu.reciprocal %225 {approx = true} : vector<16x1xf32> -> vector<16x1xf32>
    %227 = vector.broadcast %226 : vector<16x1xf32> to vector<16x16xf32>
    %228 = arith.mulf %223, %227 : vector<16x16xf32>
    %229 = vector.extract_strided_slice %195 {offsets = [0, 8], sizes = [16, 8], strides = [1, 1]} : vector<16x32xf32> to vector<16x8xf32>
    %cst_84 = arith.constant dense<0.000000e+00> : vector<16x8xf32>
    %230 = tpu.matmul %228, %229, %cst_84 {dimension_numbers = #tpu.dot_dimension_numbers<[1], [0], [0], [1], [0, 0, 1, 1], [], []>} : vector<16x16xf32>, vector<16x8xf32>, vector<16x8xf32> -> vector<16x8xf32>
    %231 = vector.extract_strided_slice %174 {offsets = [8, 0], sizes = [8, 32], strides = [1, 1]} : vector<32x32xf32> to vector<8x32xf32>
    %cst_85 = arith.constant dense<0.000000e+00> : vector<16x32xf32>
    %232 = tpu.matmul %230, %231, %cst_85 {dimension_numbers = #tpu.dot_dimension_numbers<[1], [0], [0], [1], [0, 0, 1, 1], [], []>} : vector<16x8xf32>, vector<8x32xf32>, vector<16x32xf32> -> vector<16x32xf32>
    %233 = arith.addf %214, %232 : vector<16x32xf32>
    %234 = vector.extract_strided_slice %189 {offsets = [0, 16], sizes = [16, 8], strides = [1, 1]} : vector<16x32xf32> to vector<16x8xf32>
    %235 = vector.extract_strided_slice %196 {offsets = [16, 0], sizes = [8, 16], strides = [1, 1]} : vector<32x16xf32> to vector<8x16xf32>
    %cst_86 = arith.constant dense<0.000000e+00> : vector<16x16xf32>
    %236 = tpu.matmul %234, %235, %cst_86 {dimension_numbers = #tpu.dot_dimension_numbers<[1], [0], [0], [1], [0, 0, 1, 1], [], []>} : vector<16x8xf32>, vector<8x16xf32>, vector<16x16xf32> -> vector<16x16xf32>
    %237 = arith.addf %236, %17 : vector<16x16xf32>
    %cst_87 = arith.constant dense<0xFF800000> : vector<16xf32>
    %238 = vector.multi_reduction <maximumf>, %237, %cst_87 [1] : vector<16x16xf32> to vector<16xf32>
    %239 = vector.shape_cast %238 : vector<16xf32> to vector<16x1xf32>
    %240 = vector.broadcast %239 : vector<16x1xf32> to vector<16x16xf32>
    %241 = arith.subf %237, %240 : vector<16x16xf32>
    %242 = math.exp %241 : vector<16x16xf32>
    %cst_88 = arith.constant dense<0.000000e+00> : vector<16xf32>
    %243 = vector.multi_reduction <add>, %242, %cst_88 [1] : vector<16x16xf32> to vector<16xf32>
    %244 = vector.shape_cast %243 : vector<16xf32> to vector<16x1xf32>
    %245 = tpu.reciprocal %244 {approx = true} : vector<16x1xf32> -> vector<16x1xf32>
    %246 = vector.broadcast %245 : vector<16x1xf32> to vector<16x16xf32>
    %247 = arith.mulf %242, %246 : vector<16x16xf32>
    %248 = vector.extract_strided_slice %195 {offsets = [0, 16], sizes = [16, 8], strides = [1, 1]} : vector<16x32xf32> to vector<16x8xf32>
    %cst_89 = arith.constant dense<0.000000e+00> : vector<16x8xf32>
    %249 = tpu.matmul %247, %248, %cst_89 {dimension_numbers = #tpu.dot_dimension_numbers<[1], [0], [0], [1], [0, 0, 1, 1], [], []>} : vector<16x16xf32>, vector<16x8xf32>, vector<16x8xf32> -> vector<16x8xf32>
    %250 = vector.extract_strided_slice %174 {offsets = [16, 0], sizes = [8, 32], strides = [1, 1]} : vector<32x32xf32> to vector<8x32xf32>
    %cst_90 = arith.constant dense<0.000000e+00> : vector<16x32xf32>
    %251 = tpu.matmul %249, %250, %cst_90 {dimension_numbers = #tpu.dot_dimension_numbers<[1], [0], [0], [1], [0, 0, 1, 1], [], []>} : vector<16x8xf32>, vector<8x32xf32>, vector<16x32xf32> -> vector<16x32xf32>
    %252 = arith.addf %233, %251 : vector<16x32xf32>
    %253 = vector.extract_strided_slice %189 {offsets = [0, 24], sizes = [16, 8], strides = [1, 1]} : vector<16x32xf32> to vector<16x8xf32>
    %254 = vector.extract_strided_slice %196 {offsets = [24, 0], sizes = [8, 16], strides = [1, 1]} : vector<32x16xf32> to vector<8x16xf32>
    %cst_91 = arith.constant dense<0.000000e+00> : vector<16x16xf32>
    %255 = tpu.matmul %253, %254, %cst_91 {dimension_numbers = #tpu.dot_dimension_numbers<[1], [0], [0], [1], [0, 0, 1, 1], [], []>} : vector<16x8xf32>, vector<8x16xf32>, vector<16x16xf32> -> vector<16x16xf32>
    %256 = arith.addf %255, %17 : vector<16x16xf32>
    %cst_92 = arith.constant dense<0xFF800000> : vector<16xf32>
    %257 = vector.multi_reduction <maximumf>, %256, %cst_92 [1] : vector<16x16xf32> to vector<16xf32>
    %258 = vector.shape_cast %257 : vector<16xf32> to vector<16x1xf32>
    %259 = vector.broadcast %258 : vector<16x1xf32> to vector<16x16xf32>
    %260 = arith.subf %256, %259 : vector<16x16xf32>
    %261 = math.exp %260 : vector<16x16xf32>
    %cst_93 = arith.constant dense<0.000000e+00> : vector<16xf32>
    %262 = vector.multi_reduction <add>, %261, %cst_93 [1] : vector<16x16xf32> to vector<16xf32>
    %263 = vector.shape_cast %262 : vector<16xf32> to vector<16x1xf32>
    %264 = tpu.reciprocal %263 {approx = true} : vector<16x1xf32> -> vector<16x1xf32>
    %265 = vector.broadcast %264 : vector<16x1xf32> to vector<16x16xf32>
    %266 = arith.mulf %261, %265 : vector<16x16xf32>
    %267 = vector.extract_strided_slice %195 {offsets = [0, 24], sizes = [16, 8], strides = [1, 1]} : vector<16x32xf32> to vector<16x8xf32>
    %cst_94 = arith.constant dense<0.000000e+00> : vector<16x8xf32>
    %268 = tpu.matmul %266, %267, %cst_94 {dimension_numbers = #tpu.dot_dimension_numbers<[1], [0], [0], [1], [0, 0, 1, 1], [], []>} : vector<16x16xf32>, vector<16x8xf32>, vector<16x8xf32> -> vector<16x8xf32>
    %269 = vector.extract_strided_slice %174 {offsets = [24, 0], sizes = [8, 32], strides = [1, 1]} : vector<32x32xf32> to vector<8x32xf32>
    %cst_95 = arith.constant dense<0.000000e+00> : vector<16x32xf32>
    %270 = tpu.matmul %268, %269, %cst_95 {dimension_numbers = #tpu.dot_dimension_numbers<[1], [0], [0], [1], [0, 0, 1, 1], [], []>} : vector<16x8xf32>, vector<8x32xf32>, vector<16x32xf32> -> vector<16x32xf32>
    %271 = arith.addf %252, %270 : vector<16x32xf32>
    %272 = vector.broadcast %180 : vector<1x32xf32> to vector<16x32xf32>
    %273 = arith.addf %271, %272 : vector<16x32xf32>
    %274 = arith.addf %170, %273 : vector<16x32xf32>
    %cst_96 = arith.constant dense<0.000000e+00> : vector<16xf32>
    %275 = vector.multi_reduction <add>, %274, %cst_96 [1] : vector<16x32xf32> to vector<16xf32>
    %276 = vector.shape_cast %275 : vector<16xf32> to vector<16x1xf32>
    %cst_97 = arith.constant 3.200000e+01 : f32
    %277 = vector.broadcast %cst_97 : f32 to vector<16x1xf32>
    %278 = arith.divf %276, %277 : vector<16x1xf32>
    %279 = vector.broadcast %278 : vector<16x1xf32> to vector<16x32xf32>
    %280 = arith.subf %274, %279 : vector<16x32xf32>
    %281 = arith.mulf %280, %280 : vector<16x32xf32>
    %cst_98 = arith.constant dense<0.000000e+00> : vector<16xf32>
    %282 = vector.multi_reduction <add>, %281, %cst_98 [1] : vector<16x32xf32> to vector<16xf32>
    %283 = vector.shape_cast %282 : vector<16xf32> to vector<16x1xf32>
    %cst_99 = arith.constant 3.200000e+01 : f32
    %284 = vector.broadcast %cst_99 : f32 to vector<16x1xf32>
    %285 = arith.divf %283, %284 : vector<16x1xf32>
    %cst_100 = arith.constant 9.99999974E-6 : f32
    %286 = vector.broadcast %cst_100 : f32 to vector<16x1xf32>
    %287 = arith.addf %285, %286 : vector<16x1xf32>
    %288 = math.rsqrt %287 : vector<16x1xf32>
    %289 = vector.broadcast %288 : vector<16x1xf32> to vector<16x32xf32>
    %290 = arith.mulf %280, %289 : vector<16x32xf32>
    %291 = vector.broadcast %181 : vector<1x32xf32> to vector<16x32xf32>
    %292 = arith.mulf %290, %291 : vector<16x32xf32>
    %293 = vector.broadcast %182 : vector<1x32xf32> to vector<16x32xf32>
    %294 = arith.addf %292, %293 : vector<16x32xf32>
    %cst_101 = arith.constant dense<0.000000e+00> : vector<16x64xf32>
    %295 = tpu.matmul %294, %175, %cst_101 {dimension_numbers = #tpu.dot_dimension_numbers<[1], [0], [0], [1], [0, 0, 1, 1], [], []>} : vector<16x32xf32>, vector<32x64xf32>, vector<16x64xf32> -> vector<16x64xf32>
    %296 = vector.broadcast %183 : vector<1x64xf32> to vector<16x64xf32>
    %297 = arith.addf %295, %296 : vector<16x64xf32>
    %cst_102 = arith.constant 0.000000e+00 : f32
    %298 = vector.broadcast %cst_102 : f32 to vector<16x64xf32>
    %299 = arith.maximumf %297, %298 : vector<16x64xf32>
    %cst_103 = arith.constant dense<0.000000e+00> : vector<16x32xf32>
    %300 = tpu.matmul %299, %176, %cst_103 {dimension_numbers = #tpu.dot_dimension_numbers<[1], [0], [0], [1], [0, 0, 1, 1], [], []>} : vector<16x64xf32>, vector<64x32xf32>, vector<16x32xf32> -> vector<16x32xf32>
    %301 = vector.broadcast %184 : vector<1x32xf32> to vector<16x32xf32>
    %302 = arith.addf %300, %301 : vector<16x32xf32>
    %303 = arith.addf %294, %302 : vector<16x32xf32>
    %cst_104 = arith.constant dense<0.000000e+00> : vector<16xf32>
    %304 = vector.multi_reduction <add>, %303, %cst_104 [1] : vector<16x32xf32> to vector<16xf32>
    %305 = vector.shape_cast %304 : vector<16xf32> to vector<16x1xf32>
    %cst_105 = arith.constant 3.200000e+01 : f32
    %306 = vector.broadcast %cst_105 : f32 to vector<16x1xf32>
    %307 = arith.divf %305, %306 : vector<16x1xf32>
    %308 = vector.broadcast %307 : vector<16x1xf32> to vector<16x32xf32>
    %309 = arith.subf %303, %308 : vector<16x32xf32>
    %310 = arith.mulf %309, %309 : vector<16x32xf32>
    %cst_106 = arith.constant dense<0.000000e+00> : vector<16xf32>
    %311 = vector.multi_reduction <add>, %310, %cst_106 [1] : vector<16x32xf32> to vector<16xf32>
    %312 = vector.shape_cast %311 : vector<16xf32> to vector<16x1xf32>
    %cst_107 = arith.constant 3.200000e+01 : f32
    %313 = vector.broadcast %cst_107 : f32 to vector<16x1xf32>
    %314 = arith.divf %312, %313 : vector<16x1xf32>
    %cst_108 = arith.constant 9.99999974E-6 : f32
    %315 = vector.broadcast %cst_108 : f32 to vector<16x1xf32>
    %316 = arith.addf %314, %315 : vector<16x1xf32>
    %317 = math.rsqrt %316 : vector<16x1xf32>
    %318 = vector.broadcast %317 : vector<16x1xf32> to vector<16x32xf32>
    %319 = arith.mulf %309, %318 : vector<16x32xf32>
    %320 = vector.broadcast %185 : vector<1x32xf32> to vector<16x32xf32>
    %321 = arith.mulf %319, %320 : vector<16x32xf32>
    %322 = vector.broadcast %186 : vector<1x32xf32> to vector<16x32xf32>
    %323 = arith.addf %321, %322 : vector<16x32xf32>
    %c0_109 = arith.constant 0 : index
    %c0_110 = arith.constant 0 : index
    %324 = vector.load %arg3[%c0_109, %c0_110] : memref<16x32xf32, #tpu.memory_space<vmem>>, vector<16x32xf32>
    tpu.vector_store %arg3[%c0_109, %c0_110], %323 {strides = array<i32>} : memref<16x32xf32, #tpu.memory_space<vmem>>, vector<16x32xf32>,
    return
  }
}

</mosaic_0001>

<llo_original>
// kernel: tpu_custom_call.1
$region0: #{tpu_custom_call.1}
  #allocation0 [shape = 'u32[]', space=smem, size = 0x4, offset = 0x4, fixed_abs, tag = 'smem constant byte address 0x4 - core index']
  #allocation1 [shape = 'u32[144,128]{1,0:T(1,128)}', space=vmem, size = 0x12000, scoped, tag = 'internal scratch']
  %s0 = inlined_call_operand.vmem [shape: s32[16,3], index: 0, kind: input, shape index: {}]
  %s1 = inlined_call_operand.vmem [shape: f32[16,16], index: 1, kind: input, shape index: {}]
  %s2 = inlined_call_operand.vmem [shape: f32[520,64], index: 2, kind: input, shape index: {}]
  %s3 = inlined_call_operand.hbm [shape: f32[16,32], index: 3, kind: output, shape index: {}]
  %s4 = sld [smem:[#allocation0]]
  $region22: #{tpu_custom_call.1} parent=0
    _
  %s6 = ssub.s32 1, %s4
  %s7 = scalar_select 0, %s6, %s4
  $region1: #{tpu_custom_call.1} parent=0
    #allocation2 [shape = 'u8[8192]{0}', space=vmem, size = 0x2000, scoped, tag = 'output window, operand 0, single buffered']
    #allocation3 [shape = 's32[1]{0}', space=sflag, size = 0x4, scoped, tag = 'scoped memory for tpu_custom_call.1']
    %8 = vsyncpa [#allocation3], 0
    // Predicated region
    $region2: #{tpu_custom_call.1} parent=1 // pred_check
      _
    $region3: #{tpu_custom_call.1} parent=1 // pred_check_branch
      %10 = sbr.rel (0) target = $region5
    $region4: #{tpu_custom_call.1} parent=1 // pred_region
      _
    $region5: #{tpu_custom_call.1} parent=1 // pred_fallthru
      _
    // Predicated region
    $region6: #{tpu_custom_call.1} parent=1 // pred_check
      _
    $region7: #{tpu_custom_call.1} parent=1 // pred_check_branch
      %12 = sbr.rel (0) target = $region9
    $region8: #{tpu_custom_call.1} parent=1 // pred_region
      _
    $region9: #{tpu_custom_call.1} parent=1 // pred_fallthru
      _
    // Predicated region
    $region10: #{tpu_custom_call.1} parent=1 // pred_check
      _
    $region11: #{tpu_custom_call.1} parent=1 // pred_check_branch
      %14 = sbr.rel (0) target = $region13
    $region12: #{tpu_custom_call.1} parent=1 // pred_region
      _
    $region13: #{tpu_custom_call.1} parent=1 // pred_fallthru
      _
    %v15 = vld [vmem:[%s0] sm:$0xff]
    %v16 = vld [vmem:[%s0 + $0x8] sm:$0xff]
    %v17 = vlaneseq
    %v18 = vand.u32 %v17, 127
    %19 = vset.pattern.permute.xlu0 0
    %20 = vperm.xlu0 %19, %v15
    %v21 = vpop.permute.xlu0 %20
    %22 = vset.pattern.permute.xlu0 0
    %23 = vperm.xlu0 %22, %v16
    %v24 = vpop.permute.xlu0 %23
    %vm25 = vcmp.eq.s32.totalorder %v18, %v21
    %vm26 = vcmp.eq.s32.totalorder %v18, %v24
    %27 = vset.pattern.permute.xlu0 1
    %28 = vperm.xlu0 %27, %v15
    %v29 = vpop.permute.xlu0 %28
    %30 = vset.pattern.permute.xlu0 1
    %31 = vperm.xlu0 %30, %v16
    %v32 = vpop.permute.xlu0 %31
    %vm33 = vcmp.eq.s32.totalorder %v18, %v29
    %vm34 = vcmp.eq.s32.totalorder %v18, %v32
    %vm35 = vmor %vm25, %vm33
    %vm36 = vmor %vm26, %vm34
    %37 = vset.pattern.permute.xlu0 2
    %38 = vperm.xlu0 %37, %v15
    %v39 = vpop.permute.xlu0 %38
    %40 = vset.pattern.permute.xlu0 2
    %41 = vperm.xlu0 %40, %v16
    %v42 = vpop.permute.xlu0 %41
    %vm43 = vcmp.eq.s32.totalorder %v18, %v39
    %vm44 = vcmp.eq.s32.totalorder %v18, %v42
    %vm45 = vmor %vm35, %vm43
    %vm46 = vmor %vm36, %vm44
    %v47 = vsel %vm45, 1, 0
    %v48 = vsel %vm46, 1, 0
    %v49 = vcvt.s32.f32 %v47
    %v50 = vcvt.s32.f32 %v48
    %v51 = vld [vmem:[%s2] sm:$0xff]
    %v52 = vld [vmem:[%s2 + $0x8] sm:$0xff]
    %v53 = vld [vmem:[%s2 + $0x10] sm:$0xff]
    %v54 = vld [vmem:[%s2 + $0x18] sm:$0xff]
    %v55 = vld [vmem:[%s2 + $0x20] sm:$0xff]
    %v56 = vld [vmem:[%s2 + $0x28] sm:$0xff]
    %vm57 = vcmask 392192
    %v59 = vsel %vm57, %v49, 0
    %v62 = vsel %vm57, %v50, 0
    %64 = vmatprep.subr.mxu0 0.0
    %65 = vmatpush1.msra.mxu0 %v51
    %66 = vmatprep.subr.mxu0 0.0
    %67 = vmatpush1.msra.mxu0 %v52
    %68 = vmatprep.subr.mxu0 0.0
    %69 = vmatpush1.msra.mxu0 %v53
    %70 = vmatprep.subr.mxu0 0.0
    %71 = vmatpush1.msra.mxu0 %v54
    %72 = vmatprep.subr.mxu0 0.0
    %73 = vmatpush1.msra.mxu0 %v55
    %74 = vmatprep.subr.mxu0 0.0
    %75 = vmatpush1.msra.mxu0 %v56
    %76 = vmatprep.subr.mxu0 0.0
    %77 = vmatpush1.msra.mxu0 0.0
    %78 = vmatprep.subr.mxu0 0.0
    %79 = vmatpush1.msra.mxu0 0.0
    %80 = vmatprep.subr.mxu0 0.0
    %81 = vmatpush1.msra.mxu0 0.0
    %82 = vmatprep.subr.mxu0 0.0
    %83 = vmatpush1.msra.mxu0 0.0
    %84 = vmatprep.subr.mxu0 0.0
    %85 = vmatpush1.msra.mxu0 0.0
    %86 = vmatprep.subr.mxu0 0.0
    %87 = vmatpush1.msra.mxu0 0.0
    %88 = vmatprep.subr.mxu0 0.0
    %89 = vmatpush1.msra.mxu0 0.0
    %90 = vmatprep.subr.mxu0 0.0
    %91 = vmatpush1.msra.mxu0 0.0
    %92 = vmatprep.subr.mxu0 0.0
    %93 = vmatpush1.msra.mxu0 0.0
    %94 = vmatprep.subr.mxu0 0.0
    %95 = vmatpush1.msra.mxu0 0.0
    %96 = vmatprep.subr.mxu0 0.0
    %97 = vmatpush1.msra.mxu0 0.0
    %98 = vmatprep.subr.mxu0 0.0
    %99 = vmatpush1.msra.mxu0 0.0
    %100 = vmatprep.subr.mxu0 0.0
    %101 = vmatpush1.msra.mxu0 0.0
    %102 = vmatprep.subr.mxu0 0.0
    %103 = vmatpush1.msra.mxu0 0.0
    %104 = vmatprep.subr.mxu0 0.0
    %105 = vmatpush1.msra.mxu0 0.0
    %106 = vmatprep.subr.mxu0 0.0
    %107 = vmatpush1.msra.mxu0 0.0
    %108 = vmatprep.subr.mxu0 0.0
    %109 = vmatpush1.msra.mxu0 0.0
    %110 = vmatprep.subr.mxu0 0.0
    %111 = vmatpush1.msra.mxu0 0.0
    %112 = vmatprep.subr.mxu0 0.0
    %113 = vmatpush1.msra.mxu0 0.0
    %114 = vmatprep.subr.mxu0 0.0
    %115 = vmatpush1.msra.mxu0 0.0
    %116 = vmatprep.subr.mxu0 0.0
    %117 = vmatpush1.msra.mxu0 0.0
    %118 = vmatprep.subr.mxu0 0.0
    %119 = vmatpush1.msra.mxu0 0.0
    %120 = vmatprep.subr.mxu0 0.0
    %121 = vmatpush1.msra.mxu0 0.0
    %122 = vmatprep.subr.mxu0 0.0
    %123 = vmatpush1.msra.mxu0 0.0
    %124 = vmatprep.subr.mxu0 0.0
    %125 = vmatpush1.msra.mxu0 0.0
    %126 = vmatprep.subr.mxu0 0.0
    %127 = vmatpush1.msra.mxu0 0.0
    %128 = vmatprep.mubr.f32.mxu0 0.0
    %129 = vmatmul.mubr.f32.gmra.mrb[0].mxu0 %v59
    %v130 = vpop.f32.mrb[0].mxu0
    %v131 = vadd.f32 0.0, %v130
    %v132 = vpop.f32.mrb[0].mxu0
    %133 = vmatprep.mubr.f32.mxu0 0.0
    %134 = vmatmul.mubr.f32.gmra.mrb[0].mxu0 %v62
    %v135 = vpop.f32.mrb[0].mxu0
    %v136 = vadd.f32 0.0, %v135
    %v137 = vpop.f32.mrb[0].mxu0
    %138 = vdwg.mxu0
    %v139 = vld [vmem:[%s1] sm:$0xff]
    %v140 = vld [vmem:[%s1 + $0x8] sm:$0xff]
    %v141 = vld [vmem:[%s2 + $0x30] sm:$0xff]
    %v142 = vld [vmem:[%s2 + $0x38] sm:$0xff]
    %v143 = vld [vmem:[%s2 + $0x40] sm:$0xff]
    %v144 = vld [vmem:[%s2 + $0x48] sm:$0xff]
    %v145 = vld [vmem:[%s2 + $0x50] sm:$0xff]
    %v146 = vld [vmem:[%s2 + $0x58] sm:$0xff]
    %v147 = vld [vmem:[%s2 + $0x60] sm:$0xff]
    %v148 = vld [vmem:[%s2 + $0x68] sm:$0xff]
    %v149 = vld [vmem:[%s2 + $0x70] sm:$0xff]
    %v150 = vld [vmem:[%s2 + $0x78] sm:$0xff]
    %v151 = vld [vmem:[%s2 + $0x80] sm:$0xff]
    %v152 = vld [vmem:[%s2 + $0x88] sm:$0xff]
    %v153 = vld [vmem:[%s2 + $0x90] sm:$0xff]
    %v154 = vld [vmem:[%s2 + $0x98] sm:$0xff]
    %v155 = vld [vmem:[%s2 + $0xa0] sm:$0xff]
    %v156 = vld [vmem:[%s2 + $0xa8] sm:$0xff]
    %v157 = vld [vmem:[%s2 + $0xb0] sm:$0xff]
    %v158 = vld [vmem:[%s2 + $0xb8] sm:$0xff]
    %v159 = vld [vmem:[%s2 + $0xc0] sm:$0xff]
    %v160 = vld [vmem:[%s2 + $0xc8] sm:$0xff]
    %v161 = vld [vmem:[%s2 + $0xd0] sm:$0xff]
    %v162 = vld [vmem:[%s2 + $0xd8] sm:$0xff]
    %v163 = vld [vmem:[%s2 + $0xe0] sm:$0xff]
    %v164 = vld [vmem:[%s2 + $0xe8] sm:$0xff]
    %v165 = vld [vmem:[%s2 + $0xf0] sm:$0xff]
    %v166 = vld [vmem:[%s2 + $0xf8] sm:$0xff]
    %v167 = vld [vmem:[%s2 + $0x100] sm:$0xff]
    %v168 = vld [vmem:[%s2 + $0x108] sm:$0xff]
    %v169 = vld [vmem:[%s2 + $0x1f0] sm:$0x1]
    %v170 = vld [vmem:[%s2 + $0x1f1] sm:$0x1]
    %v171 = vld [vmem:[%s2 + $0x1f2] sm:$0x1]
    %v172 = vld [vmem:[%s2 + $0x1f3] sm:$0x1]
    %v173 = vld [vmem:[%s2 + $0x1f4] sm:$0x1]
    %v174 = vld [vmem:[%s2 + $0x1f5] sm:$0x1]
    %v175 = vld [vmem:[%s2 + $0x1f6] sm:$0x1]
    %v176 = vld [vmem:[%s2 + $0x1f7] sm:$0x1]
    %v177 = vld [vmem:[%s2 + $0x1f8] sm:$0x1]
    %v178 = vld [vmem:[%s2 + $0x1f9] sm:$0x1]
    %v179 = vlaneseq
    %v180 = vshrl.u32 %v179, 7
    %v181 = vsub.s32 0, %v180
    %v182 = vrot.slane %v169, %v181
    %vm183 = vcmask 261120
    %v185 = vsel %vm183, %v131, 0
    %v188 = vsel %vm183, %v136, 0
    %190 = vmatprep.subr.mxu0 0.0
    %191 = vmatpush1.msra.mxu0 %v141
    %192 = vmatprep.subr.mxu0 0.0
    %193 = vmatpush1.msra.mxu0 %v142
    %194 = vmatprep.subr.mxu0 0.0
    %195 = vmatpush1.msra.mxu0 %v143
    %196 = vmatprep.subr.mxu0 0.0
    %197 = vmatpush1.msra.mxu0 %v144
    %198 = vmatprep.subr.mxu0 0.0
    %199 = vmatpush1.msra.mxu0 0.0
    %200 = vmatprep.subr.mxu0 0.0
    %201 = vmatpush1.msra.mxu0 0.0
    %202 = vmatprep.subr.mxu0 0.0
    %203 = vmatpush1.msra.mxu0 0.0
    %204 = vmatprep.subr.mxu0 0.0
    %205 = vmatpush1.msra.mxu0 0.0
    %206 = vmatprep.subr.mxu0 0.0
    %207 = vmatpush1.msra.mxu0 0.0
    %208 = vmatprep.subr.mxu0 0.0
    %209 = vmatpush1.msra.mxu0 0.0
    %210 = vmatprep.subr.mxu0 0.0
    %211 = vmatpush1.msra.mxu0 0.0
    %212 = vmatprep.subr.mxu0 0.0
    %213 = vmatpush1.msra.mxu0 0.0
    %214 = vmatprep.subr.mxu0 0.0
    %215 = vmatpush1.msra.mxu0 0.0
    %216 = vmatprep.subr.mxu0 0.0
    %217 = vmatpush1.msra.mxu0 0.0
    %218 = vmatprep.subr.mxu0 0.0
    %219 = vmatpush1.msra.mxu0 0.0
    %220 = vmatprep.subr.mxu0 0.0
    %221 = vmatpush1.msra.mxu0 0.0
    %222 = vmatprep.subr.mxu0 0.0
    %223 = vmatpush1.msra.mxu0 0.0
    %224 = vmatprep.subr.mxu0 0.0
    %225 = vmatpush1.msra.mxu0 0.0
    %226 = vmatprep.subr.mxu0 0.0
    %227 = vmatpush1.msra.mxu0 0.0
    %228 = vmatprep.subr.mxu0 0.0
    %229 = vmatpush1.msra.mxu0 0.0
    %230 = vmatprep.subr.mxu0 0.0
    %231 = vmatpush1.msra.mxu0 0.0
    %232 = vmatprep.subr.mxu0 0.0
    %233 = vmatpush1.msra.mxu0 0.0
    %234 = vmatprep.subr.mxu0 0.0
    %235 = vmatpush1.msra.mxu0 0.0
    %236 = vmatprep.subr.mxu0 0.0
    %237 = vmatpush1.msra.mxu0 0.0
    %238 = vmatprep.subr.mxu0 0.0
    %239 = vmatpush1.msra.mxu0 0.0
    %240 = vmatprep.subr.mxu0 0.0
    %241 = vmatpush1.msra.mxu0 0.0
    %242 = vmatprep.subr.mxu0 0.0
    %243 = vmatpush1.msra.mxu0 0.0
    %244 = vmatprep.subr.mxu0 0.0
    %245 = vmatpush1.msra.mxu0 0.0
    %246 = vmatprep.subr.mxu0 0.0
    %247 = vmatpush1.msra.mxu0 0.0
    %248 = vmatprep.subr.mxu0 0.0
    %249 = vmatpush1.msra.mxu0 0.0
    %250 = vmatprep.subr.mxu0 0.0
    %251 = vmatpush1.msra.mxu0 0.0
    %252 = vmatprep.subr.mxu0 0.0
    %253 = vmatpush1.msra.mxu0 0.0
    %254 = vmatprep.mubr.f32.mxu0 0.0
    %255 = vmatmul.mubr.f32.gmra.mrb[0].mxu0 %v185
    %v256 = vpop.f32.mrb[0].mxu0
    %v257 = vadd.f32 %v182, %v256
    %v258 = vpop.f32.mrb[0].mxu0
    %259 = vmatprep.mubr.f32.mxu0 0.0
    %260 = vmatmul.mubr.f32.gmra.mrb[0].mxu0 %v188
    %v261 = vpop.f32.mrb[0].mxu0
    %v262 = vadd.f32 %v182, %v261
    %v263 = vpop.f32.mrb[0].mxu0
    %264 = vdwg.mxu0
    %v265 = vlaneseq
    %v266 = vshrl.u32 %v265, 7
    %v267 = vsub.s32 0, %v266
    %v268 = vrot.slane %v170, %v267
    %269 = vmatprep.subr.mxu0 0.0
    %270 = vmatpush1.msra.mxu0 %v145
    %271 = vmatprep.subr.mxu0 0.0
    %272 = vmatpush1.msra.mxu0 %v146
    %273 = vmatprep.subr.mxu0 0.0
    %274 = vmatpush1.msra.mxu0 %v147
    %275 = vmatprep.subr.mxu0 0.0
    %276 = vmatpush1.msra.mxu0 %v148
    %277 = vmatprep.subr.mxu0 0.0
    %278 = vmatpush1.msra.mxu0 0.0
    %279 = vmatprep.subr.mxu0 0.0
    %280 = vmatpush1.msra.mxu0 0.0
    %281 = vmatprep.subr.mxu0 0.0
    %282 = vmatpush1.msra.mxu0 0.0
    %283 = vmatprep.subr.mxu0 0.0
    %284 = vmatpush1.msra.mxu0 0.0
    %285 = vmatprep.subr.mxu0 0.0
    %286 = vmatpush1.msra.mxu0 0.0
    %287 = vmatprep.subr.mxu0 0.0
    %288 = vmatpush1.msra.mxu0 0.0
    %289 = vmatprep.subr.mxu0 0.0
    %290 = vmatpush1.msra.mxu0 0.0
    %291 = vmatprep.subr.mxu0 0.0
    %292 = vmatpush1.msra.mxu0 0.0
    %293 = vmatprep.subr.mxu0 0.0
    %294 = vmatpush1.msra.mxu0 0.0
    %295 = vmatprep.subr.mxu0 0.0
    %296 = vmatpush1.msra.mxu0 0.0
    %297 = vmatprep.subr.mxu0 0.0
    %298 = vmatpush1.msra.mxu0 0.0
    %299 = vmatprep.subr.mxu0 0.0
    %300 = vmatpush1.msra.mxu0 0.0
    %301 = vmatprep.subr.mxu0 0.0
    %302 = vmatpush1.msra.mxu0 0.0
    %303 = vmatprep.subr.mxu0 0.0
    %304 = vmatpush1.msra.mxu0 0.0
    %305 = vmatprep.subr.mxu0 0.0
    %306 = vmatpush1.msra.mxu0 0.0
    %307 = vmatprep.subr.mxu0 0.0
    %308 = vmatpush1.msra.mxu0 0.0
    %309 = vmatprep.subr.mxu0 0.0
    %310 = vmatpush1.msra.mxu0 0.0
    %311 = vmatprep.subr.mxu0 0.0
    %312 = vmatpush1.msra.mxu0 0.0
    %313 = vmatprep.subr.mxu0 0.0
    %314 = vmatpush1.msra.mxu0 0.0
    %315 = vmatprep.subr.mxu0 0.0
    %316 = vmatpush1.msra.mxu0 0.0
    %317 = vmatprep.subr.mxu0 0.0
    %318 = vmatpush1.msra.mxu0 0.0
    %319 = vmatprep.subr.mxu0 0.0
    %320 = vmatpush1.msra.mxu0 0.0
    %321 = vmatprep.subr.mxu0 0.0
    %322 = vmatpush1.msra.mxu0 0.0
    %323 = vmatprep.subr.mxu0 0.0
    %324 = vmatpush1.msra.mxu0 0.0
    %325 = vmatprep.subr.mxu0 0.0
    %326 = vmatpush1.msra.mxu0 0.0
    %327 = vmatprep.subr.mxu0 0.0
    %328 = vmatpush1.msra.mxu0 0.0
    %329 = vmatprep.subr.mxu0 0.0
    %330 = vmatpush1.msra.mxu0 0.0
    %331 = vmatprep.subr.mxu0 0.0
    %332 = vmatpush1.msra.mxu0 0.0
    %333 = vmatprep.mubr.f32.mxu0 0.0
    %334 = vmatmul.mubr.f32.gmra.mrb[0].mxu0 %v185
    %v335 = vpop.f32.mrb[0].mxu0
    %v336 = vadd.f32 %v268, %v335
    %v337 = vpop.f32.mrb[0].mxu0
    %338 = vmatprep.mubr.f32.mxu0 0.0
    %339 = vmatmul.mubr.f32.gmra.mrb[0].mxu0 %v188
    %v340 = vpop.f32.mrb[0].mxu0
    %v341 = vadd.f32 %v268, %v340
    %v342 = vpop.f32.mrb[0].mxu0
    %343 = vdwg.mxu0
    %v344 = vlaneseq
    %v345 = vshrl.u32 %v344, 7
    %v346 = vsub.s32 0, %v345
    %v347 = vrot.slane %v171, %v346
    %348 = vmatprep.subr.mxu0 0.0
    %349 = vmatpush1.msra.mxu0 %v149
    %350 = vmatprep.subr.mxu0 0.0
    %351 = vmatpush1.msra.mxu0 %v150
    %352 = vmatprep.subr.mxu0 0.0
    %353 = vmatpush1.msra.mxu0 %v151
    %354 = vmatprep.subr.mxu0 0.0
    %355 = vmatpush1.msra.mxu0 %v152
    %356 = vmatprep.subr.mxu0 0.0
    %357 = vmatpush1.msra.mxu0 0.0
    %358 = vmatprep.subr.mxu0 0.0
    %359 = vmatpush1.msra.mxu0 0.0
    %360 = vmatprep.subr.mxu0 0.0
    %361 = vmatpush1.msra.mxu0 0.0
    %362 = vmatprep.subr.mxu0 0.0
    %363 = vmatpush1.msra.mxu0 0.0
    %364 = vmatprep.subr.mxu0 0.0
    %365 = vmatpush1.msra.mxu0 0.0
    %366 = vmatprep.subr.mxu0 0.0
    %367 = vmatpush1.msra.mxu0 0.0
    %368 = vmatprep.subr.mxu0 0.0
    %369 = vmatpush1.msra.mxu0 0.0
    %370 = vmatprep.subr.mxu0 0.0
    %371 = vmatpush1.msra.mxu0 0.0
    %372 = vmatprep.subr.mxu0 0.0
    %373 = vmatpush1.msra.mxu0 0.0
    %374 = vmatprep.subr.mxu0 0.0
    %375 = vmatpush1.msra.mxu0 0.0
    %376 = vmatprep.subr.mxu0 0.0
    %377 = vmatpush1.msra.mxu0 0.0
    %378 = vmatprep.subr.mxu0 0.0
    %379 = vmatpush1.msra.mxu0 0.0
    %380 = vmatprep.subr.mxu0 0.0
    %381 = vmatpush1.msra.mxu0 0.0
    %382 = vmatprep.subr.mxu0 0.0
    %383 = vmatpush1.msra.mxu0 0.0
    %384 = vmatprep.subr.mxu0 0.0
    %385 = vmatpush1.msra.mxu0 0.0
    %386 = vmatprep.subr.mxu0 0.0
    %387 = vmatpush1.msra.mxu0 0.0
    %388 = vmatprep.subr.mxu0 0.0
    %389 = vmatpush1.msra.mxu0 0.0
    %390 = vmatprep.subr.mxu0 0.0
    %391 = vmatpush1.msra.mxu0 0.0
    %392 = vmatprep.subr.mxu0 0.0
    %393 = vmatpush1.msra.mxu0 0.0
    %394 = vmatprep.subr.mxu0 0.0
    %395 = vmatpush1.msra.mxu0 0.0
    %396 = vmatprep.subr.mxu0 0.0
    %397 = vmatpush1.msra.mxu0 0.0
    %398 = vmatprep.subr.mxu0 0.0
    %399 = vmatpush1.msra.mxu0 0.0
    %400 = vmatprep.subr.mxu0 0.0
    %401 = vmatpush1.msra.mxu0 0.0
    %402 = vmatprep.subr.mxu0 0.0
    %403 = vmatpush1.msra.mxu0 0.0
    %404 = vmatprep.subr.mxu0 0.0
    %405 = vmatpush1.msra.mxu0 0.0
    %406 = vmatprep.subr.mxu0 0.0
    %407 = vmatpush1.msra.mxu0 0.0
    %408 = vmatprep.subr.mxu0 0.0
    %409 = vmatpush1.msra.mxu0 0.0
    %410 = vmatprep.subr.mxu0 0.0
    %411 = vmatpush1.msra.mxu0 0.0
    %412 = vmatprep.mubr.f32.mxu0 0.0
    %413 = vmatmul.mubr.f32.gmra.mrb[0].mxu0 %v185
    %v414 = vpop.f32.mrb[0].mxu0
    %v415 = vadd.f32 %v347, %v414
    %v416 = vpop.f32.mrb[0].mxu0
    %417 = vmatprep.mubr.f32.mxu0 0.0
    %418 = vmatmul.mubr.f32.gmra.mrb[0].mxu0 %v188
    %v419 = vpop.f32.mrb[0].mxu0
    %v420 = vadd.f32 %v347, %v419
    %v421 = vpop.f32.mrb[0].mxu0
    %422 = vdwg.mxu0
    %vm423 = vcmask 64512
    %v425 = vsel %vm423, %v257, 0
    %v428 = vsel %vm423, %v262, 0
    %v431 = vsel %vm423, %v336, 0
    %v434 = vsel %vm423, %v341, 0
    %436 = vmatprep.subr.mxu0 0.0
    %437 = vmatpush1.xpose.msra.mxu0 %v431
    %438 = vmatprep.subr.mxu0 0.0
    %439 = vmatpush1.xpose.msra.mxu0 %v434
    %440 = vmatprep.subr.mxu0 0.0
    %441 = vmatpush1.xpose.msra.mxu0 0.0
    %442 = vmatprep.subr.mxu0 0.0
    %443 = vmatpush1.xpose.msra.mxu0 0.0
    %444 = vmatprep.subr.mxu0 0.0
    %445 = vmatpush1.xpose.msra.mxu0 0.0
    %446 = vmatprep.subr.mxu0 0.0
    %447 = vmatpush1.xpose.msra.mxu0 0.0
    %448 = vmatprep.subr.mxu0 0.0
    %449 = vmatpush1.xpose.msra.mxu0 0.0
    %450 = vmatprep.subr.mxu0 0.0
    %451 = vmatpush1.xpose.msra.mxu0 0.0
    %452 = vmatprep.subr.mxu0 0.0
    %453 = vmatpush1.xpose.msra.mxu0 0.0
    %454 = vmatprep.subr.mxu0 0.0
    %455 = vmatpush1.xpose.msra.mxu0 0.0
    %456 = vmatprep.subr.mxu0 0.0
    %457 = vmatpush1.xpose.msra.mxu0 0.0
    %458 = vmatprep.subr.mxu0 0.0
    %459 = vmatpush1.xpose.msra.mxu0 0.0
    %460 = vmatprep.subr.mxu0 0.0
    %461 = vmatpush1.xpose.msra.mxu0 0.0
    %462 = vmatprep.subr.mxu0 0.0
    %463 = vmatpush1.xpose.msra.mxu0 0.0
    %464 = vmatprep.subr.mxu0 0.0
    %465 = vmatpush1.xpose.msra.mxu0 0.0
    %466 = vmatprep.subr.mxu0 0.0
    %467 = vmatpush1.xpose.msra.mxu0 0.0
    %468 = vmatprep.subr.mxu0 0.0
    %469 = vmatpush1.xpose.msra.mxu0 0.0
    %470 = vmatprep.subr.mxu0 0.0
    %471 = vmatpush1.xpose.msra.mxu0 0.0
    %472 = vmatprep.subr.mxu0 0.0
    %473 = vmatpush1.xpose.msra.mxu0 0.0
    %474 = vmatprep.subr.mxu0 0.0
    %475 = vmatpush1.xpose.msra.mxu0 0.0
    %476 = vmatprep.subr.mxu0 0.0
    %477 = vmatpush1.xpose.msra.mxu0 0.0
    %478 = vmatprep.subr.mxu0 0.0
    %479 = vmatpush1.xpose.msra.mxu0 0.0
    %480 = vmatprep.subr.mxu0 0.0
    %481 = vmatpush1.xpose.msra.mxu0 0.0
    %482 = vmatprep.subr.mxu0 0.0
    %483 = vmatpush1.xpose.msra.mxu0 0.0
    %484 = vmatprep.subr.mxu0 0.0
    %485 = vmatpush1.xpose.msra.mxu0 0.0
    %486 = vmatprep.subr.mxu0 0.0
    %487 = vmatpush1.xpose.msra.mxu0 0.0
    %488 = vmatprep.subr.mxu0 0.0
    %489 = vmatpush1.xpose.msra.mxu0 0.0
    %490 = vmatprep.subr.mxu0 0.0
    %491 = vmatpush1.xpose.msra.mxu0 0.0
    %492 = vmatprep.subr.mxu0 0.0
    %493 = vmatpush1.xpose.msra.mxu0 0.0
    %494 = vmatprep.subr.mxu0 0.0
    %495 = vmatpush1.xpose.msra.mxu0 0.0
    %496 = vmatprep.subr.mxu0 0.0
    %497 = vmatpush1.xpose.msra.mxu0 0.0
    %498 = vmatprep.subr.mxu0 0.0
    %499 = vmatpush1.xpose.msra.mxu0 0.0
    %500 = vmatprep.mubr.f32.mxu0 0.0
    %501 = vmatmul.mubr.f32.gmra.mrb[0].mxu0 %v425
    %v502 = vpop.f32.mrb[0].mxu0
    %v503 = vadd.f32 %v139, %v502
    %v504 = vpop.f32.mrb[0].mxu0
    %505 = vmatprep.mubr.f32.mxu0 0.0
    %506 = vmatmul.mubr.f32.gmra.mrb[0].mxu0 %v428
    %v507 = vpop.f32.mrb[0].mxu0
    %v508 = vadd.f32 %v140, %v507
    %v509 = vpop.f32.mrb[0].mxu0
    %510 = vdwg.mxu0
    %vm511 = vcmask 130048
    %v512 = vsel %vm511, %v503, -inf
    %513 = vmax.xlane.f32.xlu0 %v512
    %v514 = vpop.xlane.xlu0 %513
    %v515 = vsel %vm511, %v508, -inf
    %516 = vmax.xlane.f32.xlu0 %v515
    %v517 = vpop.xlane.xlu0 %516
    %v518 = vsub.f32 %v503, %v514
    %v519 = vsub.f32 %v508, %v517
    %v520 = vmul.f32 %v518, 1.442695
    %v521 = vpow.pop %v520
    %v522 = vmul.f32 %v519, 1.442695
    %v523 = vpow.pop %v522
    %v524 = vsel %vm511, %v521, 0.0
    %525 = vadd.xlane.f32.xlu0 %v524
    %v526 = vpop.xlane.xlu0 %525
    %v527 = vsel %vm511, %v523, 0.0
    %528 = vadd.xlane.f32.xlu0 %v527
    %v529 = vpop.xlane.xlu0 %528
    %v530 = vrcp.pop %v526
    %v531 = vrcp.pop %v529
    %v532 = vmul.f32 %v521, %v530
    %v533 = vmul.f32 %v523, %v531
    %v535 = vsel %vm511, %v532, 0
    %v538 = vsel %vm511, %v533, 0
    %540 = vmatprep.subr.mxu0 0.0
    %541 = vmatpush1.msra.mxu0 %v415
    %542 = vmatprep.subr.mxu0 0.0
    %543 = vmatpush1.msra.mxu0 %v420
    %544 = vmatprep.subr.mxu0 0.0
    %545 = vmatpush1.msra.mxu0 0.0
    %546 = vmatprep.subr.mxu0 0.0
    %547 = vmatpush1.msra.mxu0 0.0
    %548 = vmatprep.subr.mxu0 0.0
    %549 = vmatpush1.msra.mxu0 0.0
    %550 = vmatprep.subr.mxu0 0.0
    %551 = vmatpush1.msra.mxu0 0.0
    %552 = vmatprep.subr.mxu0 0.0
    %553 = vmatpush1.msra.mxu0 0.0
    %554 = vmatprep.subr.mxu0 0.0
    %555 = vmatpush1.msra.mxu0 0.0
    %556 = vmatprep.subr.mxu0 0.0
    %557 = vmatpush1.msra.mxu0 0.0
    %558 = vmatprep.subr.mxu0 0.0
    %559 = vmatpush1.msra.mxu0 0.0
    %560 = vmatprep.subr.mxu0 0.0
    %561 = vmatpush1.msra.mxu0 0.0
    %562 = vmatprep.subr.mxu0 0.0
    %563 = vmatpush1.msra.mxu0 0.0
    %564 = vmatprep.subr.mxu0 0.0
    %565 = vmatpush1.msra.mxu0 0.0
    %566 = vmatprep.subr.mxu0 0.0
    %567 = vmatpush1.msra.mxu0 0.0
    %568 = vmatprep.subr.mxu0 0.0
    %569 = vmatpush1.msra.mxu0 0.0
    %570 = vmatprep.subr.mxu0 0.0
    %571 = vmatpush1.msra.mxu0 0.0
    %572 = vmatprep.subr.mxu0 0.0
    %573 = vmatpush1.msra.mxu0 0.0
    %574 = vmatprep.subr.mxu0 0.0
    %575 = vmatpush1.msra.mxu0 0.0
    %576 = vmatprep.subr.mxu0 0.0
    %577 = vmatpush1.msra.mxu0 0.0
    %578 = vmatprep.subr.mxu0 0.0
    %579 = vmatpush1.msra.mxu0 0.0
    %580 = vmatprep.subr.mxu0 0.0
    %581 = vmatpush1.msra.mxu0 0.0
    %582 = vmatprep.subr.mxu0 0.0
    %583 = vmatpush1.msra.mxu0 0.0
    %584 = vmatprep.subr.mxu0 0.0
    %585 = vmatpush1.msra.mxu0 0.0
    %586 = vmatprep.subr.mxu0 0.0
    %587 = vmatpush1.msra.mxu0 0.0
    %588 = vmatprep.subr.mxu0 0.0
    %589 = vmatpush1.msra.mxu0 0.0
    %590 = vmatprep.subr.mxu0 0.0
    %591 = vmatpush1.msra.mxu0 0.0
    %592 = vmatprep.subr.mxu0 0.0
    %593 = vmatpush1.msra.mxu0 0.0
    %594 = vmatprep.subr.mxu0 0.0
    %595 = vmatpush1.msra.mxu0 0.0
    %596 = vmatprep.subr.mxu0 0.0
    %597 = vmatpush1.msra.mxu0 0.0
    %598 = vmatprep.subr.mxu0 0.0
    %599 = vmatpush1.msra.mxu0 0.0
    %600 = vmatprep.subr.mxu0 0.0
    %601 = vmatpush1.msra.mxu0 0.0
    %602 = vmatprep.subr.mxu0 0.0
    %603 = vmatpush1.msra.mxu0 0.0
    %604 = vmatprep.mubr.f32.mxu0 0.0
    %605 = vmatmul.mubr.f32.gmra.mrb[0].mxu0 %v535
    %v606 = vpop.f32.mrb[0].mxu0
    %v607 = vadd.f32 0.0, %v606
    %v608 = vpop.f32.mrb[0].mxu0
    %609 = vmatprep.mubr.f32.mxu0 0.0
    %610 = vmatmul.mubr.f32.gmra.mrb[0].mxu0 %v538
    %v611 = vpop.f32.mrb[0].mxu0
    %v612 = vadd.f32 0.0, %v611
    %v613 = vpop.f32.mrb[0].mxu0
    %614 = vdwg.mxu0
    %615 = vrot.lane.b32.xlu0 %v257, 120
    %v616 = vpop.permute.xlu0 %615
    %617 = vrot.lane.b32.xlu0 %v262, 120
    %v618 = vpop.permute.xlu0 %617
    %619 = vrot.lane.b32.xlu0 %v336, 120
    %v620 = vpop.permute.xlu0 %619
    %621 = vrot.lane.b32.xlu0 %v341, 120
    %v622 = vpop.permute.xlu0 %621
    %v623 = vsel %vm423, %v616, 0
    %v625 = vsel %vm423, %v618, 0
    %v627 = vsel %vm423, %v620, 0
    %v629 = vsel %vm423, %v622, 0
    %631 = vmatprep.subr.mxu0 0.0
    %632 = vmatpush1.xpose.msra.mxu0 %v627
    %633 = vmatprep.subr.mxu0 0.0
    %634 = vmatpush1.xpose.msra.mxu0 %v629
    %635 = vmatprep.subr.mxu0 0.0
    %636 = vmatpush1.xpose.msra.mxu0 0.0
    %637 = vmatprep.subr.mxu0 0.0
    %638 = vmatpush1.xpose.msra.mxu0 0.0
    %639 = vmatprep.subr.mxu0 0.0
    %640 = vmatpush1.xpose.msra.mxu0 0.0
    %641 = vmatprep.subr.mxu0 0.0
    %642 = vmatpush1.xpose.msra.mxu0 0.0
    %643 = vmatprep.subr.mxu0 0.0
    %644 = vmatpush1.xpose.msra.mxu0 0.0
    %645 = vmatprep.subr.mxu0 0.0
    %646 = vmatpush1.xpose.msra.mxu0 0.0
    %647 = vmatprep.subr.mxu0 0.0
    %648 = vmatpush1.xpose.msra.mxu0 0.0
    %649 = vmatprep.subr.mxu0 0.0
    %650 = vmatpush1.xpose.msra.mxu0 0.0
    %651 = vmatprep.subr.mxu0 0.0
    %652 = vmatpush1.xpose.msra.mxu0 0.0
    %653 = vmatprep.subr.mxu0 0.0
    %654 = vmatpush1.xpose.msra.mxu0 0.0
    %655 = vmatprep.subr.mxu0 0.0
    %656 = vmatpush1.xpose.msra.mxu0 0.0
    %657 = vmatprep.subr.mxu0 0.0
    %658 = vmatpush1.xpose.msra.mxu0 0.0
    %659 = vmatprep.subr.mxu0 0.0
    %660 = vmatpush1.xpose.msra.mxu0 0.0
    %661 = vmatprep.subr.mxu0 0.0
    %662 = vmatpush1.xpose.msra.mxu0 0.0
    %663 = vmatprep.subr.mxu0 0.0
    %664 = vmatpush1.xpose.msra.mxu0 0.0
    %665 = vmatprep.subr.mxu0 0.0
    %666 = vmatpush1.xpose.msra.mxu0 0.0
    %667 = vmatprep.subr.mxu0 0.0
    %668 = vmatpush1.xpose.msra.mxu0 0.0
    %669 = vmatprep.subr.mxu0 0.0
    %670 = vmatpush1.xpose.msra.mxu0 0.0
    %671 = vmatprep.subr.mxu0 0.0
    %672 = vmatpush1.xpose.msra.mxu0 0.0
    %673 = vmatprep.subr.mxu0 0.0
    %674 = vmatpush1.xpose.msra.mxu0 0.0
    %675 = vmatprep.subr.mxu0 0.0
    %676 = vmatpush1.xpose.msra.mxu0 0.0
    %677 = vmatprep.subr.mxu0 0.0
    %678 = vmatpush1.xpose.msra.mxu0 0.0
    %679 = vmatprep.subr.mxu0 0.0
    %680 = vmatpush1.xpose.msra.mxu0 0.0
    %681 = vmatprep.subr.mxu0 0.0
    %682 = vmatpush1.xpose.msra.mxu0 0.0
    %683 = vmatprep.subr.mxu0 0.0
    %684 = vmatpush1.xpose.msra.mxu0 0.0
    %685 = vmatprep.subr.mxu0 0.0
    %686 = vmatpush1.xpose.msra.mxu0 0.0
    %687 = vmatprep.subr.mxu0 0.0
    %688 = vmatpush1.xpose.msra.mxu0 0.0
    %689 = vmatprep.subr.mxu0 0.0
    %690 = vmatpush1.xpose.msra.mxu0 0.0
    %691 = vmatprep.subr.mxu0 0.0
    %692 = vmatpush1.xpose.msra.mxu0 0.0
    %693 = vmatprep.subr.mxu0 0.0
    %694 = vmatpush1.xpose.msra.mxu0 0.0
    %695 = vmatprep.mubr.f32.mxu0 0.0
    %696 = vmatmul.mubr.f32.gmra.mrb[0].mxu0 %v623
    %v697 = vpop.f32.mrb[0].mxu0
    %v698 = vadd.f32 %v139, %v697
    %v699 = vpop.f32.mrb[0].mxu0
    %700 = vmatprep.mubr.f32.mxu0 0.0
    %701 = vmatmul.mubr.f32.gmra.mrb[0].mxu0 %v625
    %v702 = vpop.f32.mrb[0].mxu0
    %v703 = vadd.f32 %v140, %v702
    %v704 = vpop.f32.mrb[0].mxu0
    %705 = vdwg.mxu0
    %v706 = vsel %vm511, %v698, -inf
    %707 = vmax.xlane.f32.xlu0 %v706
    %v708 = vpop.xlane.xlu0 %707
    %v709 = vsel %vm511, %v703, -inf
    %710 = vmax.xlane.f32.xlu0 %v709
    %v711 = vpop.xlane.xlu0 %710
    %v712 = vsub.f32 %v698, %v708
    %v713 = vsub.f32 %v703, %v711
    %v714 = vmul.f32 %v712, 1.442695
    %v715 = vpow.pop %v714
    %v716 = vmul.f32 %v713, 1.442695
    %v717 = vpow.pop %v716
    %v718 = vsel %vm511, %v715, 0.0
    %719 = vadd.xlane.f32.xlu0 %v718
    %v720 = vpop.xlane.xlu0 %719
    %v721 = vsel %vm511, %v717, 0.0
    %722 = vadd.xlane.f32.xlu0 %v721
    %v723 = vpop.xlane.xlu0 %722
    %v724 = vrcp.pop %v720
    %v725 = vrcp.pop %v723
    %v726 = vmul.f32 %v715, %v724
    %v727 = vmul.f32 %v717, %v725
    %730 = vrot.lane.b32.xlu0 %v415, 120
    %v731 = vpop.permute.xlu0 %730
    %732 = vrot.lane.b32.xlu0 %v420, 120
    %v733 = vpop.permute.xlu0 %732
    %v737 = vsel %vm511, %v726, 0
    %v740 = vsel %vm511, %v727, 0
    %742 = vmatprep.subr.mxu0 0.0
    %743 = vmatpush1.msra.mxu0 %v731
    %744 = vmatprep.subr.mxu0 0.0
    %745 = vmatpush1.msra.mxu0 %v733
    %746 = vmatprep.subr.mxu0 0.0
    %747 = vmatpush1.msra.mxu0 0.0
    %748 = vmatprep.subr.mxu0 0.0
    %749 = vmatpush1.msra.mxu0 0.0
    %750 = vmatprep.subr.mxu0 0.0
    %751 = vmatpush1.msra.mxu0 0.0
    %752 = vmatprep.subr.mxu0 0.0
    %753 = vmatpush1.msra.mxu0 0.0
    %754 = vmatprep.subr.mxu0 0.0
    %755 = vmatpush1.msra.mxu0 0.0
    %756 = vmatprep.subr.mxu0 0.0
    %757 = vmatpush1.msra.mxu0 0.0
    %758 = vmatprep.subr.mxu0 0.0
    %759 = vmatpush1.msra.mxu0 0.0
    %760 = vmatprep.subr.mxu0 0.0
    %761 = vmatpush1.msra.mxu0 0.0
    %762 = vmatprep.subr.mxu0 0.0
    %763 = vmatpush1.msra.mxu0 0.0
    %764 = vmatprep.subr.mxu0 0.0
    %765 = vmatpush1.msra.mxu0 0.0
    %766 = vmatprep.subr.mxu0 0.0
    %767 = vmatpush1.msra.mxu0 0.0
    %768 = vmatprep.subr.mxu0 0.0
    %769 = vmatpush1.msra.mxu0 0.0
    %770 = vmatprep.subr.mxu0 0.0
    %771 = vmatpush1.msra.mxu0 0.0
    %772 = vmatprep.subr.mxu0 0.0
    %773 = vmatpush1.msra.mxu0 0.0
    %774 = vmatprep.subr.mxu0 0.0
    %775 = vmatpush1.msra.mxu0 0.0
    %776 = vmatprep.subr.mxu0 0.0
    %777 = vmatpush1.msra.mxu0 0.0
    %778 = vmatprep.subr.mxu0 0.0
    %779 = vmatpush1.msra.mxu0 0.0
    %780 = vmatprep.subr.mxu0 0.0
    %781 = vmatpush1.msra.mxu0 0.0
    %782 = vmatprep.subr.mxu0 0.0
    %783 = vmatpush1.msra.mxu0 0.0
    %784 = vmatprep.subr.mxu0 0.0
    %785 = vmatpush1.msra.mxu0 0.0
    %786 = vmatprep.subr.mxu0 0.0
    %787 = vmatpush1.msra.mxu0 0.0
    %788 = vmatprep.subr.mxu0 0.0
    %789 = vmatpush1.msra.mxu0 0.0
    %790 = vmatprep.subr.mxu0 0.0
    %791 = vmatpush1.msra.mxu0 0.0
    %792 = vmatprep.subr.mxu0 0.0
    %793 = vmatpush1.msra.mxu0 0.0
    %794 = vmatprep.subr.mxu0 0.0
    %795 = vmatpush1.msra.mxu0 0.0
    %796 = vmatprep.subr.mxu0 0.0
    %797 = vmatpush1.msra.mxu0 0.0
    %798 = vmatprep.subr.mxu0 0.0
    %799 = vmatpush1.msra.mxu0 0.0
    %800 = vmatprep.subr.mxu0 0.0
    %801 = vmatpush1.msra.mxu0 0.0
    %802 = vmatprep.subr.mxu0 0.0
    %803 = vmatpush1.msra.mxu0 0.0
    %804 = vmatprep.subr.mxu0 0.0
    %805 = vmatpush1.msra.mxu0 0.0
    %806 = vmatprep.mubr.f32.mxu0 0.0
    %807 = vmatmul.mubr.f32.gmra.mrb[0].mxu0 %v737
    %v808 = vpop.f32.mrb[0].mxu0
    %v809 = vadd.f32 0.0, %v808
    %v810 = vpop.f32.mrb[0].mxu0
    %811 = vmatprep.mubr.f32.mxu0 0.0
    %812 = vmatmul.mubr.f32.gmra.mrb[0].mxu0 %v740
    %v813 = vpop.f32.mrb[0].mxu0
    %v814 = vadd.f32 0.0, %v813
    %v815 = vpop.f32.mrb[0].mxu0
    %816 = vdwg.mxu0
    %v818 = vsel %vm423, %v809, 0
    %v821 = vsel %vm423, %v814, 0
    %823 = vmatprep.subr.mxu0 0.0
    %824 = vmatpush1.msra.mxu0 %v154
    %825 = vmatprep.subr.mxu0 0.0
    %826 = vmatpush1.msra.mxu0 0.0
    %827 = vmatprep.subr.mxu0 0.0
    %828 = vmatpush1.msra.mxu0 0.0
    %829 = vmatprep.subr.mxu0 0.0
    %830 = vmatpush1.msra.mxu0 0.0
    %831 = vmatprep.subr.mxu0 0.0
    %832 = vmatpush1.msra.mxu0 0.0
    %833 = vmatprep.subr.mxu0 0.0
    %834 = vmatpush1.msra.mxu0 0.0
    %835 = vmatprep.subr.mxu0 0.0
    %836 = vmatpush1.msra.mxu0 0.0
    %837 = vmatprep.subr.mxu0 0.0
    %838 = vmatpush1.msra.mxu0 0.0
    %839 = vmatprep.subr.mxu0 0.0
    %840 = vmatpush1.msra.mxu0 0.0
    %841 = vmatprep.subr.mxu0 0.0
    %842 = vmatpush1.msra.mxu0 0.0
    %843 = vmatprep.subr.mxu0 0.0
    %844 = vmatpush1.msra.mxu0 0.0
    %845 = vmatprep.subr.mxu0 0.0
    %846 = vmatpush1.msra.mxu0 0.0
    %847 = vmatprep.subr.mxu0 0.0
    %848 = vmatpush1.msra.mxu0 0.0
    %849 = vmatprep.subr.mxu0 0.0
    %850 = vmatpush1.msra.mxu0 0.0
    %851 = vmatprep.subr.mxu0 0.0
    %852 = vmatpush1.msra.mxu0 0.0
    %853 = vmatprep.subr.mxu0 0.0
    %854 = vmatpush1.msra.mxu0 0.0
    %855 = vmatprep.subr.mxu0 0.0
    %856 = vmatpush1.msra.mxu0 0.0
    %857 = vmatprep.subr.mxu0 0.0
    %858 = vmatpush1.msra.mxu0 0.0
    %859 = vmatprep.subr.mxu0 0.0
    %860 = vmatpush1.msra.mxu0 0.0
    %861 = vmatprep.subr.mxu0 0.0
    %862 = vmatpush1.msra.mxu0 0.0
    %863 = vmatprep.subr.mxu0 0.0
    %864 = vmatpush1.msra.mxu0 0.0
    %865 = vmatprep.subr.mxu0 0.0
    %866 = vmatpush1.msra.mxu0 0.0
    %867 = vmatprep.subr.mxu0 0.0
    %868 = vmatpush1.msra.mxu0 0.0
    %869 = vmatprep.subr.mxu0 0.0
    %870 = vmatpush1.msra.mxu0 0.0
    %871 = vmatprep.subr.mxu0 0.0
    %872 = vmatpush1.msra.mxu0 0.0
    %873 = vmatprep.subr.mxu0 0.0
    %874 = vmatpush1.msra.mxu0 0.0
    %875 = vmatprep.subr.mxu0 0.0
    %876 = vmatpush1.msra.mxu0 0.0
    %877 = vmatprep.subr.mxu0 0.0
    %878 = vmatpush1.msra.mxu0 0.0
    %879 = vmatprep.subr.mxu0 0.0
    %880 = vmatpush1.msra.mxu0 0.0
    %881 = vmatprep.subr.mxu0 0.0
    %882 = vmatpush1.msra.mxu0 0.0
    %883 = vmatprep.subr.mxu0 0.0
    %884 = vmatpush1.msra.mxu0 0.0
    %885 = vmatprep.subr.mxu0 0.0
    %886 = vmatpush1.msra.mxu0 0.0
    %887 = vmatprep.mubr.f32.mxu0 0.0
    %888 = vmatmul.mubr.f32.gmra.mrb[0].mxu0 %v818
    %v889 = vpop.f32.mrb[0].mxu0
    %v890 = vadd.f32 0.0, %v889
    %v891 = vpop.f32.mrb[0].mxu0
    %892 = vmatprep.mubr.f32.mxu0 0.0
    %893 = vmatmul.mubr.f32.gmra.mrb[0].mxu0 %v821
    %v894 = vpop.f32.mrb[0].mxu0
    %v895 = vadd.f32 0.0, %v894
    %v896 = vpop.f32.mrb[0].mxu0
    %897 = vdwg.mxu0
    %v899 = vsel %vm423, %v607, 0
    %v902 = vsel %vm423, %v612, 0
    %904 = vmatprep.subr.mxu0 0.0
    %905 = vmatpush1.msra.mxu0 %v153
    %906 = vmatprep.subr.mxu0 0.0
    %907 = vmatpush1.msra.mxu0 0.0
    %908 = vmatprep.subr.mxu0 0.0
    %909 = vmatpush1.msra.mxu0 0.0
    %910 = vmatprep.subr.mxu0 0.0
    %911 = vmatpush1.msra.mxu0 0.0
    %912 = vmatprep.subr.mxu0 0.0
    %913 = vmatpush1.msra.mxu0 0.0
    %914 = vmatprep.subr.mxu0 0.0
    %915 = vmatpush1.msra.mxu0 0.0
    %916 = vmatprep.subr.mxu0 0.0
    %917 = vmatpush1.msra.mxu0 0.0
    %918 = vmatprep.subr.mxu0 0.0
    %919 = vmatpush1.msra.mxu0 0.0
    %920 = vmatprep.subr.mxu0 0.0
    %921 = vmatpush1.msra.mxu0 0.0
    %922 = vmatprep.subr.mxu0 0.0
    %923 = vmatpush1.msra.mxu0 0.0
    %924 = vmatprep.subr.mxu0 0.0
    %925 = vmatpush1.msra.mxu0 0.0
    %926 = vmatprep.subr.mxu0 0.0
    %927 = vmatpush1.msra.mxu0 0.0
    %928 = vmatprep.subr.mxu0 0.0
    %929 = vmatpush1.msra.mxu0 0.0
    %930 = vmatprep.subr.mxu0 0.0
    %931 = vmatpush1.msra.mxu0 0.0
    %932 = vmatprep.subr.mxu0 0.0
    %933 = vmatpush1.msra.mxu0 0.0
    %934 = vmatprep.subr.mxu0 0.0
    %935 = vmatpush1.msra.mxu0 0.0
    %936 = vmatprep.subr.mxu0 0.0
    %937 = vmatpush1.msra.mxu0 0.0
    %938 = vmatprep.subr.mxu0 0.0
    %939 = vmatpush1.msra.mxu0 0.0
    %940 = vmatprep.subr.mxu0 0.0
    %941 = vmatpush1.msra.mxu0 0.0
    %942 = vmatprep.subr.mxu0 0.0
    %943 = vmatpush1.msra.mxu0 0.0
    %944 = vmatprep.subr.mxu0 0.0
    %945 = vmatpush1.msra.mxu0 0.0
    %946 = vmatprep.subr.mxu0 0.0
    %947 = vmatpush1.msra.mxu0 0.0
    %948 = vmatprep.subr.mxu0 0.0
    %949 = vmatpush1.msra.mxu0 0.0
    %950 = vmatprep.subr.mxu0 0.0
    %951 = vmatpush1.msra.mxu0 0.0
    %952 = vmatprep.subr.mxu0 0.0
    %953 = vmatpush1.msra.mxu0 0.0
    %954 = vmatprep.subr.mxu0 0.0
    %955 = vmatpush1.msra.mxu0 0.0
    %956 = vmatprep.subr.mxu0 0.0
    %957 = vmatpush1.msra.mxu0 0.0
    %958 = vmatprep.subr.mxu0 0.0
    %959 = vmatpush1.msra.mxu0 0.0
    %960 = vmatprep.subr.mxu0 0.0
    %961 = vmatpush1.msra.mxu0 0.0
    %962 = vmatprep.subr.mxu0 0.0
    %963 = vmatpush1.msra.mxu0 0.0
    %964 = vmatprep.subr.mxu0 0.0
    %965 = vmatpush1.msra.mxu0 0.0
    %966 = vmatprep.subr.mxu0 0.0
    %967 = vmatpush1.msra.mxu0 0.0
    %968 = vmatprep.mubr.f32.mxu0 0.0
    %969 = vmatmul.mubr.f32.gmra.mrb[0].mxu0 %v899
    %v970 = vpop.f32.mrb[0].mxu0
    %v971 = vadd.f32 %v890, %v970
    %v972 = vpop.f32.mrb[0].mxu0
    %973 = vmatprep.mubr.f32.mxu0 0.0
    %974 = vmatmul.mubr.f32.gmra.mrb[0].mxu0 %v902
    %v975 = vpop.f32.mrb[0].mxu0
    %v976 = vadd.f32 %v895, %v975
    %v977 = vpop.f32.mrb[0].mxu0
    %978 = vdwg.mxu0
    %979 = vrot.lane.b32.xlu0 %v257, 112
    %v980 = vpop.permute.xlu0 %979
    %981 = vrot.lane.b32.xlu0 %v262, 112
    %v982 = vpop.permute.xlu0 %981
    %983 = vrot.lane.b32.xlu0 %v336, 112
    %v984 = vpop.permute.xlu0 %983
    %985 = vrot.lane.b32.xlu0 %v341, 112
    %v986 = vpop.permute.xlu0 %985
    %v987 = vsel %vm423, %v980, 0
    %v989 = vsel %vm423, %v982, 0
    %v991 = vsel %vm423, %v984, 0
    %v993 = vsel %vm423, %v986, 0
    %995 = vmatprep.subr.mxu0 0.0
    %996 = vmatpush1.xpose.msra.mxu0 %v991
    %997 = vmatprep.subr.mxu0 0.0
    %998 = vmatpush1.xpose.msra.mxu0 %v993
    %999 = vmatprep.subr.mxu0 0.0
    %1000 = vmatpush1.xpose.msra.mxu0 0.0
    %1001 = vmatprep.subr.mxu0 0.0
    %1002 = vmatpush1.xpose.msra.mxu0 0.0
    %1003 = vmatprep.subr.mxu0 0.0
    %1004 = vmatpush1.xpose.msra.mxu0 0.0
    %1005 = vmatprep.subr.mxu0 0.0
    %1006 = vmatpush1.xpose.msra.mxu0 0.0
    %1007 = vmatprep.subr.mxu0 0.0
    %1008 = vmatpush1.xpose.msra.mxu0 0.0
    %1009 = vmatprep.subr.mxu0 0.0
    %1010 = vmatpush1.xpose.msra.mxu0 0.0
    %1011 = vmatprep.subr.mxu0 0.0
    %1012 = vmatpush1.xpose.msra.mxu0 0.0
    %1013 = vmatprep.subr.mxu0 0.0
    %1014 = vmatpush1.xpose.msra.mxu0 0.0
    %1015 = vmatprep.subr.mxu0 0.0
    %1016 = vmatpush1.xpose.msra.mxu0 0.0
    %1017 = vmatprep.subr.mxu0 0.0
    %1018 = vmatpush1.xpose.msra.mxu0 0.0
    %1019 = vmatprep.subr.mxu0 0.0
    %1020 = vmatpush1.xpose.msra.mxu0 0.0
    %1021 = vmatprep.subr.mxu0 0.0
    %1022 = vmatpush1.xpose.msra.mxu0 0.0
    %1023 = vmatprep.subr.mxu0 0.0
    %1024 = vmatpush1.xpose.msra.mxu0 0.0
    %1025 = vmatprep.subr.mxu0 0.0
    %1026 = vmatpush1.xpose.msra.mxu0 0.0
    %1027 = vmatprep.subr.mxu0 0.0
    %1028 = vmatpush1.xpose.msra.mxu0 0.0
    %1029 = vmatprep.subr.mxu0 0.0
    %1030 = vmatpush1.xpose.msra.mxu0 0.0
    %1031 = vmatprep.subr.mxu0 0.0
    %1032 = vmatpush1.xpose.msra.mxu0 0.0
    %1033 = vmatprep.subr.mxu0 0.0
    %1034 = vmatpush1.xpose.msra.mxu0 0.0
    %1035 = vmatprep.subr.mxu0 0.0
    %1036 = vmatpush1.xpose.msra.mxu0 0.0
    %1037 = vmatprep.subr.mxu0 0.0
    %1038 = vmatpush1.xpose.msra.mxu0 0.0
    %1039 = vmatprep.subr.mxu0 0.0
    %1040 = vmatpush1.xpose.msra.mxu0 0.0
    %1041 = vmatprep.subr.mxu0 0.0
    %1042 = vmatpush1.xpose.msra.mxu0 0.0
    %1043 = vmatprep.subr.mxu0 0.0
    %1044 = vmatpush1.xpose.msra.mxu0 0.0
    %1045 = vmatprep.subr.mxu0 0.0
    %1046 = vmatpush1.xpose.msra.mxu0 0.0
    %1047 = vmatprep.subr.mxu0 0.0
    %1048 = vmatpush1.xpose.msra.mxu0 0.0
    %1049 = vmatprep.subr.mxu0 0.0
    %1050 = vmatpush1.xpose.msra.mxu0 0.0
    %1051 = vmatprep.subr.mxu0 0.0
    %1052 = vmatpush1.xpose.msra.mxu0 0.0
    %1053 = vmatprep.subr.mxu0 0.0
    %1054 = vmatpush1.xpose.msra.mxu0 0.0
    %1055 = vmatprep.subr.mxu0 0.0
    %1056 = vmatpush1.xpose.msra.mxu0 0.0
    %1057 = vmatprep.subr.mxu0 0.0
    %1058 = vmatpush1.xpose.msra.mxu0 0.0
    %1059 = vmatprep.mubr.f32.mxu0 0.0
    %1060 = vmatmul.mubr.f32.gmra.mrb[0].mxu0 %v987
    %v1061 = vpop.f32.mrb[0].mxu0
    %v1062 = vadd.f32 %v139, %v1061
    %v1063 = vpop.f32.mrb[0].mxu0
    %1064 = vmatprep.mubr.f32.mxu0 0.0
    %1065 = vmatmul.mubr.f32.gmra.mrb[0].mxu0 %v989
    %v1066 = vpop.f32.mrb[0].mxu0
    %v1067 = vadd.f32 %v140, %v1066
    %v1068 = vpop.f32.mrb[0].mxu0
    %1069 = vdwg.mxu0
    %v1070 = vsel %vm511, %v1062, -inf
    %1071 = vmax.xlane.f32.xlu0 %v1070
    %v1072 = vpop.xlane.xlu0 %1071
    %v1073 = vsel %vm511, %v1067, -inf
    %1074 = vmax.xlane.f32.xlu0 %v1073
    %v1075 = vpop.xlane.xlu0 %1074
    %v1076 = vsub.f32 %v1062, %v1072
    %v1077 = vsub.f32 %v1067, %v1075
    %v1078 = vmul.f32 %v1076, 1.442695
    %v1079 = vpow.pop %v1078
    %v1080 = vmul.f32 %v1077, 1.442695
    %v1081 = vpow.pop %v1080
    %v1082 = vsel %vm511, %v1079, 0.0
    %1083 = vadd.xlane.f32.xlu0 %v1082
    %v1084 = vpop.xlane.xlu0 %1083
    %v1085 = vsel %vm511, %v1081, 0.0
    %1086 = vadd.xlane.f32.xlu0 %v1085
    %v1087 = vpop.xlane.xlu0 %1086
    %v1088 = vrcp.pop %v1084
    %v1089 = vrcp.pop %v1087
    %v1090 = vmul.f32 %v1079, %v1088
    %v1091 = vmul.f32 %v1081, %v1089
    %1092 = vrot.lane.b32.xlu0 %v415, 112
    %v1093 = vpop.permute.xlu0 %1092
    %1094 = vrot.lane.b32.xlu0 %v420, 112
    %v1095 = vpop.permute.xlu0 %1094
    %v1099 = vsel %vm511, %v1090, 0
    %v1102 = vsel %vm511, %v1091, 0
    %1104 = vmatprep.subr.mxu0 0.0
    %1105 = vmatpush1.msra.mxu0 %v1093
    %1106 = vmatprep.subr.mxu0 0.0
    %1107 = vmatpush1.msra.mxu0 %v1095
    %1108 = vmatprep.subr.mxu0 0.0
    %1109 = vmatpush1.msra.mxu0 0.0
    %1110 = vmatprep.subr.mxu0 0.0
    %1111 = vmatpush1.msra.mxu0 0.0
    %1112 = vmatprep.subr.mxu0 0.0
    %1113 = vmatpush1.msra.mxu0 0.0
    %1114 = vmatprep.subr.mxu0 0.0
    %1115 = vmatpush1.msra.mxu0 0.0
    %1116 = vmatprep.subr.mxu0 0.0
    %1117 = vmatpush1.msra.mxu0 0.0
    %1118 = vmatprep.subr.mxu0 0.0
    %1119 = vmatpush1.msra.mxu0 0.0
    %1120 = vmatprep.subr.mxu0 0.0
    %1121 = vmatpush1.msra.mxu0 0.0
    %1122 = vmatprep.subr.mxu0 0.0
    %1123 = vmatpush1.msra.mxu0 0.0
    %1124 = vmatprep.subr.mxu0 0.0
    %1125 = vmatpush1.msra.mxu0 0.0
    %1126 = vmatprep.subr.mxu0 0.0
    %1127 = vmatpush1.msra.mxu0 0.0
    %1128 = vmatprep.subr.mxu0 0.0
    %1129 = vmatpush1.msra.mxu0 0.0
    %1130 = vmatprep.subr.mxu0 0.0
    %1131 = vmatpush1.msra.mxu0 0.0
    %1132 = vmatprep.subr.mxu0 0.0
    %1133 = vmatpush1.msra.mxu0 0.0
    %1134 = vmatprep.subr.mxu0 0.0
    %1135 = vmatpush1.msra.mxu0 0.0
    %1136 = vmatprep.subr.mxu0 0.0
    %1137 = vmatpush1.msra.mxu0 0.0
    %1138 = vmatprep.subr.mxu0 0.0
    %1139 = vmatpush1.msra.mxu0 0.0
    %1140 = vmatprep.subr.mxu0 0.0
    %1141 = vmatpush1.msra.mxu0 0.0
    %1142 = vmatprep.subr.mxu0 0.0
    %1143 = vmatpush1.msra.mxu0 0.0
    %1144 = vmatprep.subr.mxu0 0.0
    %1145 = vmatpush1.msra.mxu0 0.0
    %1146 = vmatprep.subr.mxu0 0.0
    %1147 = vmatpush1.msra.mxu0 0.0
    %1148 = vmatprep.subr.mxu0 0.0
    %1149 = vmatpush1.msra.mxu0 0.0
    %1150 = vmatprep.subr.mxu0 0.0
    %1151 = vmatpush1.msra.mxu0 0.0
    %1152 = vmatprep.subr.mxu0 0.0
    %1153 = vmatpush1.msra.mxu0 0.0
    %1154 = vmatprep.subr.mxu0 0.0
    %1155 = vmatpush1.msra.mxu0 0.0
    %1156 = vmatprep.subr.mxu0 0.0
    %1157 = vmatpush1.msra.mxu0 0.0
    %1158 = vmatprep.subr.mxu0 0.0
    %1159 = vmatpush1.msra.mxu0 0.0
    %1160 = vmatprep.subr.mxu0 0.0
    %1161 = vmatpush1.msra.mxu0 0.0
    %1162 = vmatprep.subr.mxu0 0.0
    %1163 = vmatpush1.msra.mxu0 0.0
    %1164 = vmatprep.subr.mxu0 0.0
    %1165 = vmatpush1.msra.mxu0 0.0
    %1166 = vmatprep.subr.mxu0 0.0
    %1167 = vmatpush1.msra.mxu0 0.0
    %1168 = vmatprep.mubr.f32.mxu0 0.0
    %1169 = vmatmul.mubr.f32.gmra.mrb[0].mxu0 %v1099
    %v1170 = vpop.f32.mrb[0].mxu0
    %v1171 = vadd.f32 0.0, %v1170
    %v1172 = vpop.f32.mrb[0].mxu0
    %1173 = vmatprep.mubr.f32.mxu0 0.0
    %1174 = vmatmul.mubr.f32.gmra.mrb[0].mxu0 %v1102
    %v1175 = vpop.f32.mrb[0].mxu0
    %v1176 = vadd.f32 0.0, %v1175
    %v1177 = vpop.f32.mrb[0].mxu0
    %1178 = vdwg.mxu0
    %v1180 = vsel %vm423, %v1171, 0
    %v1183 = vsel %vm423, %v1176, 0
    %1185 = vmatprep.subr.mxu0 0.0
    %1186 = vmatpush1.msra.mxu0 %v155
    %1187 = vmatprep.subr.mxu0 0.0
    %1188 = vmatpush1.msra.mxu0 0.0
    %1189 = vmatprep.subr.mxu0 0.0
    %1190 = vmatpush1.msra.mxu0 0.0
    %1191 = vmatprep.subr.mxu0 0.0
    %1192 = vmatpush1.msra.mxu0 0.0
    %1193 = vmatprep.subr.mxu0 0.0
    %1194 = vmatpush1.msra.mxu0 0.0
    %1195 = vmatprep.subr.mxu0 0.0
    %1196 = vmatpush1.msra.mxu0 0.0
    %1197 = vmatprep.subr.mxu0 0.0
    %1198 = vmatpush1.msra.mxu0 0.0
    %1199 = vmatprep.subr.mxu0 0.0
    %1200 = vmatpush1.msra.mxu0 0.0
    %1201 = vmatprep.subr.mxu0 0.0
    %1202 = vmatpush1.msra.mxu0 0.0
    %1203 = vmatprep.subr.mxu0 0.0
    %1204 = vmatpush1.msra.mxu0 0.0
    %1205 = vmatprep.subr.mxu0 0.0
    %1206 = vmatpush1.msra.mxu0 0.0
    %1207 = vmatprep.subr.mxu0 0.0
    %1208 = vmatpush1.msra.mxu0 0.0
    %1209 = vmatprep.subr.mxu0 0.0
    %1210 = vmatpush1.msra.mxu0 0.0
    %1211 = vmatprep.subr.mxu0 0.0
    %1212 = vmatpush1.msra.mxu0 0.0
    %1213 = vmatprep.subr.mxu0 0.0
    %1214 = vmatpush1.msra.mxu0 0.0
    %1215 = vmatprep.subr.mxu0 0.0
    %1216 = vmatpush1.msra.mxu0 0.0
    %1217 = vmatprep.subr.mxu0 0.0
    %1218 = vmatpush1.msra.mxu0 0.0
    %1219 = vmatprep.subr.mxu0 0.0
    %1220 = vmatpush1.msra.mxu0 0.0
    %1221 = vmatprep.subr.mxu0 0.0
    %1222 = vmatpush1.msra.mxu0 0.0
    %1223 = vmatprep.subr.mxu0 0.0
    %1224 = vmatpush1.msra.mxu0 0.0
    %1225 = vmatprep.subr.mxu0 0.0
    %1226 = vmatpush1.msra.mxu0 0.0
    %1227 = vmatprep.subr.mxu0 0.0
    %1228 = vmatpush1.msra.mxu0 0.0
    %1229 = vmatprep.subr.mxu0 0.0
    %1230 = vmatpush1.msra.mxu0 0.0
    %1231 = vmatprep.subr.mxu0 0.0
    %1232 = vmatpush1.msra.mxu0 0.0
    %1233 = vmatprep.subr.mxu0 0.0
    %1234 = vmatpush1.msra.mxu0 0.0
    %1235 = vmatprep.subr.mxu0 0.0
    %1236 = vmatpush1.msra.mxu0 0.0
    %1237 = vmatprep.subr.mxu0 0.0
    %1238 = vmatpush1.msra.mxu0 0.0
    %1239 = vmatprep.subr.mxu0 0.0
    %1240 = vmatpush1.msra.mxu0 0.0
    %1241 = vmatprep.subr.mxu0 0.0
    %1242 = vmatpush1.msra.mxu0 0.0
    %1243 = vmatprep.subr.mxu0 0.0
    %1244 = vmatpush1.msra.mxu0 0.0
    %1245 = vmatprep.subr.mxu0 0.0
    %1246 = vmatpush1.msra.mxu0 0.0
    %1247 = vmatprep.subr.mxu0 0.0
    %1248 = vmatpush1.msra.mxu0 0.0
    %1249 = vmatprep.mubr.f32.mxu0 0.0
    %1250 = vmatmul.mubr.f32.gmra.mrb[0].mxu0 %v1180
    %v1251 = vpop.f32.mrb[0].mxu0
    %v1252 = vadd.f32 0.0, %v1251
    %v1253 = vpop.f32.mrb[0].mxu0
    %1254 = vmatprep.mubr.f32.mxu0 0.0
    %1255 = vmatmul.mubr.f32.gmra.mrb[0].mxu0 %v1183
    %v1256 = vpop.f32.mrb[0].mxu0
    %v1257 = vadd.f32 0.0, %v1256
    %v1258 = vpop.f32.mrb[0].mxu0
    %1259 = vdwg.mxu0
    %v1260 = vadd.f32 %v971, %v1252
    %v1261 = vadd.f32 %v976, %v1257
    %1262 = vrot.lane.b32.xlu0 %v257, 104
    %v1263 = vpop.permute.xlu0 %1262
    %1264 = vrot.lane.b32.xlu0 %v262, 104
    %v1265 = vpop.permute.xlu0 %1264
    %1266 = vrot.lane.b32.xlu0 %v336, 104
    %v1267 = vpop.permute.xlu0 %1266
    %1268 = vrot.lane.b32.xlu0 %v341, 104
    %v1269 = vpop.permute.xlu0 %1268
    %v1270 = vsel %vm423, %v1263, 0
    %v1272 = vsel %vm423, %v1265, 0
    %v1274 = vsel %vm423, %v1267, 0
    %v1276 = vsel %vm423, %v1269, 0
    %1278 = vmatprep.subr.mxu0 0.0
    %1279 = vmatpush1.xpose.msra.mxu0 %v1274
    %1280 = vmatprep.subr.mxu0 0.0
    %1281 = vmatpush1.xpose.msra.mxu0 %v1276
    %1282 = vmatprep.subr.mxu0 0.0
    %1283 = vmatpush1.xpose.msra.mxu0 0.0
    %1284 = vmatprep.subr.mxu0 0.0
    %1285 = vmatpush1.xpose.msra.mxu0 0.0
    %1286 = vmatprep.subr.mxu0 0.0
    %1287 = vmatpush1.xpose.msra.mxu0 0.0
    %1288 = vmatprep.subr.mxu0 0.0
    %1289 = vmatpush1.xpose.msra.mxu0 0.0
    %1290 = vmatprep.subr.mxu0 0.0
    %1291 = vmatpush1.xpose.msra.mxu0 0.0
    %1292 = vmatprep.subr.mxu0 0.0
    %1293 = vmatpush1.xpose.msra.mxu0 0.0
    %1294 = vmatprep.subr.mxu0 0.0
    %1295 = vmatpush1.xpose.msra.mxu0 0.0
    %1296 = vmatprep.subr.mxu0 0.0
    %1297 = vmatpush1.xpose.msra.mxu0 0.0
    %1298 = vmatprep.subr.mxu0 0.0
    %1299 = vmatpush1.xpose.msra.mxu0 0.0
    %1300 = vmatprep.subr.mxu0 0.0
    %1301 = vmatpush1.xpose.msra.mxu0 0.0
    %1302 = vmatprep.subr.mxu0 0.0
    %1303 = vmatpush1.xpose.msra.mxu0 0.0
    %1304 = vmatprep.subr.mxu0 0.0
    %1305 = vmatpush1.xpose.msra.mxu0 0.0
    %1306 = vmatprep.subr.mxu0 0.0
    %1307 = vmatpush1.xpose.msra.mxu0 0.0
    %1308 = vmatprep.subr.mxu0 0.0
    %1309 = vmatpush1.xpose.msra.mxu0 0.0
    %1310 = vmatprep.subr.mxu0 0.0
    %1311 = vmatpush1.xpose.msra.mxu0 0.0
    %1312 = vmatprep.subr.mxu0 0.0
    %1313 = vmatpush1.xpose.msra.mxu0 0.0
    %1314 = vmatprep.subr.mxu0 0.0
    %1315 = vmatpush1.xpose.msra.mxu0 0.0
    %1316 = vmatprep.subr.mxu0 0.0
    %1317 = vmatpush1.xpose.msra.mxu0 0.0
    %1318 = vmatprep.subr.mxu0 0.0
    %1319 = vmatpush1.xpose.msra.mxu0 0.0
    %1320 = vmatprep.subr.mxu0 0.0
    %1321 = vmatpush1.xpose.msra.mxu0 0.0
    %1322 = vmatprep.subr.mxu0 0.0
    %1323 = vmatpush1.xpose.msra.mxu0 0.0
    %1324 = vmatprep.subr.mxu0 0.0
    %1325 = vmatpush1.xpose.msra.mxu0 0.0
    %1326 = vmatprep.subr.mxu0 0.0
    %1327 = vmatpush1.xpose.msra.mxu0 0.0
    %1328 = vmatprep.subr.mxu0 0.0
    %1329 = vmatpush1.xpose.msra.mxu0 0.0
    %1330 = vmatprep.subr.mxu0 0.0
    %1331 = vmatpush1.xpose.msra.mxu0 0.0
    %1332 = vmatprep.subr.mxu0 0.0
    %1333 = vmatpush1.xpose.msra.mxu0 0.0
    %1334 = vmatprep.subr.mxu0 0.0
    %1335 = vmatpush1.xpose.msra.mxu0 0.0
    %1336 = vmatprep.subr.mxu0 0.0
    %1337 = vmatpush1.xpose.msra.mxu0 0.0
    %1338 = vmatprep.subr.mxu0 0.0
    %1339 = vmatpush1.xpose.msra.mxu0 0.0
    %1340 = vmatprep.subr.mxu0 0.0
    %1341 = vmatpush1.xpose.msra.mxu0 0.0
    %1342 = vmatprep.mubr.f32.mxu0 0.0
    %1343 = vmatmul.mubr.f32.gmra.mrb[0].mxu0 %v1270
    %v1344 = vpop.f32.mrb[0].mxu0
    %v1345 = vadd.f32 %v139, %v1344
    %v1346 = vpop.f32.mrb[0].mxu0
    %1347 = vmatprep.mubr.f32.mxu0 0.0
    %1348 = vmatmul.mubr.f32.gmra.mrb[0].mxu0 %v1272
    %v1349 = vpop.f32.mrb[0].mxu0
    %v1350 = vadd.f32 %v140, %v1349
    %v1351 = vpop.f32.mrb[0].mxu0
    %1352 = vdwg.mxu0
    %v1353 = vsel %vm511, %v1345, -inf
    %1354 = vmax.xlane.f32.xlu0 %v1353
    %v1355 = vpop.xlane.xlu0 %1354
    %v1356 = vsel %vm511, %v1350, -inf
    %1357 = vmax.xlane.f32.xlu0 %v1356
    %v1358 = vpop.xlane.xlu0 %1357
    %v1359 = vsub.f32 %v1345, %v1355
    %v1360 = vsub.f32 %v1350, %v1358
    %v1361 = vmul.f32 %v1359, 1.442695
    %v1362 = vpow.pop %v1361
    %v1363 = vmul.f32 %v1360, 1.442695
    %v1364 = vpow.pop %v1363
    %v1365 = vsel %vm511, %v1362, 0.0
    %1366 = vadd.xlane.f32.xlu0 %v1365
    %v1367 = vpop.xlane.xlu0 %1366
    %v1368 = vsel %vm511, %v1364, 0.0
    %1369 = vadd.xlane.f32.xlu0 %v1368
    %v1370 = vpop.xlane.xlu0 %1369
    %v1371 = vrcp.pop %v1367
    %v1372 = vrcp.pop %v1370
    %v1373 = vmul.f32 %v1362, %v1371
    %v1374 = vmul.f32 %v1364, %v1372
    %1375 = vrot.lane.b32.xlu0 %v415, 104
    %v1376 = vpop.permute.xlu0 %1375
    %1377 = vrot.lane.b32.xlu0 %v420, 104
    %v1378 = vpop.permute.xlu0 %1377
    %v1382 = vsel %vm511, %v1373, 0
    %v1385 = vsel %vm511, %v1374, 0
    %1387 = vmatprep.subr.mxu0 0.0
    %1388 = vmatpush1.msra.mxu0 %v1376
    %1389 = vmatprep.subr.mxu0 0.0
    %1390 = vmatpush1.msra.mxu0 %v1378
    %1391 = vmatprep.subr.mxu0 0.0
    %1392 = vmatpush1.msra.mxu0 0.0
    %1393 = vmatprep.subr.mxu0 0.0
    %1394 = vmatpush1.msra.mxu0 0.0
    %1395 = vmatprep.subr.mxu0 0.0
    %1396 = vmatpush1.msra.mxu0 0.0
    %1397 = vmatprep.subr.mxu0 0.0
    %1398 = vmatpush1.msra.mxu0 0.0
    %1399 = vmatprep.subr.mxu0 0.0
    %1400 = vmatpush1.msra.mxu0 0.0
    %1401 = vmatprep.subr.mxu0 0.0
    %1402 = vmatpush1.msra.mxu0 0.0
    %1403 = vmatprep.subr.mxu0 0.0
    %1404 = vmatpush1.msra.mxu0 0.0
    %1405 = vmatprep.subr.mxu0 0.0
    %1406 = vmatpush1.msra.mxu0 0.0
    %1407 = vmatprep.subr.mxu0 0.0
    %1408 = vmatpush1.msra.mxu0 0.0
    %1409 = vmatprep.subr.mxu0 0.0
    %1410 = vmatpush1.msra.mxu0 0.0
    %1411 = vmatprep.subr.mxu0 0.0
    %1412 = vmatpush1.msra.mxu0 0.0
    %1413 = vmatprep.subr.mxu0 0.0
    %1414 = vmatpush1.msra.mxu0 0.0
    %1415 = vmatprep.subr.mxu0 0.0
    %1416 = vmatpush1.msra.mxu0 0.0
    %1417 = vmatprep.subr.mxu0 0.0
    %1418 = vmatpush1.msra.mxu0 0.0
    %1419 = vmatprep.subr.mxu0 0.0
    %1420 = vmatpush1.msra.mxu0 0.0
    %1421 = vmatprep.subr.mxu0 0.0
    %1422 = vmatpush1.msra.mxu0 0.0
    %1423 = vmatprep.subr.mxu0 0.0
    %1424 = vmatpush1.msra.mxu0 0.0
    %1425 = vmatprep.subr.mxu0 0.0
    %1426 = vmatpush1.msra.mxu0 0.0
    %1427 = vmatprep.subr.mxu0 0.0
    %1428 = vmatpush1.msra.mxu0 0.0
    %1429 = vmatprep.subr.mxu0 0.0
    %1430 = vmatpush1.msra.mxu0 0.0
    %1431 = vmatprep.subr.mxu0 0.0
    %1432 = vmatpush1.msra.mxu0 0.0
    %1433 = vmatprep.subr.mxu0 0.0
    %1434 = vmatpush1.msra.mxu0 0.0
    %1435 = vmatprep.subr.mxu0 0.0
    %1436 = vmatpush1.msra.mxu0 0.0
    %1437 = vmatprep.subr.mxu0 0.0
    %1438 = vmatpush1.msra.mxu0 0.0
    %1439 = vmatprep.subr.mxu0 0.0
    %1440 = vmatpush1.msra.mxu0 0.0
    %1441 = vmatprep.subr.mxu0 0.0
    %1442 = vmatpush1.msra.mxu0 0.0
    %1443 = vmatprep.subr.mxu0 0.0
    %1444 = vmatpush1.msra.mxu0 0.0
    %1445 = vmatprep.subr.mxu0 0.0
    %1446 = vmatpush1.msra.mxu0 0.0
    %1447 = vmatprep.subr.mxu0 0.0
    %1448 = vmatpush1.msra.mxu0 0.0
    %1449 = vmatprep.subr.mxu0 0.0
    %1450 = vmatpush1.msra.mxu0 0.0
    %1451 = vmatprep.mubr.f32.mxu0 0.0
    %1452 = vmatmul.mubr.f32.gmra.mrb[0].mxu0 %v1382
    %v1453 = vpop.f32.mrb[0].mxu0
    %v1454 = vadd.f32 0.0, %v1453
    %v1455 = vpop.f32.mrb[0].mxu0
    %1456 = vmatprep.mubr.f32.mxu0 0.0
    %1457 = vmatmul.mubr.f32.gmra.mrb[0].mxu0 %v1385
    %v1458 = vpop.f32.mrb[0].mxu0
    %v1459 = vadd.f32 0.0, %v1458
    %v1460 = vpop.f32.mrb[0].mxu0
    %1461 = vdwg.mxu0
    %v1463 = vsel %vm423, %v1454, 0
    %v1466 = vsel %vm423, %v1459, 0
    %1468 = vmatprep.subr.mxu0 0.0
    %1469 = vmatpush1.msra.mxu0 %v156
    %1470 = vmatprep.subr.mxu0 0.0
    %1471 = vmatpush1.msra.mxu0 0.0
    %1472 = vmatprep.subr.mxu0 0.0
    %1473 = vmatpush1.msra.mxu0 0.0
    %1474 = vmatprep.subr.mxu0 0.0
    %1475 = vmatpush1.msra.mxu0 0.0
    %1476 = vmatprep.subr.mxu0 0.0
    %1477 = vmatpush1.msra.mxu0 0.0
    %1478 = vmatprep.subr.mxu0 0.0
    %1479 = vmatpush1.msra.mxu0 0.0
    %1480 = vmatprep.subr.mxu0 0.0
    %1481 = vmatpush1.msra.mxu0 0.0
    %1482 = vmatprep.subr.mxu0 0.0
    %1483 = vmatpush1.msra.mxu0 0.0
    %1484 = vmatprep.subr.mxu0 0.0
    %1485 = vmatpush1.msra.mxu0 0.0
    %1486 = vmatprep.subr.mxu0 0.0
    %1487 = vmatpush1.msra.mxu0 0.0
    %1488 = vmatprep.subr.mxu0 0.0
    %1489 = vmatpush1.msra.mxu0 0.0
    %1490 = vmatprep.subr.mxu0 0.0
    %1491 = vmatpush1.msra.mxu0 0.0
    %1492 = vmatprep.subr.mxu0 0.0
    %1493 = vmatpush1.msra.mxu0 0.0
    %1494 = vmatprep.subr.mxu0 0.0
    %1495 = vmatpush1.msra.mxu0 0.0
    %1496 = vmatprep.subr.mxu0 0.0
    %1497 = vmatpush1.msra.mxu0 0.0
    %1498 = vmatprep.subr.mxu0 0.0
    %1499 = vmatpush1.msra.mxu0 0.0
    %1500 = vmatprep.subr.mxu0 0.0
    %1501 = vmatpush1.msra.mxu0 0.0
    %1502 = vmatprep.subr.mxu0 0.0
    %1503 = vmatpush1.msra.mxu0 0.0
    %1504 = vmatprep.subr.mxu0 0.0
    %1505 = vmatpush1.msra.mxu0 0.0
    %1506 = vmatprep.subr.mxu0 0.0
    %1507 = vmatpush1.msra.mxu0 0.0
    %1508 = vmatprep.subr.mxu0 0.0
    %1509 = vmatpush1.msra.mxu0 0.0
    %1510 = vmatprep.subr.mxu0 0.0
    %1511 = vmatpush1.msra.mxu0 0.0
    %1512 = vmatprep.subr.mxu0 0.0
    %1513 = vmatpush1.msra.mxu0 0.0
    %1514 = vmatprep.subr.mxu0 0.0
    %1515 = vmatpush1.msra.mxu0 0.0
    %1516 = vmatprep.subr.mxu0 0.0
    %1517 = vmatpush1.msra.mxu0 0.0
    %1518 = vmatprep.subr.mxu0 0.0
    %1519 = vmatpush1.msra.mxu0 0.0
    %1520 = vmatprep.subr.mxu0 0.0
    %1521 = vmatpush1.msra.mxu0 0.0
    %1522 = vmatprep.subr.mxu0 0.0
    %1523 = vmatpush1.msra.mxu0 0.0
    %1524 = vmatprep.subr.mxu0 0.0
    %1525 = vmatpush1.msra.mxu0 0.0
    %1526 = vmatprep.subr.mxu0 0.0
    %1527 = vmatpush1.msra.mxu0 0.0
    %1528 = vmatprep.subr.mxu0 0.0
    %1529 = vmatpush1.msra.mxu0 0.0
    %1530 = vmatprep.subr.mxu0 0.0
    %1531 = vmatpush1.msra.mxu0 0.0
    %1532 = vmatprep.mubr.f32.mxu0 0.0
    %1533 = vmatmul.mubr.f32.gmra.mrb[0].mxu0 %v1463
    %v1534 = vpop.f32.mrb[0].mxu0
    %v1535 = vadd.f32 0.0, %v1534
    %v1536 = vpop.f32.mrb[0].mxu0
    %1537 = vmatprep.mubr.f32.mxu0 0.0
    %1538 = vmatmul.mubr.f32.gmra.mrb[0].mxu0 %v1466
    %v1539 = vpop.f32.mrb[0].mxu0
    %v1540 = vadd.f32 0.0, %v1539
    %v1541 = vpop.f32.mrb[0].mxu0
    %1542 = vdwg.mxu0
    %v1543 = vadd.f32 %v1260, %v1535
    %v1544 = vadd.f32 %v1261, %v1540
    %v1545 = vlaneseq
    %v1546 = vshrl.u32 %v1545, 7
    %v1547 = vsub.s32 0, %v1546
    %v1548 = vrot.slane %v172, %v1547
    %v1549 = vadd.f32 %v1543, %v1548
    %v1550 = vadd.f32 %v1544, %v1548
    %v1551 = vadd.f32 %v131, %v1549
    %v1552 = vadd.f32 %v136, %v1550
    %v1553 = vsel %vm183, %v1551, 0.0
    %1554 = vadd.xlane.f32.xlu0 %v1553
    %v1555 = vpop.xlane.xlu0 %1554
    %v1556 = vsel %vm183, %v1552, 0.0
    %1557 = vadd.xlane.f32.xlu0 %v1556
    %v1558 = vpop.xlane.xlu0 %1557
    %v1559 = vrcp.pop 32.0
    %v1560 = vmul.f32 %v1555, %v1559
    %v1561 = vmul.f32 %v1558, %v1559
    %v1562 = vsub.f32 %v1551, %v1560
    %v1563 = vsub.f32 %v1552, %v1561
    %v1564 = vmul.f32 %v1562, %v1562
    %v1565 = vmul.f32 %v1563, %v1563
    %v1566 = vsel %vm183, %v1564, 0.0
    %1567 = vadd.xlane.f32.xlu0 %v1566
    %v1568 = vpop.xlane.xlu0 %1567
    %v1569 = vsel %vm183, %v1565, 0.0
    %1570 = vadd.xlane.f32.xlu0 %v1569
    %v1571 = vpop.xlane.xlu0 %1570
    %v1572 = vmul.f32 %v1568, %v1559
    %v1573 = vmul.f32 %v1571, %v1559
    %v1574 = vadd.f32 %v1572, 1e-05
    %v1575 = vadd.f32 %v1573, 1e-05
    %v1576 = vrsqrt.pop %v1574
    %v1577 = vrsqrt.pop %v1575
    %v1578 = vmul.f32 %v1562, %v1576
    %v1579 = vmul.f32 %v1563, %v1577
    %v1580 = vlaneseq
    %v1581 = vshrl.u32 %v1580, 7
    %v1582 = vsub.s32 0, %v1581
    %v1583 = vrot.slane %v173, %v1582
    %v1584 = vmul.f32 %v1578, %v1583
    %v1585 = vmul.f32 %v1579, %v1583
    %v1586 = vlaneseq
    %v1587 = vshrl.u32 %v1586, 7
    %v1588 = vsub.s32 0, %v1587
    %v1589 = vrot.slane %v174, %v1588
    %v1590 = vadd.f32 %v1584, %v1589
    %v1591 = vadd.f32 %v1585, %v1589
    %v1592 = vlaneseq
    %v1593 = vshrl.u32 %v1592, 7
    %v1594 = vsub.s32 0, %v1593
    %v1595 = vrot.slane %v175, %v1594
    %v1597 = vsel %vm183, %v1590, 0
    %v1600 = vsel %vm183, %v1591, 0
    %1602 = vmatprep.subr.mxu0 0.0
    %1603 = vmatpush1.msra.mxu0 %v157
    %1604 = vmatprep.subr.mxu0 0.0
    %1605 = vmatpush1.msra.mxu0 %v158
    %1606 = vmatprep.subr.mxu0 0.0
    %1607 = vmatpush1.msra.mxu0 %v159
    %1608 = vmatprep.subr.mxu0 0.0
    %1609 = vmatpush1.msra.mxu0 %v160
    %1610 = vmatprep.subr.mxu0 0.0
    %1611 = vmatpush1.msra.mxu0 0.0
    %1612 = vmatprep.subr.mxu0 0.0
    %1613 = vmatpush1.msra.mxu0 0.0
    %1614 = vmatprep.subr.mxu0 0.0
    %1615 = vmatpush1.msra.mxu0 0.0
    %1616 = vmatprep.subr.mxu0 0.0
    %1617 = vmatpush1.msra.mxu0 0.0
    %1618 = vmatprep.subr.mxu0 0.0
    %1619 = vmatpush1.msra.mxu0 0.0
    %1620 = vmatprep.subr.mxu0 0.0
    %1621 = vmatpush1.msra.mxu0 0.0
    %1622 = vmatprep.subr.mxu0 0.0
    %1623 = vmatpush1.msra.mxu0 0.0
    %1624 = vmatprep.subr.mxu0 0.0
    %1625 = vmatpush1.msra.mxu0 0.0
    %1626 = vmatprep.subr.mxu0 0.0
    %1627 = vmatpush1.msra.mxu0 0.0
    %1628 = vmatprep.subr.mxu0 0.0
    %1629 = vmatpush1.msra.mxu0 0.0
    %1630 = vmatprep.subr.mxu0 0.0
    %1631 = vmatpush1.msra.mxu0 0.0
    %1632 = vmatprep.subr.mxu0 0.0
    %1633 = vmatpush1.msra.mxu0 0.0
    %1634 = vmatprep.subr.mxu0 0.0
    %1635 = vmatpush1.msra.mxu0 0.0
    %1636 = vmatprep.subr.mxu0 0.0
    %1637 = vmatpush1.msra.mxu0 0.0
    %1638 = vmatprep.subr.mxu0 0.0
    %1639 = vmatpush1.msra.mxu0 0.0
    %1640 = vmatprep.subr.mxu0 0.0
    %1641 = vmatpush1.msra.mxu0 0.0
    %1642 = vmatprep.subr.mxu0 0.0
    %1643 = vmatpush1.msra.mxu0 0.0
    %1644 = vmatprep.subr.mxu0 0.0
    %1645 = vmatpush1.msra.mxu0 0.0
    %1646 = vmatprep.subr.mxu0 0.0
    %1647 = vmatpush1.msra.mxu0 0.0
    %1648 = vmatprep.subr.mxu0 0.0
    %1649 = vmatpush1.msra.mxu0 0.0
    %1650 = vmatprep.subr.mxu0 0.0
    %1651 = vmatpush1.msra.mxu0 0.0
    %1652 = vmatprep.subr.mxu0 0.0
    %1653 = vmatpush1.msra.mxu0 0.0
    %1654 = vmatprep.subr.mxu0 0.0
    %1655 = vmatpush1.msra.mxu0 0.0
    %1656 = vmatprep.subr.mxu0 0.0
    %1657 = vmatpush1.msra.mxu0 0.0
    %1658 = vmatprep.subr.mxu0 0.0
    %1659 = vmatpush1.msra.mxu0 0.0
    %1660 = vmatprep.subr.mxu0 0.0
    %1661 = vmatpush1.msra.mxu0 0.0
    %1662 = vmatprep.subr.mxu0 0.0
    %1663 = vmatpush1.msra.mxu0 0.0
    %1664 = vmatprep.subr.mxu0 0.0
    %1665 = vmatpush1.msra.mxu0 0.0
    %1666 = vmatprep.mubr.f32.mxu0 0.0
    %1667 = vmatmul.mubr.f32.gmra.mrb[0].mxu0 %v1597
    %v1668 = vpop.f32.mrb[0].mxu0
    %v1669 = vadd.f32 %v1595, %v1668
    %v1670 = vpop.f32.mrb[0].mxu0
    %1671 = vmatprep.mubr.f32.mxu0 0.0
    %1672 = vmatmul.mubr.f32.gmra.mrb[0].mxu0 %v1600
    %v1673 = vpop.f32.mrb[0].mxu0
    %v1674 = vadd.f32 %v1595, %v1673
    %v1675 = vpop.f32.mrb[0].mxu0
    %1676 = vdwg.mxu0
    %v1677 = vmax.f32 %v1669, 0.0
    %v1678 = vmax.f32 %v1674, 0.0
    %v1679 = vlaneseq
    %v1680 = vshrl.u32 %v1679, 7
    %v1681 = vsub.s32 0, %v1680
    %v1682 = vrot.slane %v176, %v1681
    %vm1683 = vcmask 523264
    %v1685 = vsel %vm1683, %v1677, 0
    %v1688 = vsel %vm1683, %v1678, 0
    %1690 = vmatprep.subr.mxu0 0.0
    %1691 = vmatpush1.msra.mxu0 %v161
    %1692 = vmatprep.subr.mxu0 0.0
    %1693 = vmatpush1.msra.mxu0 %v162
    %1694 = vmatprep.subr.mxu0 0.0
    %1695 = vmatpush1.msra.mxu0 %v163
    %1696 = vmatprep.subr.mxu0 0.0
    %1697 = vmatpush1.msra.mxu0 %v164
    %1698 = vmatprep.subr.mxu0 0.0
    %1699 = vmatpush1.msra.mxu0 %v165
    %1700 = vmatprep.subr.mxu0 0.0
    %1701 = vmatpush1.msra.mxu0 %v166
    %1702 = vmatprep.subr.mxu0 0.0
    %1703 = vmatpush1.msra.mxu0 %v167
    %1704 = vmatprep.subr.mxu0 0.0
    %1705 = vmatpush1.msra.mxu0 %v168
    %1706 = vmatprep.subr.mxu0 0.0
    %1707 = vmatpush1.msra.mxu0 0.0
    %1708 = vmatprep.subr.mxu0 0.0
    %1709 = vmatpush1.msra.mxu0 0.0
    %1710 = vmatprep.subr.mxu0 0.0
    %1711 = vmatpush1.msra.mxu0 0.0
    %1712 = vmatprep.subr.mxu0 0.0
    %1713 = vmatpush1.msra.mxu0 0.0
    %1714 = vmatprep.subr.mxu0 0.0
    %1715 = vmatpush1.msra.mxu0 0.0
    %1716 = vmatprep.subr.mxu0 0.0
    %1717 = vmatpush1.msra.mxu0 0.0
    %1718 = vmatprep.subr.mxu0 0.0
    %1719 = vmatpush1.msra.mxu0 0.0
    %1720 = vmatprep.subr.mxu0 0.0
    %1721 = vmatpush1.msra.mxu0 0.0
    %1722 = vmatprep.subr.mxu0 0.0
    %1723 = vmatpush1.msra.mxu0 0.0
    %1724 = vmatprep.subr.mxu0 0.0
    %1725 = vmatpush1.msra.mxu0 0.0
    %1726 = vmatprep.subr.mxu0 0.0
    %1727 = vmatpush1.msra.mxu0 0.0
    %1728 = vmatprep.subr.mxu0 0.0
    %1729 = vmatpush1.msra.mxu0 0.0
    %1730 = vmatprep.subr.mxu0 0.0
    %1731 = vmatpush1.msra.mxu0 0.0
    %1732 = vmatprep.subr.mxu0 0.0
    %1733 = vmatpush1.msra.mxu0 0.0
    %1734 = vmatprep.subr.mxu0 0.0
    %1735 = vmatpush1.msra.mxu0 0.0
    %1736 = vmatprep.subr.mxu0 0.0
    %1737 = vmatpush1.msra.mxu0 0.0
    %1738 = vmatprep.subr.mxu0 0.0
    %1739 = vmatpush1.msra.mxu0 0.0
    %1740 = vmatprep.subr.mxu0 0.0
    %1741 = vmatpush1.msra.mxu0 0.0
    %1742 = vmatprep.subr.mxu0 0.0
    %1743 = vmatpush1.msra.mxu0 0.0
    %1744 = vmatprep.subr.mxu0 0.0
    %1745 = vmatpush1.msra.mxu0 0.0
    %1746 = vmatprep.subr.mxu0 0.0
    %1747 = vmatpush1.msra.mxu0 0.0
    %1748 = vmatprep.subr.mxu0 0.0
    %1749 = vmatpush1.msra.mxu0 0.0
    %1750 = vmatprep.subr.mxu0 0.0
    %1751 = vmatpush1.msra.mxu0 0.0
    %1752 = vmatprep.subr.mxu0 0.0
    %1753 = vmatpush1.msra.mxu0 0.0
    %1754 = vmatprep.mubr.f32.mxu0 0.0
    %1755 = vmatmul.mubr.f32.gmra.mrb[0].mxu0 %v1685
    %v1756 = vpop.f32.mrb[0].mxu0
    %v1757 = vadd.f32 %v1682, %v1756
    %v1758 = vpop.f32.mrb[0].mxu0
    %1759 = vmatprep.mubr.f32.mxu0 0.0
    %1760 = vmatmul.mubr.f32.gmra.mrb[0].mxu0 %v1688
    %v1761 = vpop.f32.mrb[0].mxu0
    %v1762 = vadd.f32 %v1682, %v1761
    %v1763 = vpop.f32.mrb[0].mxu0
    %1764 = vdwg.mxu0
    %v1765 = vadd.f32 %v1590, %v1757
    %v1766 = vadd.f32 %v1591, %v1762
    %v1767 = vsel %vm183, %v1765, 0.0
    %1768 = vadd.xlane.f32.xlu0 %v1767
    %v1769 = vpop.xlane.xlu0 %1768
    %v1770 = vsel %vm183, %v1766, 0.0
    %1771 = vadd.xlane.f32.xlu0 %v1770
    %v1772 = vpop.xlane.xlu0 %1771
    %v1773 = vmul.f32 %v1769, %v1559
    %v1774 = vmul.f32 %v1772, %v1559
    %v1775 = vsub.f32 %v1765, %v1773
    %v1776 = vsub.f32 %v1766, %v1774
    %v1777 = vmul.f32 %v1775, %v1775
    %v1778 = vmul.f32 %v1776, %v1776
    %v1779 = vsel %vm183, %v1777, 0.0
    %1780 = vadd.xlane.f32.xlu0 %v1779
    %v1781 = vpop.xlane.xlu0 %1780
    %v1782 = vsel %vm183, %v1778, 0.0
    %1783 = vadd.xlane.f32.xlu0 %v1782
    %v1784 = vpop.xlane.xlu0 %1783
    %v1785 = vmul.f32 %v1781, %v1559
    %v1786 = vmul.f32 %v1784, %v1559
    %v1787 = vadd.f32 %v1785, 1e-05
    %v1788 = vadd.f32 %v1786, 1e-05
    %v1789 = vrsqrt.pop %v1787
    %v1790 = vrsqrt.pop %v1788
    %v1791 = vmul.f32 %v1775, %v1789
    %v1792 = vmul.f32 %v1776, %v1790
    %v1793 = vlaneseq
    %v1794 = vshrl.u32 %v1793, 7
    %v1795 = vsub.s32 0, %v1794
    %v1796 = vrot.slane %v177, %v1795
    %v1797 = vmul.f32 %v1791, %v1796
    %v1798 = vmul.f32 %v1792, %v1796
    %v1799 = vlaneseq
    %v1800 = vshrl.u32 %v1799, 7
    %v1801 = vsub.s32 0, %v1800
    %v1802 = vrot.slane %v178, %v1801
    %v1803 = vadd.f32 %v1797, %v1802
    %v1804 = vadd.f32 %v1798, %v1802
    %v1805 = vld [vmem:[%s2 + $0x110] sm:$0xff]
    %v1806 = vld [vmem:[%s2 + $0x118] sm:$0xff]
    %v1807 = vld [vmem:[%s2 + $0x120] sm:$0xff]
    %v1808 = vld [vmem:[%s2 + $0x128] sm:$0xff]
    %v1809 = vld [vmem:[%s2 + $0x130] sm:$0xff]
    %v1810 = vld [vmem:[%s2 + $0x138] sm:$0xff]
    %v1811 = vld [vmem:[%s2 + $0x140] sm:$0xff]
    %v1812 = vld [vmem:[%s2 + $0x148] sm:$0xff]
    %v1813 = vld [vmem:[%s2 + $0x150] sm:$0xff]
    %v1814 = vld [vmem:[%s2 + $0x158] sm:$0xff]
    %v1815 = vld [vmem:[%s2 + $0x160] sm:$0xff]
    %v1816 = vld [vmem:[%s2 + $0x168] sm:$0xff]
    %v1817 = vld [vmem:[%s2 + $0x170] sm:$0xff]
    %v1818 = vld [vmem:[%s2 + $0x178] sm:$0xff]
    %v1819 = vld [vmem:[%s2 + $0x180] sm:$0xff]
    %v1820 = vld [vmem:[%s2 + $0x188] sm:$0xff]
    %v1821 = vld [vmem:[%s2 + $0x190] sm:$0xff]
    %v1822 = vld [vmem:[%s2 + $0x198] sm:$0xff]
    %v1823 = vld [vmem:[%s2 + $0x1a0] sm:$0xff]
    %v1824 = vld [vmem:[%s2 + $0x1a8] sm:$0xff]
    %v1825 = vld [vmem:[%s2 + $0x1b0] sm:$0xff]
    %v1826 = vld [vmem:[%s2 + $0x1b8] sm:$0xff]
    %v1827 = vld [vmem:[%s2 + $0x1c0] sm:$0xff]
    %v1828 = vld [vmem:[%s2 + $0x1c8] sm:$0xff]
    %v1829 = vld [vmem:[%s2 + $0x1d0] sm:$0xff]
    %v1830 = vld [vmem:[%s2 + $0x1d8] sm:$0xff]
    %v1831 = vld [vmem:[%s2 + $0x1e0] sm:$0xff]
    %v1832 = vld [vmem:[%s2 + $0x1e8] sm:$0xff]
    %v1833 = vld [vmem:[%s2 + $0x1fa] sm:$0x1]
    %v1834 = vld [vmem:[%s2 + $0x1fb] sm:$0x1]
    %v1835 = vld [vmem:[%s2 + $0x1fc] sm:$0x1]
    %v1836 = vld [vmem:[%s2 + $0x1fd] sm:$0x1]
    %v1837 = vld [vmem:[%s2 + $0x1fe] sm:$0x1]
    %v1838 = vld [vmem:[%s2 + $0x1ff] sm:$0x1]
    %v1839 = vld [vmem:[%s2 + $0x200] sm:$0x1]
    %v1840 = vld [vmem:[%s2 + $0x201] sm:$0x1]
    %v1841 = vld [vmem:[%s2 + $0x202] sm:$0x1]
    %v1842 = vld [vmem:[%s2 + $0x203] sm:$0x1]
    %v1843 = vlaneseq
    %v1844 = vshrl.u32 %v1843, 7
    %v1845 = vsub.s32 0, %v1844
    %v1846 = vrot.slane %v1833, %v1845
    %v1848 = vsel %vm183, %v1803, 0
    %v1851 = vsel %vm183, %v1804, 0
    %1853 = vmatprep.subr.mxu0 0.0
    %1854 = vmatpush1.msra.mxu0 %v1805
    %1855 = vmatprep.subr.mxu0 0.0
    %1856 = vmatpush1.msra.mxu0 %v1806
    %1857 = vmatprep.subr.mxu0 0.0
    %1858 = vmatpush1.msra.mxu0 %v1807
    %1859 = vmatprep.subr.mxu0 0.0
    %1860 = vmatpush1.msra.mxu0 %v1808
    %1861 = vmatprep.subr.mxu0 0.0
    %1862 = vmatpush1.msra.mxu0 0.0
    %1863 = vmatprep.subr.mxu0 0.0
    %1864 = vmatpush1.msra.mxu0 0.0
    %1865 = vmatprep.subr.mxu0 0.0
    %1866 = vmatpush1.msra.mxu0 0.0
    %1867 = vmatprep.subr.mxu0 0.0
    %1868 = vmatpush1.msra.mxu0 0.0
    %1869 = vmatprep.subr.mxu0 0.0
    %1870 = vmatpush1.msra.mxu0 0.0
    %1871 = vmatprep.subr.mxu0 0.0
    %1872 = vmatpush1.msra.mxu0 0.0
    %1873 = vmatprep.subr.mxu0 0.0
    %1874 = vmatpush1.msra.mxu0 0.0
    %1875 = vmatprep.subr.mxu0 0.0
    %1876 = vmatpush1.msra.mxu0 0.0
    %1877 = vmatprep.subr.mxu0 0.0
    %1878 = vmatpush1.msra.mxu0 0.0
    %1879 = vmatprep.subr.mxu0 0.0
    %1880 = vmatpush1.msra.mxu0 0.0
    %1881 = vmatprep.subr.mxu0 0.0
    %1882 = vmatpush1.msra.mxu0 0.0
    %1883 = vmatprep.subr.mxu0 0.0
    %1884 = vmatpush1.msra.mxu0 0.0
    %1885 = vmatprep.subr.mxu0 0.0
    %1886 = vmatpush1.msra.mxu0 0.0
    %1887 = vmatprep.subr.mxu0 0.0
    %1888 = vmatpush1.msra.mxu0 0.0
    %1889 = vmatprep.subr.mxu0 0.0
    %1890 = vmatpush1.msra.mxu0 0.0
    %1891 = vmatprep.subr.mxu0 0.0
    %1892 = vmatpush1.msra.mxu0 0.0
    %1893 = vmatprep.subr.mxu0 0.0
    %1894 = vmatpush1.msra.mxu0 0.0
    %1895 = vmatprep.subr.mxu0 0.0
    %1896 = vmatpush1.msra.mxu0 0.0
    %1897 = vmatprep.subr.mxu0 0.0
    %1898 = vmatpush1.msra.mxu0 0.0
    %1899 = vmatprep.subr.mxu0 0.0
    %1900 = vmatpush1.msra.mxu0 0.0
    %1901 = vmatprep.subr.mxu0 0.0
    %1902 = vmatpush1.msra.mxu0 0.0
    %1903 = vmatprep.subr.mxu0 0.0
    %1904 = vmatpush1.msra.mxu0 0.0
    %1905 = vmatprep.subr.mxu0 0.0
    %1906 = vmatpush1.msra.mxu0 0.0
    %1907 = vmatprep.subr.mxu0 0.0
    %1908 = vmatpush1.msra.mxu0 0.0
    %1909 = vmatprep.subr.mxu0 0.0
    %1910 = vmatpush1.msra.mxu0 0.0
    %1911 = vmatprep.subr.mxu0 0.0
    %1912 = vmatpush1.msra.mxu0 0.0
    %1913 = vmatprep.subr.mxu0 0.0
    %1914 = vmatpush1.msra.mxu0 0.0
    %1915 = vmatprep.subr.mxu0 0.0
    %1916 = vmatpush1.msra.mxu0 0.0
    %1917 = vmatprep.mubr.f32.mxu0 0.0
    %1918 = vmatmul.mubr.f32.gmra.mrb[0].mxu0 %v1848
    %v1919 = vpop.f32.mrb[0].mxu0
    %v1920 = vadd.f32 %v1846, %v1919
    %v1921 = vpop.f32.mrb[0].mxu0
    %1922 = vmatprep.mubr.f32.mxu0 0.0
    %1923 = vmatmul.mubr.f32.gmra.mrb[0].mxu0 %v1851
    %v1924 = vpop.f32.mrb[0].mxu0
    %v1925 = vadd.f32 %v1846, %v1924
    %v1926 = vpop.f32.mrb[0].mxu0
    %1927 = vdwg.mxu0
    %v1928 = vlaneseq
    %v1929 = vshrl.u32 %v1928, 7
    %v1930 = vsub.s32 0, %v1929
    %v1931 = vrot.slane %v1834, %v1930
    %1932 = vmatprep.subr.mxu0 0.0
    %1933 = vmatpush1.msra.mxu0 %v1809
    %1934 = vmatprep.subr.mxu0 0.0
    %1935 = vmatpush1.msra.mxu0 %v1810
    %1936 = vmatprep.subr.mxu0 0.0
    %1937 = vmatpush1.msra.mxu0 %v1811
    %1938 = vmatprep.subr.mxu0 0.0
    %1939 = vmatpush1.msra.mxu0 %v1812
    %1940 = vmatprep.subr.mxu0 0.0
    %1941 = vmatpush1.msra.mxu0 0.0
    %1942 = vmatprep.subr.mxu0 0.0
    %1943 = vmatpush1.msra.mxu0 0.0
    %1944 = vmatprep.subr.mxu0 0.0
    %1945 = vmatpush1.msra.mxu0 0.0
    %1946 = vmatprep.subr.mxu0 0.0
    %1947 = vmatpush1.msra.mxu0 0.0
    %1948 = vmatprep.subr.mxu0 0.0
    %1949 = vmatpush1.msra.mxu0 0.0
    %1950 = vmatprep.subr.mxu0 0.0
    %1951 = vmatpush1.msra.mxu0 0.0
    %1952 = vmatprep.subr.mxu0 0.0
    %1953 = vmatpush1.msra.mxu0 0.0
    %1954 = vmatprep.subr.mxu0 0.0
    %1955 = vmatpush1.msra.mxu0 0.0
    %1956 = vmatprep.subr.mxu0 0.0
    %1957 = vmatpush1.msra.mxu0 0.0
    %1958 = vmatprep.subr.mxu0 0.0
    %1959 = vmatpush1.msra.mxu0 0.0
    %1960 = vmatprep.subr.mxu0 0.0
    %1961 = vmatpush1.msra.mxu0 0.0
    %1962 = vmatprep.subr.mxu0 0.0
    %1963 = vmatpush1.msra.mxu0 0.0
    %1964 = vmatprep.subr.mxu0 0.0
    %1965 = vmatpush1.msra.mxu0 0.0
    %1966 = vmatprep.subr.mxu0 0.0
    %1967 = vmatpush1.msra.mxu0 0.0
    %1968 = vmatprep.subr.mxu0 0.0
    %1969 = vmatpush1.msra.mxu0 0.0
    %1970 = vmatprep.subr.mxu0 0.0
    %1971 = vmatpush1.msra.mxu0 0.0
    %1972 = vmatprep.subr.mxu0 0.0
    %1973 = vmatpush1.msra.mxu0 0.0
    %1974 = vmatprep.subr.mxu0 0.0
    %1975 = vmatpush1.msra.mxu0 0.0
    %1976 = vmatprep.subr.mxu0 0.0
    %1977 = vmatpush1.msra.mxu0 0.0
    %1978 = vmatprep.subr.mxu0 0.0
    %1979 = vmatpush1.msra.mxu0 0.0
    %1980 = vmatprep.subr.mxu0 0.0
    %1981 = vmatpush1.msra.mxu0 0.0
    %1982 = vmatprep.subr.mxu0 0.0
    %1983 = vmatpush1.msra.mxu0 0.0
    %1984 = vmatprep.subr.mxu0 0.0
    %1985 = vmatpush1.msra.mxu0 0.0
    %1986 = vmatprep.subr.mxu0 0.0
    %1987 = vmatpush1.msra.mxu0 0.0
    %1988 = vmatprep.subr.mxu0 0.0
    %1989 = vmatpush1.msra.mxu0 0.0
    %1990 = vmatprep.subr.mxu0 0.0
    %1991 = vmatpush1.msra.mxu0 0.0
    %1992 = vmatprep.subr.mxu0 0.0
    %1993 = vmatpush1.msra.mxu0 0.0
    %1994 = vmatprep.subr.mxu0 0.0
    %1995 = vmatpush1.msra.mxu0 0.0
    %1996 = vmatprep.mubr.f32.mxu0 0.0
    %1997 = vmatmul.mubr.f32.gmra.mrb[0].mxu0 %v1848
    %v1998 = vpop.f32.mrb[0].mxu0
    %v1999 = vadd.f32 %v1931, %v1998
    %v2000 = vpop.f32.mrb[0].mxu0
    %2001 = vmatprep.mubr.f32.mxu0 0.0
    %2002 = vmatmul.mubr.f32.gmra.mrb[0].mxu0 %v1851
    %v2003 = vpop.f32.mrb[0].mxu0
    %v2004 = vadd.f32 %v1931, %v2003
    %v2005 = vpop.f32.mrb[0].mxu0
    %2006 = vdwg.mxu0
    %v2007 = vlaneseq
    %v2008 = vshrl.u32 %v2007, 7
    %v2009 = vsub.s32 0, %v2008
    %v2010 = vrot.slane %v1835, %v2009
    %2011 = vmatprep.subr.mxu0 0.0
    %2012 = vmatpush1.msra.mxu0 %v1813
    %2013 = vmatprep.subr.mxu0 0.0
    %2014 = vmatpush1.msra.mxu0 %v1814
    %2015 = vmatprep.subr.mxu0 0.0
    %2016 = vmatpush1.msra.mxu0 %v1815
    %2017 = vmatprep.subr.mxu0 0.0
    %2018 = vmatpush1.msra.mxu0 %v1816
    %2019 = vmatprep.subr.mxu0 0.0
    %2020 = vmatpush1.msra.mxu0 0.0
    %2021 = vmatprep.subr.mxu0 0.0
    %2022 = vmatpush1.msra.mxu0 0.0
    %2023 = vmatprep.subr.mxu0 0.0
    %2024 = vmatpush1.msra.mxu0 0.0
    %2025 = vmatprep.subr.mxu0 0.0
    %2026 = vmatpush1.msra.mxu0 0.0
    %2027 = vmatprep.subr.mxu0 0.0
    %2028 = vmatpush1.msra.mxu0 0.0
    %2029 = vmatprep.subr.mxu0 0.0
    %2030 = vmatpush1.msra.mxu0 0.0
    %2031 = vmatprep.subr.mxu0 0.0
    %2032 = vmatpush1.msra.mxu0 0.0
    %2033 = vmatprep.subr.mxu0 0.0
    %2034 = vmatpush1.msra.mxu0 0.0
    %2035 = vmatprep.subr.mxu0 0.0
    %2036 = vmatpush1.msra.mxu0 0.0
    %2037 = vmatprep.subr.mxu0 0.0
    %2038 = vmatpush1.msra.mxu0 0.0
    %2039 = vmatprep.subr.mxu0 0.0
    %2040 = vmatpush1.msra.mxu0 0.0
    %2041 = vmatprep.subr.mxu0 0.0
    %2042 = vmatpush1.msra.mxu0 0.0
    %2043 = vmatprep.subr.mxu0 0.0
    %2044 = vmatpush1.msra.mxu0 0.0
    %2045 = vmatprep.subr.mxu0 0.0
    %2046 = vmatpush1.msra.mxu0 0.0
    %2047 = vmatprep.subr.mxu0 0.0
    %2048 = vmatpush1.msra.mxu0 0.0
    %2049 = vmatprep.subr.mxu0 0.0
    %2050 = vmatpush1.msra.mxu0 0.0
    %2051 = vmatprep.subr.mxu0 0.0
    %2052 = vmatpush1.msra.mxu0 0.0
    %2053 = vmatprep.subr.mxu0 0.0
    %2054 = vmatpush1.msra.mxu0 0.0
    %2055 = vmatprep.subr.mxu0 0.0
    %2056 = vmatpush1.msra.mxu0 0.0
    %2057 = vmatprep.subr.mxu0 0.0
    %2058 = vmatpush1.msra.mxu0 0.0
    %2059 = vmatprep.subr.mxu0 0.0
    %2060 = vmatpush1.msra.mxu0 0.0
    %2061 = vmatprep.subr.mxu0 0.0
    %2062 = vmatpush1.msra.mxu0 0.0
    %2063 = vmatprep.subr.mxu0 0.0
    %2064 = vmatpush1.msra.mxu0 0.0
    %2065 = vmatprep.subr.mxu0 0.0
    %2066 = vmatpush1.msra.mxu0 0.0
    %2067 = vmatprep.subr.mxu0 0.0
    %2068 = vmatpush1.msra.mxu0 0.0
    %2069 = vmatprep.subr.mxu0 0.0
    %2070 = vmatpush1.msra.mxu0 0.0
    %2071 = vmatprep.subr.mxu0 0.0
    %2072 = vmatpush1.msra.mxu0 0.0
    %2073 = vmatprep.subr.mxu0 0.0
    %2074 = vmatpush1.msra.mxu0 0.0
    %2075 = vmatprep.mubr.f32.mxu0 0.0
    %2076 = vmatmul.mubr.f32.gmra.mrb[0].mxu0 %v1848
    %v2077 = vpop.f32.mrb[0].mxu0
    %v2078 = vadd.f32 %v2010, %v2077
    %v2079 = vpop.f32.mrb[0].mxu0
    %2080 = vmatprep.mubr.f32.mxu0 0.0
    %2081 = vmatmul.mubr.f32.gmra.mrb[0].mxu0 %v1851
    %v2082 = vpop.f32.mrb[0].mxu0
    %v2083 = vadd.f32 %v2010, %v2082
    %v2084 = vpop.f32.mrb[0].mxu0
    %2085 = vdwg.mxu0
    %v2087 = vsel %vm423, %v1920, 0
    %v2090 = vsel %vm423, %v1925, 0
    %v2093 = vsel %vm423, %v1999, 0
    %v2096 = vsel %vm423, %v2004, 0
    %2098 = vmatprep.subr.mxu0 0.0
    %2099 = vmatpush1.xpose.msra.mxu0 %v2093
    %2100 = vmatprep.subr.mxu0 0.0
    %2101 = vmatpush1.xpose.msra.mxu0 %v2096
    %2102 = vmatprep.subr.mxu0 0.0
    %2103 = vmatpush1.xpose.msra.mxu0 0.0
    %2104 = vmatprep.subr.mxu0 0.0
    %2105 = vmatpush1.xpose.msra.mxu0 0.0
    %2106 = vmatprep.subr.mxu0 0.0
    %2107 = vmatpush1.xpose.msra.mxu0 0.0
    %2108 = vmatprep.subr.mxu0 0.0
    %2109 = vmatpush1.xpose.msra.mxu0 0.0
    %2110 = vmatprep.subr.mxu0 0.0
    %2111 = vmatpush1.xpose.msra.mxu0 0.0
    %2112 = vmatprep.subr.mxu0 0.0
    %2113 = vmatpush1.xpose.msra.mxu0 0.0
    %2114 = vmatprep.subr.mxu0 0.0
    %2115 = vmatpush1.xpose.msra.mxu0 0.0
    %2116 = vmatprep.subr.mxu0 0.0
    %2117 = vmatpush1.xpose.msra.mxu0 0.0
    %2118 = vmatprep.subr.mxu0 0.0
    %2119 = vmatpush1.xpose.msra.mxu0 0.0
    %2120 = vmatprep.subr.mxu0 0.0
    %2121 = vmatpush1.xpose.msra.mxu0 0.0
    %2122 = vmatprep.subr.mxu0 0.0
    %2123 = vmatpush1.xpose.msra.mxu0 0.0
    %2124 = vmatprep.subr.mxu0 0.0
    %2125 = vmatpush1.xpose.msra.mxu0 0.0
    %2126 = vmatprep.subr.mxu0 0.0
    %2127 = vmatpush1.xpose.msra.mxu0 0.0
    %2128 = vmatprep.subr.mxu0 0.0
    %2129 = vmatpush1.xpose.msra.mxu0 0.0
    %2130 = vmatprep.subr.mxu0 0.0
    %2131 = vmatpush1.xpose.msra.mxu0 0.0
    %2132 = vmatprep.subr.mxu0 0.0
    %2133 = vmatpush1.xpose.msra.mxu0 0.0
    %2134 = vmatprep.subr.mxu0 0.0
    %2135 = vmatpush1.xpose.msra.mxu0 0.0
    %2136 = vmatprep.subr.mxu0 0.0
    %2137 = vmatpush1.xpose.msra.mxu0 0.0
    %2138 = vmatprep.subr.mxu0 0.0
    %2139 = vmatpush1.xpose.msra.mxu0 0.0
    %2140 = vmatprep.subr.mxu0 0.0
    %2141 = vmatpush1.xpose.msra.mxu0 0.0
    %2142 = vmatprep.subr.mxu0 0.0
    %2143 = vmatpush1.xpose.msra.mxu0 0.0
    %2144 = vmatprep.subr.mxu0 0.0
    %2145 = vmatpush1.xpose.msra.mxu0 0.0
    %2146 = vmatprep.subr.mxu0 0.0
    %2147 = vmatpush1.xpose.msra.mxu0 0.0
    %2148 = vmatprep.subr.mxu0 0.0
    %2149 = vmatpush1.xpose.msra.mxu0 0.0
    %2150 = vmatprep.subr.mxu0 0.0
    %2151 = vmatpush1.xpose.msra.mxu0 0.0
    %2152 = vmatprep.subr.mxu0 0.0
    %2153 = vmatpush1.xpose.msra.mxu0 0.0
    %2154 = vmatprep.subr.mxu0 0.0
    %2155 = vmatpush1.xpose.msra.mxu0 0.0
    %2156 = vmatprep.subr.mxu0 0.0
    %2157 = vmatpush1.xpose.msra.mxu0 0.0
    %2158 = vmatprep.subr.mxu0 0.0
    %2159 = vmatpush1.xpose.msra.mxu0 0.0
    %2160 = vmatprep.subr.mxu0 0.0
    %2161 = vmatpush1.xpose.msra.mxu0 0.0
    %2162 = vmatprep.mubr.f32.mxu0 0.0
    %2163 = vmatmul.mubr.f32.gmra.mrb[0].mxu0 %v2087
    %v2164 = vpop.f32.mrb[0].mxu0
    %v2165 = vadd.f32 %v139, %v2164
    %v2166 = vpop.f32.mrb[0].mxu0
    %2167 = vmatprep.mubr.f32.mxu0 0.0
    %2168 = vmatmul.mubr.f32.gmra.mrb[0].mxu0 %v2090
    %v2169 = vpop.f32.mrb[0].mxu0
    %v2170 = vadd.f32 %v140, %v2169
    %v2171 = vpop.f32.mrb[0].mxu0
    %2172 = vdwg.mxu0
    %v2173 = vsel %vm511, %v2165, -inf
    %2174 = vmax.xlane.f32.xlu0 %v2173
    %v2175 = vpop.xlane.xlu0 %2174
    %v2176 = vsel %vm511, %v2170, -inf
    %2177 = vmax.xlane.f32.xlu0 %v2176
    %v2178 = vpop.xlane.xlu0 %2177
    %v2179 = vsub.f32 %v2165, %v2175
    %v2180 = vsub.f32 %v2170, %v2178
    %v2181 = vmul.f32 %v2179, 1.442695
    %v2182 = vpow.pop %v2181
    %v2183 = vmul.f32 %v2180, 1.442695
    %v2184 = vpow.pop %v2183
    %v2185 = vsel %vm511, %v2182, 0.0
    %2186 = vadd.xlane.f32.xlu0 %v2185
    %v2187 = vpop.xlane.xlu0 %2186
    %v2188 = vsel %vm511, %v2184, 0.0
    %2189 = vadd.xlane.f32.xlu0 %v2188
    %v2190 = vpop.xlane.xlu0 %2189
    %v2191 = vrcp.pop %v2187
    %v2192 = vrcp.pop %v2190
    %v2193 = vmul.f32 %v2182, %v2191
    %v2194 = vmul.f32 %v2184, %v2192
    %v2196 = vsel %vm511, %v2193, 0
    %v2199 = vsel %vm511, %v2194, 0
    %2201 = vmatprep.subr.mxu0 0.0
    %2202 = vmatpush1.msra.mxu0 %v2078
    %2203 = vmatprep.subr.mxu0 0.0
    %2204 = vmatpush1.msra.mxu0 %v2083
    %2205 = vmatprep.subr.mxu0 0.0
    %2206 = vmatpush1.msra.mxu0 0.0
    %2207 = vmatprep.subr.mxu0 0.0
    %2208 = vmatpush1.msra.mxu0 0.0
    %2209 = vmatprep.subr.mxu0 0.0
    %2210 = vmatpush1.msra.mxu0 0.0
    %2211 = vmatprep.subr.mxu0 0.0
    %2212 = vmatpush1.msra.mxu0 0.0
    %2213 = vmatprep.subr.mxu0 0.0
    %2214 = vmatpush1.msra.mxu0 0.0
    %2215 = vmatprep.subr.mxu0 0.0
    %2216 = vmatpush1.msra.mxu0 0.0
    %2217 = vmatprep.subr.mxu0 0.0
    %2218 = vmatpush1.msra.mxu0 0.0
    %2219 = vmatprep.subr.mxu0 0.0
    %2220 = vmatpush1.msra.mxu0 0.0
    %2221 = vmatprep.subr.mxu0 0.0
    %2222 = vmatpush1.msra.mxu0 0.0
    %2223 = vmatprep.subr.mxu0 0.0
    %2224 = vmatpush1.msra.mxu0 0.0
    %2225 = vmatprep.subr.mxu0 0.0
    %2226 = vmatpush1.msra.mxu0 0.0
    %2227 = vmatprep.subr.mxu0 0.0
    %2228 = vmatpush1.msra.mxu0 0.0
    %2229 = vmatprep.subr.mxu0 0.0
    %2230 = vmatpush1.msra.mxu0 0.0
    %2231 = vmatprep.subr.mxu0 0.0
    %2232 = vmatpush1.msra.mxu0 0.0
    %2233 = vmatprep.subr.mxu0 0.0
    %2234 = vmatpush1.msra.mxu0 0.0
    %2235 = vmatprep.subr.mxu0 0.0
    %2236 = vmatpush1.msra.mxu0 0.0
    %2237 = vmatprep.subr.mxu0 0.0
    %2238 = vmatpush1.msra.mxu0 0.0
    %2239 = vmatprep.subr.mxu0 0.0
    %2240 = vmatpush1.msra.mxu0 0.0
    %2241 = vmatprep.subr.mxu0 0.0
    %2242 = vmatpush1.msra.mxu0 0.0
    %2243 = vmatprep.subr.mxu0 0.0
    %2244 = vmatpush1.msra.mxu0 0.0
    %2245 = vmatprep.subr.mxu0 0.0
    %2246 = vmatpush1.msra.mxu0 0.0
    %2247 = vmatprep.subr.mxu0 0.0
    %2248 = vmatpush1.msra.mxu0 0.0
    %2249 = vmatprep.subr.mxu0 0.0
    %2250 = vmatpush1.msra.mxu0 0.0
    %2251 = vmatprep.subr.mxu0 0.0
    %2252 = vmatpush1.msra.mxu0 0.0
    %2253 = vmatprep.subr.mxu0 0.0
    %2254 = vmatpush1.msra.mxu0 0.0
    %2255 = vmatprep.subr.mxu0 0.0
    %2256 = vmatpush1.msra.mxu0 0.0
    %2257 = vmatprep.subr.mxu0 0.0
    %2258 = vmatpush1.msra.mxu0 0.0
    %2259 = vmatprep.subr.mxu0 0.0
    %2260 = vmatpush1.msra.mxu0 0.0
    %2261 = vmatprep.subr.mxu0 0.0
    %2262 = vmatpush1.msra.mxu0 0.0
    %2263 = vmatprep.subr.mxu0 0.0
    %2264 = vmatpush1.msra.mxu0 0.0
    %2265 = vmatprep.mubr.f32.mxu0 0.0
    %2266 = vmatmul.mubr.f32.gmra.mrb[0].mxu0 %v2196
    %v2267 = vpop.f32.mrb[0].mxu0
    %v2268 = vadd.f32 0.0, %v2267
    %v2269 = vpop.f32.mrb[0].mxu0
    %2270 = vmatprep.mubr.f32.mxu0 0.0
    %2271 = vmatmul.mubr.f32.gmra.mrb[0].mxu0 %v2199
    %v2272 = vpop.f32.mrb[0].mxu0
    %v2273 = vadd.f32 0.0, %v2272
    %v2274 = vpop.f32.mrb[0].mxu0
    %2275 = vdwg.mxu0
    %2276 = vrot.lane.b32.xlu0 %v1920, 120
    %v2277 = vpop.permute.xlu0 %2276
    %2278 = vrot.lane.b32.xlu0 %v1925, 120
    %v2279 = vpop.permute.xlu0 %2278
    %2280 = vrot.lane.b32.xlu0 %v1999, 120
    %v2281 = vpop.permute.xlu0 %2280
    %2282 = vrot.lane.b32.xlu0 %v2004, 120
    %v2283 = vpop.permute.xlu0 %2282
    %v2284 = vsel %vm423, %v2277, 0
    %v2286 = vsel %vm423, %v2279, 0
    %v2288 = vsel %vm423, %v2281, 0
    %v2290 = vsel %vm423, %v2283, 0
    %2292 = vmatprep.subr.mxu0 0.0
    %2293 = vmatpush1.xpose.msra.mxu0 %v2288
    %2294 = vmatprep.subr.mxu0 0.0
    %2295 = vmatpush1.xpose.msra.mxu0 %v2290
    %2296 = vmatprep.subr.mxu0 0.0
    %2297 = vmatpush1.xpose.msra.mxu0 0.0
    %2298 = vmatprep.subr.mxu0 0.0
    %2299 = vmatpush1.xpose.msra.mxu0 0.0
    %2300 = vmatprep.subr.mxu0 0.0
    %2301 = vmatpush1.xpose.msra.mxu0 0.0
    %2302 = vmatprep.subr.mxu0 0.0
    %2303 = vmatpush1.xpose.msra.mxu0 0.0
    %2304 = vmatprep.subr.mxu0 0.0
    %2305 = vmatpush1.xpose.msra.mxu0 0.0
    %2306 = vmatprep.subr.mxu0 0.0
    %2307 = vmatpush1.xpose.msra.mxu0 0.0
    %2308 = vmatprep.subr.mxu0 0.0
    %2309 = vmatpush1.xpose.msra.mxu0 0.0
    %2310 = vmatprep.subr.mxu0 0.0
    %2311 = vmatpush1.xpose.msra.mxu0 0.0
    %2312 = vmatprep.subr.mxu0 0.0
    %2313 = vmatpush1.xpose.msra.mxu0 0.0
    %2314 = vmatprep.subr.mxu0 0.0
    %2315 = vmatpush1.xpose.msra.mxu0 0.0
    %2316 = vmatprep.subr.mxu0 0.0
    %2317 = vmatpush1.xpose.msra.mxu0 0.0
    %2318 = vmatprep.subr.mxu0 0.0
    %2319 = vmatpush1.xpose.msra.mxu0 0.0
    %2320 = vmatprep.subr.mxu0 0.0
    %2321 = vmatpush1.xpose.msra.mxu0 0.0
    %2322 = vmatprep.subr.mxu0 0.0
    %2323 = vmatpush1.xpose.msra.mxu0 0.0
    %2324 = vmatprep.subr.mxu0 0.0
    %2325 = vmatpush1.xpose.msra.mxu0 0.0
    %2326 = vmatprep.subr.mxu0 0.0
    %2327 = vmatpush1.xpose.msra.mxu0 0.0
    %2328 = vmatprep.subr.mxu0 0.0
    %2329 = vmatpush1.xpose.msra.mxu0 0.0
    %2330 = vmatprep.subr.mxu0 0.0
    %2331 = vmatpush1.xpose.msra.mxu0 0.0
    %2332 = vmatprep.subr.mxu0 0.0
    %2333 = vmatpush1.xpose.msra.mxu0 0.0
    %2334 = vmatprep.subr.mxu0 0.0
    %2335 = vmatpush1.xpose.msra.mxu0 0.0
    %2336 = vmatprep.subr.mxu0 0.0
    %2337 = vmatpush1.xpose.msra.mxu0 0.0
    %2338 = vmatprep.subr.mxu0 0.0
    %2339 = vmatpush1.xpose.msra.mxu0 0.0
    %2340 = vmatprep.subr.mxu0 0.0
    %2341 = vmatpush1.xpose.msra.mxu0 0.0
    %2342 = vmatprep.subr.mxu0 0.0
    %2343 = vmatpush1.xpose.msra.mxu0 0.0
    %2344 = vmatprep.subr.mxu0 0.0
    %2345 = vmatpush1.xpose.msra.mxu0 0.0
    %2346 = vmatprep.subr.mxu0 0.0
    %2347 = vmatpush1.xpose.msra.mxu0 0.0
    %2348 = vmatprep.subr.mxu0 0.0
    %2349 = vmatpush1.xpose.msra.mxu0 0.0
    %2350 = vmatprep.subr.mxu0 0.0
    %2351 = vmatpush1.xpose.msra.mxu0 0.0
    %2352 = vmatprep.subr.mxu0 0.0
    %2353 = vmatpush1.xpose.msra.mxu0 0.0
    %2354 = vmatprep.subr.mxu0 0.0
    %2355 = vmatpush1.xpose.msra.mxu0 0.0
    %2356 = vmatprep.mubr.f32.mxu0 0.0
    %2357 = vmatmul.mubr.f32.gmra.mrb[0].mxu0 %v2284
    %v2358 = vpop.f32.mrb[0].mxu0
    %v2359 = vadd.f32 %v139, %v2358
    %v2360 = vpop.f32.mrb[0].mxu0
    %2361 = vmatprep.mubr.f32.mxu0 0.0
    %2362 = vmatmul.mubr.f32.gmra.mrb[0].mxu0 %v2286
    %v2363 = vpop.f32.mrb[0].mxu0
    %v2364 = vadd.f32 %v140, %v2363
    %v2365 = vpop.f32.mrb[0].mxu0
    %2366 = vdwg.mxu0
    %v2367 = vsel %vm511, %v2359, -inf
    %2368 = vmax.xlane.f32.xlu0 %v2367
    %v2369 = vpop.xlane.xlu0 %2368
    %v2370 = vsel %vm511, %v2364, -inf
    %2371 = vmax.xlane.f32.xlu0 %v2370
    %v2372 = vpop.xlane.xlu0 %2371
    %v2373 = vsub.f32 %v2359, %v2369
    %v2374 = vsub.f32 %v2364, %v2372
    %v2375 = vmul.f32 %v2373, 1.442695
    %v2376 = vpow.pop %v2375
    %v2377 = vmul.f32 %v2374, 1.442695
    %v2378 = vpow.pop %v2377
    %v2379 = vsel %vm511, %v2376, 0.0
    %2380 = vadd.xlane.f32.xlu0 %v2379
    %v2381 = vpop.xlane.xlu0 %2380
    %v2382 = vsel %vm511, %v2378, 0.0
    %2383 = vadd.xlane.f32.xlu0 %v2382
    %v2384 = vpop.xlane.xlu0 %2383
    %v2385 = vrcp.pop %v2381
    %v2386 = vrcp.pop %v2384
    %v2387 = vmul.f32 %v2376, %v2385
    %v2388 = vmul.f32 %v2378, %v2386
    %2391 = vrot.lane.b32.xlu0 %v2078, 120
    %v2392 = vpop.permute.xlu0 %2391
    %2393 = vrot.lane.b32.xlu0 %v2083, 120
    %v2394 = vpop.permute.xlu0 %2393
    %v2398 = vsel %vm511, %v2387, 0
    %v2401 = vsel %vm511, %v2388, 0
    %2403 = vmatprep.subr.mxu0 0.0
    %2404 = vmatpush1.msra.mxu0 %v2392
    %2405 = vmatprep.subr.mxu0 0.0
    %2406 = vmatpush1.msra.mxu0 %v2394
    %2407 = vmatprep.subr.mxu0 0.0
    %2408 = vmatpush1.msra.mxu0 0.0
    %2409 = vmatprep.subr.mxu0 0.0
    %2410 = vmatpush1.msra.mxu0 0.0
    %2411 = vmatprep.subr.mxu0 0.0
    %2412 = vmatpush1.msra.mxu0 0.0
    %2413 = vmatprep.subr.mxu0 0.0
    %2414 = vmatpush1.msra.mxu0 0.0
    %2415 = vmatprep.subr.mxu0 0.0
    %2416 = vmatpush1.msra.mxu0 0.0
    %2417 = vmatprep.subr.mxu0 0.0
    %2418 = vmatpush1.msra.mxu0 0.0
    %2419 = vmatprep.subr.mxu0 0.0
    %2420 = vmatpush1.msra.mxu0 0.0
    %2421 = vmatprep.subr.mxu0 0.0
    %2422 = vmatpush1.msra.mxu0 0.0
    %2423 = vmatprep.subr.mxu0 0.0
    %2424 = vmatpush1.msra.mxu0 0.0
    %2425 = vmatprep.subr.mxu0 0.0
    %2426 = vmatpush1.msra.mxu0 0.0
    %2427 = vmatprep.subr.mxu0 0.0
    %2428 = vmatpush1.msra.mxu0 0.0
    %2429 = vmatprep.subr.mxu0 0.0
    %2430 = vmatpush1.msra.mxu0 0.0
    %2431 = vmatprep.subr.mxu0 0.0
    %2432 = vmatpush1.msra.mxu0 0.0
    %2433 = vmatprep.subr.mxu0 0.0
    %2434 = vmatpush1.msra.mxu0 0.0
    %2435 = vmatprep.subr.mxu0 0.0
    %2436 = vmatpush1.msra.mxu0 0.0
    %2437 = vmatprep.subr.mxu0 0.0
    %2438 = vmatpush1.msra.mxu0 0.0
    %2439 = vmatprep.subr.mxu0 0.0
    %2440 = vmatpush1.msra.mxu0 0.0
    %2441 = vmatprep.subr.mxu0 0.0
    %2442 = vmatpush1.msra.mxu0 0.0
    %2443 = vmatprep.subr.mxu0 0.0
    %2444 = vmatpush1.msra.mxu0 0.0
    %2445 = vmatprep.subr.mxu0 0.0
    %2446 = vmatpush1.msra.mxu0 0.0
    %2447 = vmatprep.subr.mxu0 0.0
    %2448 = vmatpush1.msra.mxu0 0.0
    %2449 = vmatprep.subr.mxu0 0.0
    %2450 = vmatpush1.msra.mxu0 0.0
    %2451 = vmatprep.subr.mxu0 0.0
    %2452 = vmatpush1.msra.mxu0 0.0
    %2453 = vmatprep.subr.mxu0 0.0
    %2454 = vmatpush1.msra.mxu0 0.0
    %2455 = vmatprep.subr.mxu0 0.0
    %2456 = vmatpush1.msra.mxu0 0.0
    %2457 = vmatprep.subr.mxu0 0.0
    %2458 = vmatpush1.msra.mxu0 0.0
    %2459 = vmatprep.subr.mxu0 0.0
    %2460 = vmatpush1.msra.mxu0 0.0
    %2461 = vmatprep.subr.mxu0 0.0
    %2462 = vmatpush1.msra.mxu0 0.0
    %2463 = vmatprep.subr.mxu0 0.0
    %2464 = vmatpush1.msra.mxu0 0.0
    %2465 = vmatprep.subr.mxu0 0.0
    %2466 = vmatpush1.msra.mxu0 0.0
    %2467 = vmatprep.mubr.f32.mxu0 0.0
    %2468 = vmatmul.mubr.f32.gmra.mrb[0].mxu0 %v2398
    %v2469 = vpop.f32.mrb[0].mxu0
    %v2470 = vadd.f32 0.0, %v2469
    %v2471 = vpop.f32.mrb[0].mxu0
    %2472 = vmatprep.mubr.f32.mxu0 0.0
    %2473 = vmatmul.mubr.f32.gmra.mrb[0].mxu0 %v2401
    %v2474 = vpop.f32.mrb[0].mxu0
    %v2475 = vadd.f32 0.0, %v2474
    %v2476 = vpop.f32.mrb[0].mxu0
    %2477 = vdwg.mxu0
    %v2479 = vsel %vm423, %v2470, 0
    %v2482 = vsel %vm423, %v2475, 0
    %2484 = vmatprep.subr.mxu0 0.0
    %2485 = vmatpush1.msra.mxu0 %v1818
    %2486 = vmatprep.subr.mxu0 0.0
    %2487 = vmatpush1.msra.mxu0 0.0
    %2488 = vmatprep.subr.mxu0 0.0
    %2489 = vmatpush1.msra.mxu0 0.0
    %2490 = vmatprep.subr.mxu0 0.0
    %2491 = vmatpush1.msra.mxu0 0.0
    %2492 = vmatprep.subr.mxu0 0.0
    %2493 = vmatpush1.msra.mxu0 0.0
    %2494 = vmatprep.subr.mxu0 0.0
    %2495 = vmatpush1.msra.mxu0 0.0
    %2496 = vmatprep.subr.mxu0 0.0
    %2497 = vmatpush1.msra.mxu0 0.0
    %2498 = vmatprep.subr.mxu0 0.0
    %2499 = vmatpush1.msra.mxu0 0.0
    %2500 = vmatprep.subr.mxu0 0.0
    %2501 = vmatpush1.msra.mxu0 0.0
    %2502 = vmatprep.subr.mxu0 0.0
    %2503 = vmatpush1.msra.mxu0 0.0
    %2504 = vmatprep.subr.mxu0 0.0
    %2505 = vmatpush1.msra.mxu0 0.0
    %2506 = vmatprep.subr.mxu0 0.0
    %2507 = vmatpush1.msra.mxu0 0.0
    %2508 = vmatprep.subr.mxu0 0.0
    %2509 = vmatpush1.msra.mxu0 0.0
    %2510 = vmatprep.subr.mxu0 0.0
    %2511 = vmatpush1.msra.mxu0 0.0
    %2512 = vmatprep.subr.mxu0 0.0
    %2513 = vmatpush1.msra.mxu0 0.0
    %2514 = vmatprep.subr.mxu0 0.0
    %2515 = vmatpush1.msra.mxu0 0.0
    %2516 = vmatprep.subr.mxu0 0.0
    %2517 = vmatpush1.msra.mxu0 0.0
    %2518 = vmatprep.subr.mxu0 0.0
    %2519 = vmatpush1.msra.mxu0 0.0
    %2520 = vmatprep.subr.mxu0 0.0
    %2521 = vmatpush1.msra.mxu0 0.0
    %2522 = vmatprep.subr.mxu0 0.0
    %2523 = vmatpush1.msra.mxu0 0.0
    %2524 = vmatprep.subr.mxu0 0.0
    %2525 = vmatpush1.msra.mxu0 0.0
    %2526 = vmatprep.subr.mxu0 0.0
    %2527 = vmatpush1.msra.mxu0 0.0
    %2528 = vmatprep.subr.mxu0 0.0
    %2529 = vmatpush1.msra.mxu0 0.0
    %2530 = vmatprep.subr.mxu0 0.0
    %2531 = vmatpush1.msra.mxu0 0.0
    %2532 = vmatprep.subr.mxu0 0.0
    %2533 = vmatpush1.msra.mxu0 0.0
    %2534 = vmatprep.subr.mxu0 0.0
    %2535 = vmatpush1.msra.mxu0 0.0
    %2536 = vmatprep.subr.mxu0 0.0
    %2537 = vmatpush1.msra.mxu0 0.0
    %2538 = vmatprep.subr.mxu0 0.0
    %2539 = vmatpush1.msra.mxu0 0.0
    %2540 = vmatprep.subr.mxu0 0.0
    %2541 = vmatpush1.msra.mxu0 0.0
    %2542 = vmatprep.subr.mxu0 0.0
    %2543 = vmatpush1.msra.mxu0 0.0
    %2544 = vmatprep.subr.mxu0 0.0
    %2545 = vmatpush1.msra.mxu0 0.0
    %2546 = vmatprep.subr.mxu0 0.0
    %2547 = vmatpush1.msra.mxu0 0.0
    %2548 = vmatprep.mubr.f32.mxu0 0.0
    %2549 = vmatmul.mubr.f32.gmra.mrb[0].mxu0 %v2479
    %v2550 = vpop.f32.mrb[0].mxu0
    %v2551 = vadd.f32 0.0, %v2550
    %v2552 = vpop.f32.mrb[0].mxu0
    %2553 = vmatprep.mubr.f32.mxu0 0.0
    %2554 = vmatmul.mubr.f32.gmra.mrb[0].mxu0 %v2482
    %v2555 = vpop.f32.mrb[0].mxu0
    %v2556 = vadd.f32 0.0, %v2555
    %v2557 = vpop.f32.mrb[0].mxu0
    %2558 = vdwg.mxu0
    %v2560 = vsel %vm423, %v2268, 0
    %v2563 = vsel %vm423, %v2273, 0
    %2565 = vmatprep.subr.mxu0 0.0
    %2566 = vmatpush1.msra.mxu0 %v1817
    %2567 = vmatprep.subr.mxu0 0.0
    %2568 = vmatpush1.msra.mxu0 0.0
    %2569 = vmatprep.subr.mxu0 0.0
    %2570 = vmatpush1.msra.mxu0 0.0
    %2571 = vmatprep.subr.mxu0 0.0
    %2572 = vmatpush1.msra.mxu0 0.0
    %2573 = vmatprep.subr.mxu0 0.0
    %2574 = vmatpush1.msra.mxu0 0.0
    %2575 = vmatprep.subr.mxu0 0.0
    %2576 = vmatpush1.msra.mxu0 0.0
    %2577 = vmatprep.subr.mxu0 0.0
    %2578 = vmatpush1.msra.mxu0 0.0
    %2579 = vmatprep.subr.mxu0 0.0
    %2580 = vmatpush1.msra.mxu0 0.0
    %2581 = vmatprep.subr.mxu0 0.0
    %2582 = vmatpush1.msra.mxu0 0.0
    %2583 = vmatprep.subr.mxu0 0.0
    %2584 = vmatpush1.msra.mxu0 0.0
    %2585 = vmatprep.subr.mxu0 0.0
    %2586 = vmatpush1.msra.mxu0 0.0
    %2587 = vmatprep.subr.mxu0 0.0
    %2588 = vmatpush1.msra.mxu0 0.0
    %2589 = vmatprep.subr.mxu0 0.0
    %2590 = vmatpush1.msra.mxu0 0.0
    %2591 = vmatprep.subr.mxu0 0.0
    %2592 = vmatpush1.msra.mxu0 0.0
    %2593 = vmatprep.subr.mxu0 0.0
    %2594 = vmatpush1.msra.mxu0 0.0
    %2595 = vmatprep.subr.mxu0 0.0
    %2596 = vmatpush1.msra.mxu0 0.0
    %2597 = vmatprep.subr.mxu0 0.0
    %2598 = vmatpush1.msra.mxu0 0.0
    %2599 = vmatprep.subr.mxu0 0.0
    %2600 = vmatpush1.msra.mxu0 0.0
    %2601 = vmatprep.subr.mxu0 0.0
    %2602 = vmatpush1.msra.mxu0 0.0
    %2603 = vmatprep.subr.mxu0 0.0
    %2604 = vmatpush1.msra.mxu0 0.0
    %2605 = vmatprep.subr.mxu0 0.0
    %2606 = vmatpush1.msra.mxu0 0.0
    %2607 = vmatprep.subr.mxu0 0.0
    %2608 = vmatpush1.msra.mxu0 0.0
    %2609 = vmatprep.subr.mxu0 0.0
    %2610 = vmatpush1.msra.mxu0 0.0
    %2611 = vmatprep.subr.mxu0 0.0
    %2612 = vmatpush1.msra.mxu0 0.0
    %2613 = vmatprep.subr.mxu0 0.0
    %2614 = vmatpush1.msra.mxu0 0.0
    %2615 = vmatprep.subr.mxu0 0.0
    %2616 = vmatpush1.msra.mxu0 0.0
    %2617 = vmatprep.subr.mxu0 0.0
    %2618 = vmatpush1.msra.mxu0 0.0
    %2619 = vmatprep.subr.mxu0 0.0
    %2620 = vmatpush1.msra.mxu0 0.0
    %2621 = vmatprep.subr.mxu0 0.0
    %2622 = vmatpush1.msra.mxu0 0.0
    %2623 = vmatprep.subr.mxu0 0.0
    %2624 = vmatpush1.msra.mxu0 0.0
    %2625 = vmatprep.subr.mxu0 0.0
    %2626 = vmatpush1.msra.mxu0 0.0
    %2627 = vmatprep.subr.mxu0 0.0
    %2628 = vmatpush1.msra.mxu0 0.0
    %2629 = vmatprep.mubr.f32.mxu0 0.0
    %2630 = vmatmul.mubr.f32.gmra.mrb[0].mxu0 %v2560
    %v2631 = vpop.f32.mrb[0].mxu0
    %v2632 = vadd.f32 %v2551, %v2631
    %v2633 = vpop.f32.mrb[0].mxu0
    %2634 = vmatprep.mubr.f32.mxu0 0.0
    %2635 = vmatmul.mubr.f32.gmra.mrb[0].mxu0 %v2563
    %v2636 = vpop.f32.mrb[0].mxu0
    %v2637 = vadd.f32 %v2556, %v2636
    %v2638 = vpop.f32.mrb[0].mxu0
    %2639 = vdwg.mxu0
    %2640 = vrot.lane.b32.xlu0 %v1920, 112
    %v2641 = vpop.permute.xlu0 %2640
    %2642 = vrot.lane.b32.xlu0 %v1925, 112
    %v2643 = vpop.permute.xlu0 %2642
    %2644 = vrot.lane.b32.xlu0 %v1999, 112
    %v2645 = vpop.permute.xlu0 %2644
    %2646 = vrot.lane.b32.xlu0 %v2004, 112
    %v2647 = vpop.permute.xlu0 %2646
    %v2648 = vsel %vm423, %v2641, 0
    %v2650 = vsel %vm423, %v2643, 0
    %v2652 = vsel %vm423, %v2645, 0
    %v2654 = vsel %vm423, %v2647, 0
    %2656 = vmatprep.subr.mxu0 0.0
    %2657 = vmatpush1.xpose.msra.mxu0 %v2652
    %2658 = vmatprep.subr.mxu0 0.0
    %2659 = vmatpush1.xpose.msra.mxu0 %v2654
    %2660 = vmatprep.subr.mxu0 0.0
    %2661 = vmatpush1.xpose.msra.mxu0 0.0
    %2662 = vmatprep.subr.mxu0 0.0
    %2663 = vmatpush1.xpose.msra.mxu0 0.0
    %2664 = vmatprep.subr.mxu0 0.0
    %2665 = vmatpush1.xpose.msra.mxu0 0.0
    %2666 = vmatprep.subr.mxu0 0.0
    %2667 = vmatpush1.xpose.msra.mxu0 0.0
    %2668 = vmatprep.subr.mxu0 0.0
    %2669 = vmatpush1.xpose.msra.mxu0 0.0
    %2670 = vmatprep.subr.mxu0 0.0
    %2671 = vmatpush1.xpose.msra.mxu0 0.0
    %2672 = vmatprep.subr.mxu0 0.0
    %2673 = vmatpush1.xpose.msra.mxu0 0.0
    %2674 = vmatprep.subr.mxu0 0.0
    %2675 = vmatpush1.xpose.msra.mxu0 0.0
    %2676 = vmatprep.subr.mxu0 0.0
    %2677 = vmatpush1.xpose.msra.mxu0 0.0
    %2678 = vmatprep.subr.mxu0 0.0
    %2679 = vmatpush1.xpose.msra.mxu0 0.0
    %2680 = vmatprep.subr.mxu0 0.0
    %2681 = vmatpush1.xpose.msra.mxu0 0.0
    %2682 = vmatprep.subr.mxu0 0.0
    %2683 = vmatpush1.xpose.msra.mxu0 0.0
    %2684 = vmatprep.subr.mxu0 0.0
    %2685 = vmatpush1.xpose.msra.mxu0 0.0
    %2686 = vmatprep.subr.mxu0 0.0
    %2687 = vmatpush1.xpose.msra.mxu0 0.0
    %2688 = vmatprep.subr.mxu0 0.0
    %2689 = vmatpush1.xpose.msra.mxu0 0.0
    %2690 = vmatprep.subr.mxu0 0.0
    %2691 = vmatpush1.xpose.msra.mxu0 0.0
    %2692 = vmatprep.subr.mxu0 0.0
    %2693 = vmatpush1.xpose.msra.mxu0 0.0
    %2694 = vmatprep.subr.mxu0 0.0
    %2695 = vmatpush1.xpose.msra.mxu0 0.0
    %2696 = vmatprep.subr.mxu0 0.0
    %2697 = vmatpush1.xpose.msra.mxu0 0.0
    %2698 = vmatprep.subr.mxu0 0.0
    %2699 = vmatpush1.xpose.msra.mxu0 0.0
    %2700 = vmatprep.subr.mxu0 0.0
    %2701 = vmatpush1.xpose.msra.mxu0 0.0
    %2702 = vmatprep.subr.mxu0 0.0
    %2703 = vmatpush1.xpose.msra.mxu0 0.0
    %2704 = vmatprep.subr.mxu0 0.0
    %2705 = vmatpush1.xpose.msra.mxu0 0.0
    %2706 = vmatprep.subr.mxu0 0.0
    %2707 = vmatpush1.xpose.msra.mxu0 0.0
    %2708 = vmatprep.subr.mxu0 0.0
    %2709 = vmatpush1.xpose.msra.mxu0 0.0
    %2710 = vmatprep.subr.mxu0 0.0
    %2711 = vmatpush1.xpose.msra.mxu0 0.0
    %2712 = vmatprep.subr.mxu0 0.0
    %2713 = vmatpush1.xpose.msra.mxu0 0.0
    %2714 = vmatprep.subr.mxu0 0.0
    %2715 = vmatpush1.xpose.msra.mxu0 0.0
    %2716 = vmatprep.subr.mxu0 0.0
    %2717 = vmatpush1.xpose.msra.mxu0 0.0
    %2718 = vmatprep.subr.mxu0 0.0
    %2719 = vmatpush1.xpose.msra.mxu0 0.0
    %2720 = vmatprep.mubr.f32.mxu0 0.0
    %2721 = vmatmul.mubr.f32.gmra.mrb[0].mxu0 %v2648
    %v2722 = vpop.f32.mrb[0].mxu0
    %v2723 = vadd.f32 %v139, %v2722
    %v2724 = vpop.f32.mrb[0].mxu0
    %2725 = vmatprep.mubr.f32.mxu0 0.0
    %2726 = vmatmul.mubr.f32.gmra.mrb[0].mxu0 %v2650
    %v2727 = vpop.f32.mrb[0].mxu0
    %v2728 = vadd.f32 %v140, %v2727
    %v2729 = vpop.f32.mrb[0].mxu0
    %2730 = vdwg.mxu0
    %v2731 = vsel %vm511, %v2723, -inf
    %2732 = vmax.xlane.f32.xlu0 %v2731
    %v2733 = vpop.xlane.xlu0 %2732
    %v2734 = vsel %vm511, %v2728, -inf
    %2735 = vmax.xlane.f32.xlu0 %v2734
    %v2736 = vpop.xlane.xlu0 %2735
    %v2737 = vsub.f32 %v2723, %v2733
    %v2738 = vsub.f32 %v2728, %v2736
    %v2739 = vmul.f32 %v2737, 1.442695
    %v2740 = vpow.pop %v2739
    %v2741 = vmul.f32 %v2738, 1.442695
    %v2742 = vpow.pop %v2741
    %v2743 = vsel %vm511, %v2740, 0.0
    %2744 = vadd.xlane.f32.xlu0 %v2743
    %v2745 = vpop.xlane.xlu0 %2744
    %v2746 = vsel %vm511, %v2742, 0.0
    %2747 = vadd.xlane.f32.xlu0 %v2746
    %v2748 = vpop.xlane.xlu0 %2747
    %v2749 = vrcp.pop %v2745
    %v2750 = vrcp.pop %v2748
    %v2751 = vmul.f32 %v2740, %v2749
    %v2752 = vmul.f32 %v2742, %v2750
    %2753 = vrot.lane.b32.xlu0 %v2078, 112
    %v2754 = vpop.permute.xlu0 %2753
    %2755 = vrot.lane.b32.xlu0 %v2083, 112
    %v2756 = vpop.permute.xlu0 %2755
    %v2760 = vsel %vm511, %v2751, 0
    %v2763 = vsel %vm511, %v2752, 0
    %2765 = vmatprep.subr.mxu0 0.0
    %2766 = vmatpush1.msra.mxu0 %v2754
    %2767 = vmatprep.subr.mxu0 0.0
    %2768 = vmatpush1.msra.mxu0 %v2756
    %2769 = vmatprep.subr.mxu0 0.0
    %2770 = vmatpush1.msra.mxu0 0.0
    %2771 = vmatprep.subr.mxu0 0.0
    %2772 = vmatpush1.msra.mxu0 0.0
    %2773 = vmatprep.subr.mxu0 0.0
    %2774 = vmatpush1.msra.mxu0 0.0
    %2775 = vmatprep.subr.mxu0 0.0
    %2776 = vmatpush1.msra.mxu0 0.0
    %2777 = vmatprep.subr.mxu0 0.0
    %2778 = vmatpush1.msra.mxu0 0.0
    %2779 = vmatprep.subr.mxu0 0.0
    %2780 = vmatpush1.msra.mxu0 0.0
    %2781 = vmatprep.subr.mxu0 0.0
    %2782 = vmatpush1.msra.mxu0 0.0
    %2783 = vmatprep.subr.mxu0 0.0
    %2784 = vmatpush1.msra.mxu0 0.0
    %2785 = vmatprep.subr.mxu0 0.0
    %2786 = vmatpush1.msra.mxu0 0.0
    %2787 = vmatprep.subr.mxu0 0.0
    %2788 = vmatpush1.msra.mxu0 0.0
    %2789 = vmatprep.subr.mxu0 0.0
    %2790 = vmatpush1.msra.mxu0 0.0
    %2791 = vmatprep.subr.mxu0 0.0
    %2792 = vmatpush1.msra.mxu0 0.0
    %2793 = vmatprep.subr.mxu0 0.0
    %2794 = vmatpush1.msra.mxu0 0.0
    %2795 = vmatprep.subr.mxu0 0.0
    %2796 = vmatpush1.msra.mxu0 0.0
    %2797 = vmatprep.subr.mxu0 0.0
    %2798 = vmatpush1.msra.mxu0 0.0
    %2799 = vmatprep.subr.mxu0 0.0
    %2800 = vmatpush1.msra.mxu0 0.0
    %2801 = vmatprep.subr.mxu0 0.0
    %2802 = vmatpush1.msra.mxu0 0.0
    %2803 = vmatprep.subr.mxu0 0.0
    %2804 = vmatpush1.msra.mxu0 0.0
    %2805 = vmatprep.subr.mxu0 0.0
    %2806 = vmatpush1.msra.mxu0 0.0
    %2807 = vmatprep.subr.mxu0 0.0
    %2808 = vmatpush1.msra.mxu0 0.0
    %2809 = vmatprep.subr.mxu0 0.0
    %2810 = vmatpush1.msra.mxu0 0.0
    %2811 = vmatprep.subr.mxu0 0.0
    %2812 = vmatpush1.msra.mxu0 0.0
    %2813 = vmatprep.subr.mxu0 0.0
    %2814 = vmatpush1.msra.mxu0 0.0
    %2815 = vmatprep.subr.mxu0 0.0
    %2816 = vmatpush1.msra.mxu0 0.0
    %2817 = vmatprep.subr.mxu0 0.0
    %2818 = vmatpush1.msra.mxu0 0.0
    %2819 = vmatprep.subr.mxu0 0.0
    %2820 = vmatpush1.msra.mxu0 0.0
    %2821 = vmatprep.subr.mxu0 0.0
    %2822 = vmatpush1.msra.mxu0 0.0
    %2823 = vmatprep.subr.mxu0 0.0
    %2824 = vmatpush1.msra.mxu0 0.0
    %2825 = vmatprep.subr.mxu0 0.0
    %2826 = vmatpush1.msra.mxu0 0.0
    %2827 = vmatprep.subr.mxu0 0.0
    %2828 = vmatpush1.msra.mxu0 0.0
    %2829 = vmatprep.mubr.f32.mxu0 0.0
    %2830 = vmatmul.mubr.f32.gmra.mrb[0].mxu0 %v2760
    %v2831 = vpop.f32.mrb[0].mxu0
    %v2832 = vadd.f32 0.0, %v2831
    %v2833 = vpop.f32.mrb[0].mxu0
    %2834 = vmatprep.mubr.f32.mxu0 0.0
    %2835 = vmatmul.mubr.f32.gmra.mrb[0].mxu0 %v2763
    %v2836 = vpop.f32.mrb[0].mxu0
    %v2837 = vadd.f32 0.0, %v2836
    %v2838 = vpop.f32.mrb[0].mxu0
    %2839 = vdwg.mxu0
    %v2841 = vsel %vm423, %v2832, 0
    %v2844 = vsel %vm423, %v2837, 0
    %2846 = vmatprep.subr.mxu0 0.0
    %2847 = vmatpush1.msra.mxu0 %v1819
    %2848 = vmatprep.subr.mxu0 0.0
    %2849 = vmatpush1.msra.mxu0 0.0
    %2850 = vmatprep.subr.mxu0 0.0
    %2851 = vmatpush1.msra.mxu0 0.0
    %2852 = vmatprep.subr.mxu0 0.0
    %2853 = vmatpush1.msra.mxu0 0.0
    %2854 = vmatprep.subr.mxu0 0.0
    %2855 = vmatpush1.msra.mxu0 0.0
    %2856 = vmatprep.subr.mxu0 0.0
    %2857 = vmatpush1.msra.mxu0 0.0
    %2858 = vmatprep.subr.mxu0 0.0
    %2859 = vmatpush1.msra.mxu0 0.0
    %2860 = vmatprep.subr.mxu0 0.0
    %2861 = vmatpush1.msra.mxu0 0.0
    %2862 = vmatprep.subr.mxu0 0.0
    %2863 = vmatpush1.msra.mxu0 0.0
    %2864 = vmatprep.subr.mxu0 0.0
    %2865 = vmatpush1.msra.mxu0 0.0
    %2866 = vmatprep.subr.mxu0 0.0
    %2867 = vmatpush1.msra.mxu0 0.0
    %2868 = vmatprep.subr.mxu0 0.0
    %2869 = vmatpush1.msra.mxu0 0.0
    %2870 = vmatprep.subr.mxu0 0.0
    %2871 = vmatpush1.msra.mxu0 0.0
    %2872 = vmatprep.subr.mxu0 0.0
    %2873 = vmatpush1.msra.mxu0 0.0
    %2874 = vmatprep.subr.mxu0 0.0
    %2875 = vmatpush1.msra.mxu0 0.0
    %2876 = vmatprep.subr.mxu0 0.0
    %2877 = vmatpush1.msra.mxu0 0.0
    %2878 = vmatprep.subr.mxu0 0.0
    %2879 = vmatpush1.msra.mxu0 0.0
    %2880 = vmatprep.subr.mxu0 0.0
    %2881 = vmatpush1.msra.mxu0 0.0
    %2882 = vmatprep.subr.mxu0 0.0
    %2883 = vmatpush1.msra.mxu0 0.0
    %2884 = vmatprep.subr.mxu0 0.0
    %2885 = vmatpush1.msra.mxu0 0.0
    %2886 = vmatprep.subr.mxu0 0.0
    %2887 = vmatpush1.msra.mxu0 0.0
    %2888 = vmatprep.subr.mxu0 0.0
    %2889 = vmatpush1.msra.mxu0 0.0
    %2890 = vmatprep.subr.mxu0 0.0
    %2891 = vmatpush1.msra.mxu0 0.0
    %2892 = vmatprep.subr.mxu0 0.0
    %2893 = vmatpush1.msra.mxu0 0.0
    %2894 = vmatprep.subr.mxu0 0.0
    %2895 = vmatpush1.msra.mxu0 0.0
    %2896 = vmatprep.subr.mxu0 0.0
    %2897 = vmatpush1.msra.mxu0 0.0
    %2898 = vmatprep.subr.mxu0 0.0
    %2899 = vmatpush1.msra.mxu0 0.0
    %2900 = vmatprep.subr.mxu0 0.0
    %2901 = vmatpush1.msra.mxu0 0.0
    %2902 = vmatprep.subr.mxu0 0.0
    %2903 = vmatpush1.msra.mxu0 0.0
    %2904 = vmatprep.subr.mxu0 0.0
    %2905 = vmatpush1.msra.mxu0 0.0
    %2906 = vmatprep.subr.mxu0 0.0
    %2907 = vmatpush1.msra.mxu0 0.0
    %2908 = vmatprep.subr.mxu0 0.0
    %2909 = vmatpush1.msra.mxu0 0.0
    %2910 = vmatprep.mubr.f32.mxu0 0.0
    %2911 = vmatmul.mubr.f32.gmra.mrb[0].mxu0 %v2841
    %v2912 = vpop.f32.mrb[0].mxu0
    %v2913 = vadd.f32 0.0, %v2912
    %v2914 = vpop.f32.mrb[0].mxu0
    %2915 = vmatprep.mubr.f32.mxu0 0.0
    %2916 = vmatmul.mubr.f32.gmra.mrb[0].mxu0 %v2844
    %v2917 = vpop.f32.mrb[0].mxu0
    %v2918 = vadd.f32 0.0, %v2917
    %v2919 = vpop.f32.mrb[0].mxu0
    %2920 = vdwg.mxu0
    %v2921 = vadd.f32 %v2632, %v2913
    %v2922 = vadd.f32 %v2637, %v2918
    %2923 = vrot.lane.b32.xlu0 %v1920, 104
    %v2924 = vpop.permute.xlu0 %2923
    %2925 = vrot.lane.b32.xlu0 %v1925, 104
    %v2926 = vpop.permute.xlu0 %2925
    %2927 = vrot.lane.b32.xlu0 %v1999, 104
    %v2928 = vpop.permute.xlu0 %2927
    %2929 = vrot.lane.b32.xlu0 %v2004, 104
    %v2930 = vpop.permute.xlu0 %2929
    %v2931 = vsel %vm423, %v2924, 0
    %v2933 = vsel %vm423, %v2926, 0
    %v2935 = vsel %vm423, %v2928, 0
    %v2937 = vsel %vm423, %v2930, 0
    %2939 = vmatprep.subr.mxu0 0.0
    %2940 = vmatpush1.xpose.msra.mxu0 %v2935
    %2941 = vmatprep.subr.mxu0 0.0
    %2942 = vmatpush1.xpose.msra.mxu0 %v2937
    %2943 = vmatprep.subr.mxu0 0.0
    %2944 = vmatpush1.xpose.msra.mxu0 0.0
    %2945 = vmatprep.subr.mxu0 0.0
    %2946 = vmatpush1.xpose.msra.mxu0 0.0
    %2947 = vmatprep.subr.mxu0 0.0
    %2948 = vmatpush1.xpose.msra.mxu0 0.0
    %2949 = vmatprep.subr.mxu0 0.0
    %2950 = vmatpush1.xpose.msra.mxu0 0.0
    %2951 = vmatprep.subr.mxu0 0.0
    %2952 = vmatpush1.xpose.msra.mxu0 0.0
    %2953 = vmatprep.subr.mxu0 0.0
    %2954 = vmatpush1.xpose.msra.mxu0 0.0
    %2955 = vmatprep.subr.mxu0 0.0
    %2956 = vmatpush1.xpose.msra.mxu0 0.0
    %2957 = vmatprep.subr.mxu0 0.0
    %2958 = vmatpush1.xpose.msra.mxu0 0.0
    %2959 = vmatprep.subr.mxu0 0.0
    %2960 = vmatpush1.xpose.msra.mxu0 0.0
    %2961 = vmatprep.subr.mxu0 0.0
    %2962 = vmatpush1.xpose.msra.mxu0 0.0
    %2963 = vmatprep.subr.mxu0 0.0
    %2964 = vmatpush1.xpose.msra.mxu0 0.0
    %2965 = vmatprep.subr.mxu0 0.0
    %2966 = vmatpush1.xpose.msra.mxu0 0.0
    %2967 = vmatprep.subr.mxu0 0.0
    %2968 = vmatpush1.xpose.msra.mxu0 0.0
    %2969 = vmatprep.subr.mxu0 0.0
    %2970 = vmatpush1.xpose.msra.mxu0 0.0
    %2971 = vmatprep.subr.mxu0 0.0
    %2972 = vmatpush1.xpose.msra.mxu0 0.0
    %2973 = vmatprep.subr.mxu0 0.0
    %2974 = vmatpush1.xpose.msra.mxu0 0.0
    %2975 = vmatprep.subr.mxu0 0.0
    %2976 = vmatpush1.xpose.msra.mxu0 0.0
    %2977 = vmatprep.subr.mxu0 0.0
    %2978 = vmatpush1.xpose.msra.mxu0 0.0
    %2979 = vmatprep.subr.mxu0 0.0
    %2980 = vmatpush1.xpose.msra.mxu0 0.0
    %2981 = vmatprep.subr.mxu0 0.0
    %2982 = vmatpush1.xpose.msra.mxu0 0.0
    %2983 = vmatprep.subr.mxu0 0.0
    %2984 = vmatpush1.xpose.msra.mxu0 0.0
    %2985 = vmatprep.subr.mxu0 0.0
    %2986 = vmatpush1.xpose.msra.mxu0 0.0
    %2987 = vmatprep.subr.mxu0 0.0
    %2988 = vmatpush1.xpose.msra.mxu0 0.0
    %2989 = vmatprep.subr.mxu0 0.0
    %2990 = vmatpush1.xpose.msra.mxu0 0.0
    %2991 = vmatprep.subr.mxu0 0.0
    %2992 = vmatpush1.xpose.msra.mxu0 0.0
    %2993 = vmatprep.subr.mxu0 0.0
    %2994 = vmatpush1.xpose.msra.mxu0 0.0
    %2995 = vmatprep.subr.mxu0 0.0
    %2996 = vmatpush1.xpose.msra.mxu0 0.0
    %2997 = vmatprep.subr.mxu0 0.0
    %2998 = vmatpush1.xpose.msra.mxu0 0.0
    %2999 = vmatprep.subr.mxu0 0.0
    %3000 = vmatpush1.xpose.msra.mxu0 0.0
    %3001 = vmatprep.subr.mxu0 0.0
    %3002 = vmatpush1.xpose.msra.mxu0 0.0
    %3003 = vmatprep.mubr.f32.mxu0 0.0
    %3004 = vmatmul.mubr.f32.gmra.mrb[0].mxu0 %v2931
    %v3005 = vpop.f32.mrb[0].mxu0
    %v3006 = vadd.f32 %v139, %v3005
    %v3007 = vpop.f32.mrb[0].mxu0
    %3008 = vmatprep.mubr.f32.mxu0 0.0
    %3009 = vmatmul.mubr.f32.gmra.mrb[0].mxu0 %v2933
    %v3010 = vpop.f32.mrb[0].mxu0
    %v3011 = vadd.f32 %v140, %v3010
    %v3012 = vpop.f32.mrb[0].mxu0
    %3013 = vdwg.mxu0
    %v3014 = vsel %vm511, %v3006, -inf
    %3015 = vmax.xlane.f32.xlu0 %v3014
    %v3016 = vpop.xlane.xlu0 %3015
    %v3017 = vsel %vm511, %v3011, -inf
    %3018 = vmax.xlane.f32.xlu0 %v3017
    %v3019 = vpop.xlane.xlu0 %3018
    %v3020 = vsub.f32 %v3006, %v3016
    %v3021 = vsub.f32 %v3011, %v3019
    %v3022 = vmul.f32 %v3020, 1.442695
    %v3023 = vpow.pop %v3022
    %v3024 = vmul.f32 %v3021, 1.442695
    %v3025 = vpow.pop %v3024
    %v3026 = vsel %vm511, %v3023, 0.0
    %3027 = vadd.xlane.f32.xlu0 %v3026
    %v3028 = vpop.xlane.xlu0 %3027
    %v3029 = vsel %vm511, %v3025, 0.0
    %3030 = vadd.xlane.f32.xlu0 %v3029
    %v3031 = vpop.xlane.xlu0 %3030
    %v3032 = vrcp.pop %v3028
    %v3033 = vrcp.pop %v3031
    %v3034 = vmul.f32 %v3023, %v3032
    %v3035 = vmul.f32 %v3025, %v3033
    %3036 = vrot.lane.b32.xlu0 %v2078, 104
    %v3037 = vpop.permute.xlu0 %3036
    %3038 = vrot.lane.b32.xlu0 %v2083, 104
    %v3039 = vpop.permute.xlu0 %3038
    %v3043 = vsel %vm511, %v3034, 0
    %v3046 = vsel %vm511, %v3035, 0
    %3048 = vmatprep.subr.mxu0 0.0
    %3049 = vmatpush1.msra.mxu0 %v3037
    %3050 = vmatprep.subr.mxu0 0.0
    %3051 = vmatpush1.msra.mxu0 %v3039
    %3052 = vmatprep.subr.mxu0 0.0
    %3053 = vmatpush1.msra.mxu0 0.0
    %3054 = vmatprep.subr.mxu0 0.0
    %3055 = vmatpush1.msra.mxu0 0.0
    %3056 = vmatprep.subr.mxu0 0.0
    %3057 = vmatpush1.msra.mxu0 0.0
    %3058 = vmatprep.subr.mxu0 0.0
    %3059 = vmatpush1.msra.mxu0 0.0
    %3060 = vmatprep.subr.mxu0 0.0
    %3061 = vmatpush1.msra.mxu0 0.0
    %3062 = vmatprep.subr.mxu0 0.0
    %3063 = vmatpush1.msra.mxu0 0.0
    %3064 = vmatprep.subr.mxu0 0.0
    %3065 = vmatpush1.msra.mxu0 0.0
    %3066 = vmatprep.subr.mxu0 0.0
    %3067 = vmatpush1.msra.mxu0 0.0
    %3068 = vmatprep.subr.mxu0 0.0
    %3069 = vmatpush1.msra.mxu0 0.0
    %3070 = vmatprep.subr.mxu0 0.0
    %3071 = vmatpush1.msra.mxu0 0.0
    %3072 = vmatprep.subr.mxu0 0.0
    %3073 = vmatpush1.msra.mxu0 0.0
    %3074 = vmatprep.subr.mxu0 0.0
    %3075 = vmatpush1.msra.mxu0 0.0
    %3076 = vmatprep.subr.mxu0 0.0
    %3077 = vmatpush1.msra.mxu0 0.0
    %3078 = vmatprep.subr.mxu0 0.0
    %3079 = vmatpush1.msra.mxu0 0.0
    %3080 = vmatprep.subr.mxu0 0.0
    %3081 = vmatpush1.msra.mxu0 0.0
    %3082 = vmatprep.subr.mxu0 0.0
    %3083 = vmatpush1.msra.mxu0 0.0
    %3084 = vmatprep.subr.mxu0 0.0
    %3085 = vmatpush1.msra.mxu0 0.0
    %3086 = vmatprep.subr.mxu0 0.0
    %3087 = vmatpush1.msra.mxu0 0.0
    %3088 = vmatprep.subr.mxu0 0.0
    %3089 = vmatpush1.msra.mxu0 0.0
    %3090 = vmatprep.subr.mxu0 0.0
    %3091 = vmatpush1.msra.mxu0 0.0
    %3092 = vmatprep.subr.mxu0 0.0
    %3093 = vmatpush1.msra.mxu0 0.0
    %3094 = vmatprep.subr.mxu0 0.0
    %3095 = vmatpush1.msra.mxu0 0.0
    %3096 = vmatprep.subr.mxu0 0.0
    %3097 = vmatpush1.msra.mxu0 0.0
    %3098 = vmatprep.subr.mxu0 0.0
    %3099 = vmatpush1.msra.mxu0 0.0
    %3100 = vmatprep.subr.mxu0 0.0
    %3101 = vmatpush1.msra.mxu0 0.0
    %3102 = vmatprep.subr.mxu0 0.0
    %3103 = vmatpush1.msra.mxu0 0.0
    %3104 = vmatprep.subr.mxu0 0.0
    %3105 = vmatpush1.msra.mxu0 0.0
    %3106 = vmatprep.subr.mxu0 0.0
    %3107 = vmatpush1.msra.mxu0 0.0
    %3108 = vmatprep.subr.mxu0 0.0
    %3109 = vmatpush1.msra.mxu0 0.0
    %3110 = vmatprep.subr.mxu0 0.0
    %3111 = vmatpush1.msra.mxu0 0.0
    %3112 = vmatprep.mubr.f32.mxu0 0.0
    %3113 = vmatmul.mubr.f32.gmra.mrb[0].mxu0 %v3043
    %v3114 = vpop.f32.mrb[0].mxu0
    %v3115 = vadd.f32 0.0, %v3114
    %v3116 = vpop.f32.mrb[0].mxu0
    %3117 = vmatprep.mubr.f32.mxu0 0.0
    %3118 = vmatmul.mubr.f32.gmra.mrb[0].mxu0 %v3046
    %v3119 = vpop.f32.mrb[0].mxu0
    %v3120 = vadd.f32 0.0, %v3119
    %v3121 = vpop.f32.mrb[0].mxu0
    %3122 = vdwg.mxu0
    %v3124 = vsel %vm423, %v3115, 0
    %v3127 = vsel %vm423, %v3120, 0
    %3129 = vmatprep.subr.mxu0 0.0
    %3130 = vmatpush1.msra.mxu0 %v1820
    %3131 = vmatprep.subr.mxu0 0.0
    %3132 = vmatpush1.msra.mxu0 0.0
    %3133 = vmatprep.subr.mxu0 0.0
    %3134 = vmatpush1.msra.mxu0 0.0
    %3135 = vmatprep.subr.mxu0 0.0
    %3136 = vmatpush1.msra.mxu0 0.0
    %3137 = vmatprep.subr.mxu0 0.0
    %3138 = vmatpush1.msra.mxu0 0.0
    %3139 = vmatprep.subr.mxu0 0.0
    %3140 = vmatpush1.msra.mxu0 0.0
    %3141 = vmatprep.subr.mxu0 0.0
    %3142 = vmatpush1.msra.mxu0 0.0
    %3143 = vmatprep.subr.mxu0 0.0
    %3144 = vmatpush1.msra.mxu0 0.0
    %3145 = vmatprep.subr.mxu0 0.0
    %3146 = vmatpush1.msra.mxu0 0.0
    %3147 = vmatprep.subr.mxu0 0.0
    %3148 = vmatpush1.msra.mxu0 0.0
    %3149 = vmatprep.subr.mxu0 0.0
    %3150 = vmatpush1.msra.mxu0 0.0
    %3151 = vmatprep.subr.mxu0 0.0
    %3152 = vmatpush1.msra.mxu0 0.0
    %3153 = vmatprep.subr.mxu0 0.0
    %3154 = vmatpush1.msra.mxu0 0.0
    %3155 = vmatprep.subr.mxu0 0.0
    %3156 = vmatpush1.msra.mxu0 0.0
    %3157 = vmatprep.subr.mxu0 0.0
    %3158 = vmatpush1.msra.mxu0 0.0
    %3159 = vmatprep.subr.mxu0 0.0
    %3160 = vmatpush1.msra.mxu0 0.0
    %3161 = vmatprep.subr.mxu0 0.0
    %3162 = vmatpush1.msra.mxu0 0.0
    %3163 = vmatprep.subr.mxu0 0.0
    %3164 = vmatpush1.msra.mxu0 0.0
    %3165 = vmatprep.subr.mxu0 0.0
    %3166 = vmatpush1.msra.mxu0 0.0
    %3167 = vmatprep.subr.mxu0 0.0
    %3168 = vmatpush1.msra.mxu0 0.0
    %3169 = vmatprep.subr.mxu0 0.0
    %3170 = vmatpush1.msra.mxu0 0.0
    %3171 = vmatprep.subr.mxu0 0.0
    %3172 = vmatpush1.msra.mxu0 0.0
    %3173 = vmatprep.subr.mxu0 0.0
    %3174 = vmatpush1.msra.mxu0 0.0
    %3175 = vmatprep.subr.mxu0 0.0
    %3176 = vmatpush1.msra.mxu0 0.0
    %3177 = vmatprep.subr.mxu0 0.0
    %3178 = vmatpush1.msra.mxu0 0.0
    %3179 = vmatprep.subr.mxu0 0.0
    %3180 = vmatpush1.msra.mxu0 0.0
    %3181 = vmatprep.subr.mxu0 0.0
    %3182 = vmatpush1.msra.mxu0 0.0
    %3183 = vmatprep.subr.mxu0 0.0
    %3184 = vmatpush1.msra.mxu0 0.0
    %3185 = vmatprep.subr.mxu0 0.0
    %3186 = vmatpush1.msra.mxu0 0.0
    %3187 = vmatprep.subr.mxu0 0.0
    %3188 = vmatpush1.msra.mxu0 0.0
    %3189 = vmatprep.subr.mxu0 0.0
    %3190 = vmatpush1.msra.mxu0 0.0
    %3191 = vmatprep.subr.mxu0 0.0
    %3192 = vmatpush1.msra.mxu0 0.0
    %3193 = vmatprep.mubr.f32.mxu0 0.0
    %3194 = vmatmul.mubr.f32.gmra.mrb[0].mxu0 %v3124
    %v3195 = vpop.f32.mrb[0].mxu0
    %v3196 = vadd.f32 0.0, %v3195
    %v3197 = vpop.f32.mrb[0].mxu0
    %3198 = vmatprep.mubr.f32.mxu0 0.0
    %3199 = vmatmul.mubr.f32.gmra.mrb[0].mxu0 %v3127
    %v3200 = vpop.f32.mrb[0].mxu0
    %v3201 = vadd.f32 0.0, %v3200
    %v3202 = vpop.f32.mrb[0].mxu0
    %3203 = vdwg.mxu0
    %v3204 = vadd.f32 %v2921, %v3196
    %v3205 = vadd.f32 %v2922, %v3201
    %v3206 = vlaneseq
    %v3207 = vshrl.u32 %v3206, 7
    %v3208 = vsub.s32 0, %v3207
    %v3209 = vrot.slane %v1836, %v3208
    %v3210 = vadd.f32 %v3204, %v3209
    %v3211 = vadd.f32 %v3205, %v3209
    %v3212 = vadd.f32 %v1803, %v3210
    %v3213 = vadd.f32 %v1804, %v3211
    %v3214 = vsel %vm183, %v3212, 0.0
    %3215 = vadd.xlane.f32.xlu0 %v3214
    %v3216 = vpop.xlane.xlu0 %3215
    %v3217 = vsel %vm183, %v3213, 0.0
    %3218 = vadd.xlane.f32.xlu0 %v3217
    %v3219 = vpop.xlane.xlu0 %3218
    %v3220 = vmul.f32 %v3216, %v1559
    %v3221 = vmul.f32 %v3219, %v1559
    %v3222 = vsub.f32 %v3212, %v3220
    %v3223 = vsub.f32 %v3213, %v3221
    %v3224 = vmul.f32 %v3222, %v3222
    %v3225 = vmul.f32 %v3223, %v3223
    %v3226 = vsel %vm183, %v3224, 0.0
    %3227 = vadd.xlane.f32.xlu0 %v3226
    %v3228 = vpop.xlane.xlu0 %3227
    %v3229 = vsel %vm183, %v3225, 0.0
    %3230 = vadd.xlane.f32.xlu0 %v3229
    %v3231 = vpop.xlane.xlu0 %3230
    %v3232 = vmul.f32 %v3228, %v1559
    %v3233 = vmul.f32 %v3231, %v1559
    %v3234 = vadd.f32 %v3232, 1e-05
    %v3235 = vadd.f32 %v3233, 1e-05
    %v3236 = vrsqrt.pop %v3234
    %v3237 = vrsqrt.pop %v3235
    %v3238 = vmul.f32 %v3222, %v3236
    %v3239 = vmul.f32 %v3223, %v3237
    %v3240 = vlaneseq
    %v3241 = vshrl.u32 %v3240, 7
    %v3242 = vsub.s32 0, %v3241
    %v3243 = vrot.slane %v1837, %v3242
    %v3244 = vmul.f32 %v3238, %v3243
    %v3245 = vmul.f32 %v3239, %v3243
    %v3246 = vlaneseq
    %v3247 = vshrl.u32 %v3246, 7
    %v3248 = vsub.s32 0, %v3247
    %v3249 = vrot.slane %v1838, %v3248
    %v3250 = vadd.f32 %v3244, %v3249
    %v3251 = vadd.f32 %v3245, %v3249
    %v3252 = vlaneseq
    %v3253 = vshrl.u32 %v3252, 7
    %v3254 = vsub.s32 0, %v3253
    %v3255 = vrot.slane %v1839, %v3254
    %v3257 = vsel %vm183, %v3250, 0
    %v3260 = vsel %vm183, %v3251, 0
    %3262 = vmatprep.subr.mxu0 0.0
    %3263 = vmatpush1.msra.mxu0 %v1821
    %3264 = vmatprep.subr.mxu0 0.0
    %3265 = vmatpush1.msra.mxu0 %v1822
    %3266 = vmatprep.subr.mxu0 0.0
    %3267 = vmatpush1.msra.mxu0 %v1823
    %3268 = vmatprep.subr.mxu0 0.0
    %3269 = vmatpush1.msra.mxu0 %v1824
    %3270 = vmatprep.subr.mxu0 0.0
    %3271 = vmatpush1.msra.mxu0 0.0
    %3272 = vmatprep.subr.mxu0 0.0
    %3273 = vmatpush1.msra.mxu0 0.0
    %3274 = vmatprep.subr.mxu0 0.0
    %3275 = vmatpush1.msra.mxu0 0.0
    %3276 = vmatprep.subr.mxu0 0.0
    %3277 = vmatpush1.msra.mxu0 0.0
    %3278 = vmatprep.subr.mxu0 0.0
    %3279 = vmatpush1.msra.mxu0 0.0
    %3280 = vmatprep.subr.mxu0 0.0
    %3281 = vmatpush1.msra.mxu0 0.0
    %3282 = vmatprep.subr.mxu0 0.0
    %3283 = vmatpush1.msra.mxu0 0.0
    %3284 = vmatprep.subr.mxu0 0.0
    %3285 = vmatpush1.msra.mxu0 0.0
    %3286 = vmatprep.subr.mxu0 0.0
    %3287 = vmatpush1.msra.mxu0 0.0
    %3288 = vmatprep.subr.mxu0 0.0
    %3289 = vmatpush1.msra.mxu0 0.0
    %3290 = vmatprep.subr.mxu0 0.0
    %3291 = vmatpush1.msra.mxu0 0.0
    %3292 = vmatprep.subr.mxu0 0.0
    %3293 = vmatpush1.msra.mxu0 0.0
    %3294 = vmatprep.subr.mxu0 0.0
    %3295 = vmatpush1.msra.mxu0 0.0
    %3296 = vmatprep.subr.mxu0 0.0
    %3297 = vmatpush1.msra.mxu0 0.0
    %3298 = vmatprep.subr.mxu0 0.0
    %3299 = vmatpush1.msra.mxu0 0.0
    %3300 = vmatprep.subr.mxu0 0.0
    %3301 = vmatpush1.msra.mxu0 0.0
    %3302 = vmatprep.subr.mxu0 0.0
    %3303 = vmatpush1.msra.mxu0 0.0
    %3304 = vmatprep.subr.mxu0 0.0
    %3305 = vmatpush1.msra.mxu0 0.0
    %3306 = vmatprep.subr.mxu0 0.0
    %3307 = vmatpush1.msra.mxu0 0.0
    %3308 = vmatprep.subr.mxu0 0.0
    %3309 = vmatpush1.msra.mxu0 0.0
    %3310 = vmatprep.subr.mxu0 0.0
    %3311 = vmatpush1.msra.mxu0 0.0
    %3312 = vmatprep.subr.mxu0 0.0
    %3313 = vmatpush1.msra.mxu0 0.0
    %3314 = vmatprep.subr.mxu0 0.0
    %3315 = vmatpush1.msra.mxu0 0.0
    %3316 = vmatprep.subr.mxu0 0.0
    %3317 = vmatpush1.msra.mxu0 0.0
    %3318 = vmatprep.subr.mxu0 0.0
    %3319 = vmatpush1.msra.mxu0 0.0
    %3320 = vmatprep.subr.mxu0 0.0
    %3321 = vmatpush1.msra.mxu0 0.0
    %3322 = vmatprep.subr.mxu0 0.0
    %3323 = vmatpush1.msra.mxu0 0.0
    %3324 = vmatprep.subr.mxu0 0.0
    %3325 = vmatpush1.msra.mxu0 0.0
    %3326 = vmatprep.mubr.f32.mxu0 0.0
    %3327 = vmatmul.mubr.f32.gmra.mrb[0].mxu0 %v3257
    %v3328 = vpop.f32.mrb[0].mxu0
    %v3329 = vadd.f32 %v3255, %v3328
    %v3330 = vpop.f32.mrb[0].mxu0
    %3331 = vmatprep.mubr.f32.mxu0 0.0
    %3332 = vmatmul.mubr.f32.gmra.mrb[0].mxu0 %v3260
    %v3333 = vpop.f32.mrb[0].mxu0
    %v3334 = vadd.f32 %v3255, %v3333
    %v3335 = vpop.f32.mrb[0].mxu0
    %3336 = vdwg.mxu0
    %v3337 = vmax.f32 %v3329, 0.0
    %v3338 = vmax.f32 %v3334, 0.0
    %v3339 = vlaneseq
    %v3340 = vshrl.u32 %v3339, 7
    %v3341 = vsub.s32 0, %v3340
    %v3342 = vrot.slane %v1840, %v3341
    %v3344 = vsel %vm1683, %v3337, 0
    %v3347 = vsel %vm1683, %v3338, 0
    %3349 = vmatprep.subr.mxu0 0.0
    %3350 = vmatpush1.msra.mxu0 %v1825
    %3351 = vmatprep.subr.mxu0 0.0
    %3352 = vmatpush1.msra.mxu0 %v1826
    %3353 = vmatprep.subr.mxu0 0.0
    %3354 = vmatpush1.msra.mxu0 %v1827
    %3355 = vmatprep.subr.mxu0 0.0
    %3356 = vmatpush1.msra.mxu0 %v1828
    %3357 = vmatprep.subr.mxu0 0.0
    %3358 = vmatpush1.msra.mxu0 %v1829
    %3359 = vmatprep.subr.mxu0 0.0
    %3360 = vmatpush1.msra.mxu0 %v1830
    %3361 = vmatprep.subr.mxu0 0.0
    %3362 = vmatpush1.msra.mxu0 %v1831
    %3363 = vmatprep.subr.mxu0 0.0
    %3364 = vmatpush1.msra.mxu0 %v1832
    %3365 = vmatprep.subr.mxu0 0.0
    %3366 = vmatpush1.msra.mxu0 0.0
    %3367 = vmatprep.subr.mxu0 0.0
    %3368 = vmatpush1.msra.mxu0 0.0
    %3369 = vmatprep.subr.mxu0 0.0
    %3370 = vmatpush1.msra.mxu0 0.0
    %3371 = vmatprep.subr.mxu0 0.0
    %3372 = vmatpush1.msra.mxu0 0.0
    %3373 = vmatprep.subr.mxu0 0.0
    %3374 = vmatpush1.msra.mxu0 0.0
    %3375 = vmatprep.subr.mxu0 0.0
    %3376 = vmatpush1.msra.mxu0 0.0
    %3377 = vmatprep.subr.mxu0 0.0
    %3378 = vmatpush1.msra.mxu0 0.0
    %3379 = vmatprep.subr.mxu0 0.0
    %3380 = vmatpush1.msra.mxu0 0.0
    %3381 = vmatprep.subr.mxu0 0.0
    %3382 = vmatpush1.msra.mxu0 0.0
    %3383 = vmatprep.subr.mxu0 0.0
    %3384 = vmatpush1.msra.mxu0 0.0
    %3385 = vmatprep.subr.mxu0 0.0
    %3386 = vmatpush1.msra.mxu0 0.0
    %3387 = vmatprep.subr.mxu0 0.0
    %3388 = vmatpush1.msra.mxu0 0.0
    %3389 = vmatprep.subr.mxu0 0.0
    %3390 = vmatpush1.msra.mxu0 0.0
    %3391 = vmatprep.subr.mxu0 0.0
    %3392 = vmatpush1.msra.mxu0 0.0
    %3393 = vmatprep.subr.mxu0 0.0
    %3394 = vmatpush1.msra.mxu0 0.0
    %3395 = vmatprep.subr.mxu0 0.0
    %3396 = vmatpush1.msra.mxu0 0.0
    %3397 = vmatprep.subr.mxu0 0.0
    %3398 = vmatpush1.msra.mxu0 0.0
    %3399 = vmatprep.subr.mxu0 0.0
    %3400 = vmatpush1.msra.mxu0 0.0
    %3401 = vmatprep.subr.mxu0 0.0
    %3402 = vmatpush1.msra.mxu0 0.0
    %3403 = vmatprep.subr.mxu0 0.0
    %3404 = vmatpush1.msra.mxu0 0.0
    %3405 = vmatprep.subr.mxu0 0.0
    %3406 = vmatpush1.msra.mxu0 0.0
    %3407 = vmatprep.subr.mxu0 0.0
    %3408 = vmatpush1.msra.mxu0 0.0
    %3409 = vmatprep.subr.mxu0 0.0
    %3410 = vmatpush1.msra.mxu0 0.0
    %3411 = vmatprep.subr.mxu0 0.0
    %3412 = vmatpush1.msra.mxu0 0.0
    %3413 = vmatprep.mubr.f32.mxu0 0.0
    %3414 = vmatmul.mubr.f32.gmra.mrb[0].mxu0 %v3344
    %v3415 = vpop.f32.mrb[0].mxu0
    %v3416 = vadd.f32 %v3342, %v3415
    %v3417 = vpop.f32.mrb[0].mxu0
    %3418 = vmatprep.mubr.f32.mxu0 0.0
    %3419 = vmatmul.mubr.f32.gmra.mrb[0].mxu0 %v3347
    %v3420 = vpop.f32.mrb[0].mxu0
    %v3421 = vadd.f32 %v3342, %v3420
    %v3422 = vpop.f32.mrb[0].mxu0
    %3423 = vdwg.mxu0
    %v3424 = vadd.f32 %v3250, %v3416
    %v3425 = vadd.f32 %v3251, %v3421
    %v3426 = vsel %vm183, %v3424, 0.0
    %3427 = vadd.xlane.f32.xlu0 %v3426
    %v3428 = vpop.xlane.xlu0 %3427
    %v3429 = vsel %vm183, %v3425, 0.0
    %3430 = vadd.xlane.f32.xlu0 %v3429
    %v3431 = vpop.xlane.xlu0 %3430
    %v3432 = vmul.f32 %v3428, %v1559
    %v3433 = vmul.f32 %v3431, %v1559
    %v3434 = vsub.f32 %v3424, %v3432
    %v3435 = vsub.f32 %v3425, %v3433
    %v3436 = vmul.f32 %v3434, %v3434
    %v3437 = vmul.f32 %v3435, %v3435
    %v3438 = vsel %vm183, %v3436, 0.0
    %3439 = vadd.xlane.f32.xlu0 %v3438
    %v3440 = vpop.xlane.xlu0 %3439
    %v3441 = vsel %vm183, %v3437, 0.0
    %3442 = vadd.xlane.f32.xlu0 %v3441
    %v3443 = vpop.xlane.xlu0 %3442
    %v3444 = vmul.f32 %v3440, %v1559
    %v3445 = vmul.f32 %v3443, %v1559
    %v3446 = vadd.f32 %v3444, 1e-05
    %v3447 = vadd.f32 %v3445, 1e-05
    %v3448 = vrsqrt.pop %v3446
    %v3449 = vrsqrt.pop %v3447
    %v3450 = vmul.f32 %v3434, %v3448
    %v3451 = vmul.f32 %v3435, %v3449
    %v3452 = vlaneseq
    %v3453 = vshrl.u32 %v3452, 7
    %v3454 = vsub.s32 0, %v3453
    %v3455 = vrot.slane %v1841, %v3454
    %v3456 = vmul.f32 %v3450, %v3455
    %v3457 = vmul.f32 %v3451, %v3455
    %v3458 = vlaneseq
    %v3459 = vshrl.u32 %v3458, 7
    %v3460 = vsub.s32 0, %v3459
    %v3461 = vrot.slane %v1842, %v3460
    %v3462 = vadd.f32 %v3456, %v3461
    %v3463 = vadd.f32 %v3457, %v3461
    %3464 = vst.msk [vmem:[#allocation2] sm:$0xff] %vm183, %v3462
    %3465 = vst.msk [vmem:[#allocation2 + $0x8] sm:$0xff] %vm183, %v3463
    // Predicated region
    $region14: #{tpu_custom_call.1} parent=1 // pred_check
      _
    $region15: #{tpu_custom_call.1} parent=1 // pred_check_branch
      %3467 = sbr.rel (0) target = $region17
    $region16: #{tpu_custom_call.1} parent=1 // pred_region
      %s3469 = ssub.s32 256, 256
      %3470 = vsyncadd [#allocation3], %s3469
      %s3471 = sshll.u32 [#allocation2], 4
      %s3472 = int_to_ptr.vmem [resolvable:$true] %s3471
      %3477 = dma.vmem_to_hbm [thread:$0]  %s3472, 256, %s3, [#allocation3], 128, 128, 8
    $region17: #{tpu_custom_call.1} parent=1 // pred_fallthru
      _
    // Predicated region
    $region18: #{tpu_custom_call.1} parent=1 // pred_check
      _
    $region19: #{tpu_custom_call.1} parent=1 // pred_check_branch
      %3479 = sbr.rel (0) target = $region21
    $region20: #{tpu_custom_call.1} parent=1 // pred_region
      %3480 = dma.done [#allocation3], 256
    $region21: #{tpu_custom_call.1} parent=1 // pred_fallthru
      _
    %3481 = vsyncpa [#allocation3], 1

</llo_original>
